<compile_context>
chip_gen: v6e
topology: v6e:2x2x1
jax: 0.10.0
libtpu: 0.0.40
codegen_flags: <defaults>
</compile_context>

<pallas_src>
import jax
import jax.numpy as jnp
from jax.experimental import pallas as pl
from jax.experimental.pallas import tpu as pltpu

LATENT_DIM = 100
LATENT_PAD = 128                       # pad K of the first matmul to a lane multiple
IMG_SIZE = 28
CHANNELS = 1
OUT_DIM = IMG_SIZE * IMG_SIZE          # 784 (unpadded; masked tail store is negligible)
HIDDEN = (128, 256, 512, 1024)
BN_EPS = 1e-5
LEAK = 0.2


def _leaky_relu(x):
    return jnp.where(x > 0, x, LEAK * x)


def _dot_bf16(x, w_ref):
    # Native bf16 x bf16 -> f32 MXU path; keeps weights in bf16 vregs (no f32
    # copies in VMEM) while accumulating in f32.
    return jnp.dot(x.astype(jnp.bfloat16), w_ref[...],
                   preferred_element_type=jnp.float32)


def generator_kernel(
    z_ref,
    w1_ref, b1_ref,
    w2_ref, v2_ref,
    w3_ref, v3_ref,
    w4_ref, v4_ref,
    w5_ref, b5_ref,
    out_ref,
):
    z = z_ref[...]

    # Block 1: Linear + LeakyReLU
    h = _leaky_relu(_dot_bf16(z, w1_ref) + b1_ref[...])

    def bn_block(h, w_ref, v_ref):
        # v_ref is (3, N) f32: row 0 = bias, row 1 = gamma, row 2 = beta.
        v = v_ref[...]
        x = _dot_bf16(h, w_ref) + v[0:1, :]
        # training-mode BatchNorm1d (biased variance, eps=1e-5), single-pass
        # stats: var = E[x^2] - mean^2 (one fewer XLU reduction per layer).
        mean = jnp.mean(x, axis=0, keepdims=True)
        mean_sq = jnp.mean(x * x, axis=0, keepdims=True)
        var = jnp.maximum(mean_sq - mean * mean, 0.0)
        inv = jax.lax.rsqrt(var + BN_EPS)
        # Fold gamma/beta into a single scale/shift on the (1,N) row, then
        # apply 2 VPU ops per (B,N) element instead of 4.
        scale = inv * v[1:2, :]
        shift = v[2:3, :] - mean * scale
        return _leaky_relu(x * scale + shift)

    # Blocks 2-4: Linear + BN(train) + LeakyReLU
    h = bn_block(h, w2_ref, v2_ref)
    h = bn_block(h, w3_ref, v3_ref)
    h = bn_block(h, w4_ref, v4_ref)

    # Output: Linear + Tanh (784 columns, unpadded)
    out_ref[...] = jnp.tanh(_dot_bf16(h, w5_ref) + b5_ref[...])


def init_params(key):
    """Deterministic synthetic parameters matching the PyTorch module shapes."""
    dims = (LATENT_DIM,) + HIDDEN + (OUT_DIM,)
    keys = jax.random.split(key, 2 * (len(dims) - 1))
    params = []
    for i in range(len(dims) - 1):
        kin, kout = dims[i], dims[i + 1]
        w = 0.02 * jax.random.normal(keys[2 * i], (kin, kout), jnp.float32)
        b = 0.01 * jax.random.normal(keys[2 * i + 1], (1, kout), jnp.float32)
        params.append((w, b))
    # BatchNorm affine params for layers 2,3,4 (PyTorch default: gamma=1, beta=0)
    bn = []
    for n in HIDDEN[1:]:
        bn.append((jnp.ones((1, n), jnp.float32), jnp.zeros((1, n), jnp.float32)))
    return params, bn


def prepare_params(params, bn):
    """Pad the first matmul's K, cast weights to bf16, pack (bias,gamma,beta)."""
    (w1, b1), (w2, b2), (w3, b3), (w4, b4), (w5, b5) = params
    (g2, be2), (g3, be3), (g4, be4) = bn

    # Zero-pad latent rows 100 -> 128 (extra rows are zero -> identical result).
    w1p = jnp.zeros((LATENT_PAD, HIDDEN[0]), jnp.float32).at[:LATENT_DIM].set(w1)

    bf = lambda w: w.astype(jnp.bfloat16)
    pack = lambda b, g, be: jnp.concatenate([b, g, be], axis=0)  # (3, N) f32

    return (
        bf(w1p), b1,
        bf(w2), pack(b2, g2, be2),
        bf(w3), pack(b3, g3, be3),
        bf(w4), pack(b4, g4, be4),
        bf(w5), b5,
    )


@jax.jit
def generator_forward(noise, packed):
    B = noise.shape[0]

    # Zero-pad latent features to 128 lanes (matches the zero rows in w1).
    z = jnp.zeros((B, LATENT_PAD), jnp.float32).at[:, :LATENT_DIM].set(noise)

    flat_args = (z,) + tuple(packed)
    vmem_spec = pl.BlockSpec(memory_space=pltpu.MemorySpace.VMEM)

    img_flat = pl.pallas_call(
        generator_kernel,
        out_shape=jax.ShapeDtypeStruct((B, OUT_DIM), jnp.float32),
        in_specs=[vmem_spec] * len(flat_args),
        out_specs=vmem_spec,
        # Working set is ~4 MiB (bf16 weights ~3.2 MiB + small activations);
        # 16 MiB leaves headroom and is safe on all of v5e/v6e/v7x.
        compiler_params=pltpu.CompilerParams(vmem_limit_bytes=16 << 20),
    )(*flat_args)

    # PyTorch: img.view(B, channels, img_size, img_size) -> NCHW
    return img_flat.reshape(B, CHANNELS, IMG_SIZE, IMG_SIZE)


def reference_forward(noise, packed):
    """Pure-JAX reference (same bf16-rounded weights, f32 activations/math)."""
    (w1, b1, w2, v2, w3, v3, w4, v4, w5, b5) = packed
    f32 = lambda w: w.astype(jnp.float32)

    def bn_train(x, v):
        g, be = v[1:2, :], v[2:3, :]
        m = jnp.mean(x, axis=0, keepdims=True)
        var = jnp.mean((x - m) ** 2, axis=0, keepdims=True)
        return (x - m) / jnp.sqrt(var + BN_EPS) * g + be

    h = _leaky_relu(noise @ f32(w1)[:LATENT_DIM] + b1)
    h = _leaky_relu(bn_train(h @ f32(w2) + v2[0:1, :], v2))
    h = _leaky_relu(bn_train(h @ f32(w3) + v3[0:1, :], v3))
    h = _leaky_relu(bn_train(h @ f32(w4) + v4[0:1, :], v4))
    h = jnp.tanh(h @ f32(w5) + b5)
    return h.reshape(noise.shape[0], CHANNELS, IMG_SIZE, IMG_SIZE)


if __name__ == "__main__":
    key = jax.random.PRNGKey(0)
    kp, kz = jax.random.split(key)
    raw_params, raw_bn = init_params(kp)
    packed = prepare_params(raw_params, raw_bn)

    B = 8  # small batch
    noise = jax.random.normal(kz, (B, LATENT_DIM), jnp.float32)

    img = generator_forward(noise, packed)
    img = jax.block_until_ready(img)

    assert img.shape == (B, CHANNELS, IMG_SIZE, IMG_SIZE), img.shape
    assert bool(jnp.all(jnp.isfinite(img)))

    ref = reference_forward(noise, packed)
    assert bool(jnp.allclose(img, ref, rtol=1e-2, atol=1e-2))

    print("KERNEL_OK")
</pallas_src>

<mosaic_0001>
module attributes {stable_mosaic.version = 11 : i64} {
  func.func @generator_kernel(%arg0: memref<8x128xf32, #tpu.memory_space<vmem>>, %arg1: memref<128x128xbf16, #tpu.memory_space<vmem>>, %arg2: memref<1x128xf32, #tpu.memory_space<vmem>>, %arg3: memref<128x256xbf16, #tpu.memory_space<vmem>>, %arg4: memref<3x256xf32, #tpu.memory_space<vmem>>, %arg5: memref<256x512xbf16, #tpu.memory_space<vmem>>, %arg6: memref<3x512xf32, #tpu.memory_space<vmem>>, %arg7: memref<512x1024xbf16, #tpu.memory_space<vmem>>, %arg8: memref<3x1024xf32, #tpu.memory_space<vmem>>, %arg9: memref<1024x784xbf16, #tpu.memory_space<vmem>>, %arg10: memref<1x784xf32, #tpu.memory_space<vmem>>, %arg11: memref<8x784xf32, #tpu.memory_space<vmem>>) attributes {dimension_semantics = [], scalar_prefetch = 0 : i64, scratch_operands = 0 : i64, tpu.core_type = #tpu.core_type<tc>} {
    %c0 = arith.constant 0 : index
    %c0_0 = arith.constant 0 : index
    %0 = vector.load %arg0[%c0, %c0_0] : memref<8x128xf32, #tpu.memory_space<vmem>>, vector<8x128xf32>
    %1 = arith.truncf %0 : vector<8x128xf32> to vector<8x128xbf16>
    %c0_1 = arith.constant 0 : index
    %c0_2 = arith.constant 0 : index
    %2 = vector.load %arg1[%c0_1, %c0_2] : memref<128x128xbf16, #tpu.memory_space<vmem>>, vector<128x128xbf16>
    %cst = arith.constant dense<0.000000e+00> : vector<8x128xf32>
    %3 = tpu.matmul %1, %2, %cst {dimension_numbers = #tpu.dot_dimension_numbers<[1], [0], [0], [1], [0, 0, 1, 1], [], []>} : vector<8x128xbf16>, vector<128x128xbf16>, vector<8x128xf32> -> vector<8x128xf32>
    %c0_3 = arith.constant 0 : index
    %c0_4 = arith.constant 0 : index
    %4 = vector.load %arg2[%c0_3, %c0_4] : memref<1x128xf32, #tpu.memory_space<vmem>>, vector<1x128xf32>
    %5 = vector.broadcast %4 : vector<1x128xf32> to vector<8x128xf32>
    %6 = arith.addf %3, %5 : vector<8x128xf32>
    %cst_5 = arith.constant 0.000000e+00 : f32
    %7 = vector.broadcast %cst_5 : f32 to vector<8x128xf32>
    %8 = arith.cmpf ogt, %6, %7 : vector<8x128xf32>
    %cst_6 = arith.constant 2.000000e-01 : f32
    %9 = vector.broadcast %cst_6 : f32 to vector<8x128xf32>
    %10 = arith.mulf %9, %6 : vector<8x128xf32>
    %11 = arith.select %8, %6, %10 : vector<8x128xi1>, vector<8x128xf32>
    %c0_7 = arith.constant 0 : index
    %c0_8 = arith.constant 0 : index
    %12 = vector.load %arg4[%c0_7, %c0_8] : memref<3x256xf32, #tpu.memory_space<vmem>>, vector<3x256xf32>
    %13 = arith.truncf %11 : vector<8x128xf32> to vector<8x128xbf16>
    %c0_9 = arith.constant 0 : index
    %c0_10 = arith.constant 0 : index
    %14 = vector.load %arg3[%c0_9, %c0_10] : memref<128x256xbf16, #tpu.memory_space<vmem>>, vector<128x256xbf16>
    %cst_11 = arith.constant dense<0.000000e+00> : vector<8x256xf32>
    %15 = tpu.matmul %13, %14, %cst_11 {dimension_numbers = #tpu.dot_dimension_numbers<[1], [0], [0], [1], [0, 0, 1, 1], [], []>} : vector<8x128xbf16>, vector<128x256xbf16>, vector<8x256xf32> -> vector<8x256xf32>
    %16 = vector.extract_strided_slice %12 {offsets = [0, 0], sizes = [1, 256], strides = [1, 1]} : vector<3x256xf32> to vector<1x256xf32>
    %17 = vector.broadcast %16 : vector<1x256xf32> to vector<8x256xf32>
    %18 = arith.addf %15, %17 : vector<8x256xf32>
    %cst_12 = arith.constant dense<0.000000e+00> : vector<256xf32>
    %19 = vector.multi_reduction <add>, %18, %cst_12 [0] : vector<8x256xf32> to vector<256xf32>
    %20 = vector.shape_cast %19 : vector<256xf32> to vector<1x256xf32>
    %cst_13 = arith.constant 8.000000e+00 : f32
    %21 = vector.broadcast %cst_13 : f32 to vector<1x256xf32>
    %22 = arith.divf %20, %21 : vector<1x256xf32>
    %23 = arith.mulf %18, %18 : vector<8x256xf32>
    %cst_14 = arith.constant dense<0.000000e+00> : vector<256xf32>
    %24 = vector.multi_reduction <add>, %23, %cst_14 [0] : vector<8x256xf32> to vector<256xf32>
    %25 = vector.shape_cast %24 : vector<256xf32> to vector<1x256xf32>
    %cst_15 = arith.constant 8.000000e+00 : f32
    %26 = vector.broadcast %cst_15 : f32 to vector<1x256xf32>
    %27 = arith.divf %25, %26 : vector<1x256xf32>
    %28 = arith.mulf %22, %22 : vector<1x256xf32>
    %29 = arith.subf %27, %28 : vector<1x256xf32>
    %cst_16 = arith.constant 0.000000e+00 : f32
    %30 = vector.broadcast %cst_16 : f32 to vector<1x256xf32>
    %31 = arith.maximumf %29, %30 : vector<1x256xf32>
    %cst_17 = arith.constant 9.99999974E-6 : f32
    %32 = vector.broadcast %cst_17 : f32 to vector<1x256xf32>
    %33 = arith.addf %31, %32 : vector<1x256xf32>
    %34 = math.rsqrt %33 : vector<1x256xf32>
    %35 = vector.extract_strided_slice %12 {offsets = [1, 0], sizes = [1, 256], strides = [1, 1]} : vector<3x256xf32> to vector<1x256xf32>
    %36 = arith.mulf %34, %35 : vector<1x256xf32>
    %37 = vector.extract_strided_slice %12 {offsets = [2, 0], sizes = [1, 256], strides = [1, 1]} : vector<3x256xf32> to vector<1x256xf32>
    %38 = arith.mulf %22, %36 : vector<1x256xf32>
    %39 = arith.subf %37, %38 : vector<1x256xf32>
    %40 = vector.broadcast %36 : vector<1x256xf32> to vector<8x256xf32>
    %41 = arith.mulf %18, %40 : vector<8x256xf32>
    %42 = vector.broadcast %39 : vector<1x256xf32> to vector<8x256xf32>
    %43 = arith.addf %41, %42 : vector<8x256xf32>
    %cst_18 = arith.constant 0.000000e+00 : f32
    %44 = vector.broadcast %cst_18 : f32 to vector<8x256xf32>
    %45 = arith.cmpf ogt, %43, %44 : vector<8x256xf32>
    %cst_19 = arith.constant 2.000000e-01 : f32
    %46 = vector.broadcast %cst_19 : f32 to vector<8x256xf32>
    %47 = arith.mulf %46, %43 : vector<8x256xf32>
    %48 = arith.select %45, %43, %47 : vector<8x256xi1>, vector<8x256xf32>
    %c0_20 = arith.constant 0 : index
    %c0_21 = arith.constant 0 : index
    %49 = vector.load %arg6[%c0_20, %c0_21] : memref<3x512xf32, #tpu.memory_space<vmem>>, vector<3x512xf32>
    %50 = arith.truncf %48 : vector<8x256xf32> to vector<8x256xbf16>
    %c0_22 = arith.constant 0 : index
    %c0_23 = arith.constant 0 : index
    %51 = vector.load %arg5[%c0_22, %c0_23] : memref<256x512xbf16, #tpu.memory_space<vmem>>, vector<256x512xbf16>
    %cst_24 = arith.constant dense<0.000000e+00> : vector<8x512xf32>
    %52 = tpu.matmul %50, %51, %cst_24 {dimension_numbers = #tpu.dot_dimension_numbers<[1], [0], [0], [1], [0, 0, 1, 1], [], []>} : vector<8x256xbf16>, vector<256x512xbf16>, vector<8x512xf32> -> vector<8x512xf32>
    %53 = vector.extract_strided_slice %49 {offsets = [0, 0], sizes = [1, 512], strides = [1, 1]} : vector<3x512xf32> to vector<1x512xf32>
    %54 = vector.broadcast %53 : vector<1x512xf32> to vector<8x512xf32>
    %55 = arith.addf %52, %54 : vector<8x512xf32>
    %cst_25 = arith.constant dense<0.000000e+00> : vector<512xf32>
    %56 = vector.multi_reduction <add>, %55, %cst_25 [0] : vector<8x512xf32> to vector<512xf32>
    %57 = vector.shape_cast %56 : vector<512xf32> to vector<1x512xf32>
    %cst_26 = arith.constant 8.000000e+00 : f32
    %58 = vector.broadcast %cst_26 : f32 to vector<1x512xf32>
    %59 = arith.divf %57, %58 : vector<1x512xf32>
    %60 = arith.mulf %55, %55 : vector<8x512xf32>
    %cst_27 = arith.constant dense<0.000000e+00> : vector<512xf32>
    %61 = vector.multi_reduction <add>, %60, %cst_27 [0] : vector<8x512xf32> to vector<512xf32>
    %62 = vector.shape_cast %61 : vector<512xf32> to vector<1x512xf32>
    %cst_28 = arith.constant 8.000000e+00 : f32
    %63 = vector.broadcast %cst_28 : f32 to vector<1x512xf32>
    %64 = arith.divf %62, %63 : vector<1x512xf32>
    %65 = arith.mulf %59, %59 : vector<1x512xf32>
    %66 = arith.subf %64, %65 : vector<1x512xf32>
    %cst_29 = arith.constant 0.000000e+00 : f32
    %67 = vector.broadcast %cst_29 : f32 to vector<1x512xf32>
    %68 = arith.maximumf %66, %67 : vector<1x512xf32>
    %cst_30 = arith.constant 9.99999974E-6 : f32
    %69 = vector.broadcast %cst_30 : f32 to vector<1x512xf32>
    %70 = arith.addf %68, %69 : vector<1x512xf32>
    %71 = math.rsqrt %70 : vector<1x512xf32>
    %72 = vector.extract_strided_slice %49 {offsets = [1, 0], sizes = [1, 512], strides = [1, 1]} : vector<3x512xf32> to vector<1x512xf32>
    %73 = arith.mulf %71, %72 : vector<1x512xf32>
    %74 = vector.extract_strided_slice %49 {offsets = [2, 0], sizes = [1, 512], strides = [1, 1]} : vector<3x512xf32> to vector<1x512xf32>
    %75 = arith.mulf %59, %73 : vector<1x512xf32>
    %76 = arith.subf %74, %75 : vector<1x512xf32>
    %77 = vector.broadcast %73 : vector<1x512xf32> to vector<8x512xf32>
    %78 = arith.mulf %55, %77 : vector<8x512xf32>
    %79 = vector.broadcast %76 : vector<1x512xf32> to vector<8x512xf32>
    %80 = arith.addf %78, %79 : vector<8x512xf32>
    %cst_31 = arith.constant 0.000000e+00 : f32
    %81 = vector.broadcast %cst_31 : f32 to vector<8x512xf32>
    %82 = arith.cmpf ogt, %80, %81 : vector<8x512xf32>
    %cst_32 = arith.constant 2.000000e-01 : f32
    %83 = vector.broadcast %cst_32 : f32 to vector<8x512xf32>
    %84 = arith.mulf %83, %80 : vector<8x512xf32>
    %85 = arith.select %82, %80, %84 : vector<8x512xi1>, vector<8x512xf32>
    %c0_33 = arith.constant 0 : index
    %c0_34 = arith.constant 0 : index
    %86 = vector.load %arg8[%c0_33, %c0_34] : memref<3x1024xf32, #tpu.memory_space<vmem>>, vector<3x1024xf32>
    %87 = arith.truncf %85 : vector<8x512xf32> to vector<8x512xbf16>
    %c0_35 = arith.constant 0 : index
    %c0_36 = arith.constant 0 : index
    %88 = vector.load %arg7[%c0_35, %c0_36] : memref<512x1024xbf16, #tpu.memory_space<vmem>>, vector<512x1024xbf16>
    %cst_37 = arith.constant dense<0.000000e+00> : vector<8x1024xf32>
    %89 = tpu.matmul %87, %88, %cst_37 {dimension_numbers = #tpu.dot_dimension_numbers<[1], [0], [0], [1], [0, 0, 1, 1], [], []>} : vector<8x512xbf16>, vector<512x1024xbf16>, vector<8x1024xf32> -> vector<8x1024xf32>
    %90 = vector.extract_strided_slice %86 {offsets = [0, 0], sizes = [1, 1024], strides = [1, 1]} : vector<3x1024xf32> to vector<1x1024xf32>
    %91 = vector.broadcast %90 : vector<1x1024xf32> to vector<8x1024xf32>
    %92 = arith.addf %89, %91 : vector<8x1024xf32>
    %cst_38 = arith.constant dense<0.000000e+00> : vector<1024xf32>
    %93 = vector.multi_reduction <add>, %92, %cst_38 [0] : vector<8x1024xf32> to vector<1024xf32>
    %94 = vector.shape_cast %93 : vector<1024xf32> to vector<1x1024xf32>
    %cst_39 = arith.constant 8.000000e+00 : f32
    %95 = vector.broadcast %cst_39 : f32 to vector<1x1024xf32>
    %96 = arith.divf %94, %95 : vector<1x1024xf32>
    %97 = arith.mulf %92, %92 : vector<8x1024xf32>
    %cst_40 = arith.constant dense<0.000000e+00> : vector<1024xf32>
    %98 = vector.multi_reduction <add>, %97, %cst_40 [0] : vector<8x1024xf32> to vector<1024xf32>
    %99 = vector.shape_cast %98 : vector<1024xf32> to vector<1x1024xf32>
    %cst_41 = arith.constant 8.000000e+00 : f32
    %100 = vector.broadcast %cst_41 : f32 to vector<1x1024xf32>
    %101 = arith.divf %99, %100 : vector<1x1024xf32>
    %102 = arith.mulf %96, %96 : vector<1x1024xf32>
    %103 = arith.subf %101, %102 : vector<1x1024xf32>
    %cst_42 = arith.constant 0.000000e+00 : f32
    %104 = vector.broadcast %cst_42 : f32 to vector<1x1024xf32>
    %105 = arith.maximumf %103, %104 : vector<1x1024xf32>
    %cst_43 = arith.constant 9.99999974E-6 : f32
    %106 = vector.broadcast %cst_43 : f32 to vector<1x1024xf32>
    %107 = arith.addf %105, %106 : vector<1x1024xf32>
    %108 = math.rsqrt %107 : vector<1x1024xf32>
    %109 = vector.extract_strided_slice %86 {offsets = [1, 0], sizes = [1, 1024], strides = [1, 1]} : vector<3x1024xf32> to vector<1x1024xf32>
    %110 = arith.mulf %108, %109 : vector<1x1024xf32>
    %111 = vector.extract_strided_slice %86 {offsets = [2, 0], sizes = [1, 1024], strides = [1, 1]} : vector<3x1024xf32> to vector<1x1024xf32>
    %112 = arith.mulf %96, %110 : vector<1x1024xf32>
    %113 = arith.subf %111, %112 : vector<1x1024xf32>
    %114 = vector.broadcast %110 : vector<1x1024xf32> to vector<8x1024xf32>
    %115 = arith.mulf %92, %114 : vector<8x1024xf32>
    %116 = vector.broadcast %113 : vector<1x1024xf32> to vector<8x1024xf32>
    %117 = arith.addf %115, %116 : vector<8x1024xf32>
    %cst_44 = arith.constant 0.000000e+00 : f32
    %118 = vector.broadcast %cst_44 : f32 to vector<8x1024xf32>
    %119 = arith.cmpf ogt, %117, %118 : vector<8x1024xf32>
    %cst_45 = arith.constant 2.000000e-01 : f32
    %120 = vector.broadcast %cst_45 : f32 to vector<8x1024xf32>
    %121 = arith.mulf %120, %117 : vector<8x1024xf32>
    %122 = arith.select %119, %117, %121 : vector<8x1024xi1>, vector<8x1024xf32>
    %123 = arith.truncf %122 : vector<8x1024xf32> to vector<8x1024xbf16>
    %c0_46 = arith.constant 0 : index
    %c0_47 = arith.constant 0 : index
    %124 = vector.load %arg9[%c0_46, %c0_47] : memref<1024x784xbf16, #tpu.memory_space<vmem>>, vector<1024x784xbf16>
    %cst_48 = arith.constant dense<0.000000e+00> : vector<8x784xf32>
    %125 = tpu.matmul %123, %124, %cst_48 {dimension_numbers = #tpu.dot_dimension_numbers<[1], [0], [0], [1], [0, 0, 1, 1], [], []>} : vector<8x1024xbf16>, vector<1024x784xbf16>, vector<8x784xf32> -> vector<8x784xf32>
    %c0_49 = arith.constant 0 : index
    %c0_50 = arith.constant 0 : index
    %126 = vector.load %arg10[%c0_49, %c0_50] : memref<1x784xf32, #tpu.memory_space<vmem>>, vector<1x784xf32>
    %127 = vector.broadcast %126 : vector<1x784xf32> to vector<8x784xf32>
    %128 = arith.addf %125, %127 : vector<8x784xf32>
    %129 = math.tanh %128 : vector<8x784xf32>
    %c0_51 = arith.constant 0 : index
    %c0_52 = arith.constant 0 : index
    %130 = vector.load %arg11[%c0_51, %c0_52] : memref<8x784xf32, #tpu.memory_space<vmem>>, vector<8x784xf32>
    tpu.vector_store %arg11[%c0_51, %c0_52], %129 {strides = array<i32>} : memref<8x784xf32, #tpu.memory_space<vmem>>, vector<8x784xf32>,
    return
  }
}

</mosaic_0001>

<llo_original>
// kernel: generator_forward.1
$region0: #{generator_forward.1}
  #allocation0 [shape = 'u32[]', space=smem, size = 0x4, offset = 0x4, fixed_abs, tag = 'smem constant byte address 0x4 - core index']
  #allocation1 [shape = 'u32[144,128]{1,0:T(1,128)}', space=vmem, size = 0x12000, scoped, tag = 'internal scratch']
  %s0 = inlined_call_operand.vmem [shape: f32[8,128], index: 0, kind: input, shape index: {}]
  %s1 = inlined_call_operand.vmem [shape: bf16[128,128], index: 1, kind: input, shape index: {}]
  %s2 = inlined_call_operand.vmem [shape: f32[1,128], index: 2, kind: input, shape index: {}]
  %s3 = inlined_call_operand.vmem [shape: bf16[128,256], index: 3, kind: input, shape index: {}]
  %s4 = inlined_call_operand.vmem [shape: f32[3,256], index: 4, kind: input, shape index: {}]
  %s5 = inlined_call_operand.vmem [shape: bf16[256,512], index: 5, kind: input, shape index: {}]
  %s6 = inlined_call_operand.vmem [shape: f32[3,512], index: 6, kind: input, shape index: {}]
  %s7 = inlined_call_operand.vmem [shape: bf16[512,1024], index: 7, kind: input, shape index: {}]
  %s8 = inlined_call_operand.vmem [shape: f32[3,1024], index: 8, kind: input, shape index: {}]
  %s9 = inlined_call_operand.vmem [shape: bf16[1024,784], index: 9, kind: input, shape index: {}]
  %s10 = inlined_call_operand.vmem [shape: f32[1,784], index: 10, kind: input, shape index: {}]
  %s11 = inlined_call_operand.vmem [shape: f32[8,784], index: 11, kind: output, shape index: {}]
  %s12 = sld [smem:[#allocation0]]
  $region54: #{generator_forward.1} parent=0
    _
  %s14 = ssub.s32 1, %s12
  %s15 = scalar_select 0, %s14, %s12
  // Predicated region
  $region2: #{generator_forward.1} parent=0 // pred_check
    _
  $region3: #{generator_forward.1} parent=0 // pred_check_branch
    %17 = sbr.rel (0) target = $region5
  $region4: #{generator_forward.1} parent=0 // pred_region
    _
  $region5: #{generator_forward.1} parent=0 // pred_fallthru
    _
  // Predicated region
  $region6: #{generator_forward.1} parent=0 // pred_check
    _
  $region7: #{generator_forward.1} parent=0 // pred_check_branch
    %19 = sbr.rel (0) target = $region9
  $region8: #{generator_forward.1} parent=0 // pred_region
    _
  $region9: #{generator_forward.1} parent=0 // pred_fallthru
    _
  // Predicated region
  $region10: #{generator_forward.1} parent=0 // pred_check
    _
  $region11: #{generator_forward.1} parent=0 // pred_check_branch
    %21 = sbr.rel (0) target = $region13
  $region12: #{generator_forward.1} parent=0 // pred_region
    _
  $region13: #{generator_forward.1} parent=0 // pred_fallthru
    _
  // Predicated region
  $region14: #{generator_forward.1} parent=0 // pred_check
    _
  $region15: #{generator_forward.1} parent=0 // pred_check_branch
    %23 = sbr.rel (0) target = $region17
  $region16: #{generator_forward.1} parent=0 // pred_region
    _
  $region17: #{generator_forward.1} parent=0 // pred_fallthru
    _
  // Predicated region
  $region18: #{generator_forward.1} parent=0 // pred_check
    _
  $region19: #{generator_forward.1} parent=0 // pred_check_branch
    %25 = sbr.rel (0) target = $region21
  $region20: #{generator_forward.1} parent=0 // pred_region
    _
  $region21: #{generator_forward.1} parent=0 // pred_fallthru
    _
  // Predicated region
  $region22: #{generator_forward.1} parent=0 // pred_check
    _
  $region23: #{generator_forward.1} parent=0 // pred_check_branch
    %27 = sbr.rel (0) target = $region25
  $region24: #{generator_forward.1} parent=0 // pred_region
    _
  $region25: #{generator_forward.1} parent=0 // pred_fallthru
    _
  // Predicated region
  $region26: #{generator_forward.1} parent=0 // pred_check
    _
  $region27: #{generator_forward.1} parent=0 // pred_check_branch
    %29 = sbr.rel (0) target = $region29
  $region28: #{generator_forward.1} parent=0 // pred_region
    _
  $region29: #{generator_forward.1} parent=0 // pred_fallthru
    _
  // Predicated region
  $region30: #{generator_forward.1} parent=0 // pred_check
    _
  $region31: #{generator_forward.1} parent=0 // pred_check_branch
    %31 = sbr.rel (0) target = $region33
  $region32: #{generator_forward.1} parent=0 // pred_region
    _
  $region33: #{generator_forward.1} parent=0 // pred_fallthru
    _
  // Predicated region
  $region34: #{generator_forward.1} parent=0 // pred_check
    _
  $region35: #{generator_forward.1} parent=0 // pred_check_branch
    %33 = sbr.rel (0) target = $region37
  $region36: #{generator_forward.1} parent=0 // pred_region
    _
  $region37: #{generator_forward.1} parent=0 // pred_fallthru
    _
  // Predicated region
  $region38: #{generator_forward.1} parent=0 // pred_check
    _
  $region39: #{generator_forward.1} parent=0 // pred_check_branch
    %35 = sbr.rel (0) target = $region41
  $region40: #{generator_forward.1} parent=0 // pred_region
    _
  $region41: #{generator_forward.1} parent=0 // pred_fallthru
    _
  // Predicated region
  $region42: #{generator_forward.1} parent=0 // pred_check
    _
  $region43: #{generator_forward.1} parent=0 // pred_check_branch
    %37 = sbr.rel (0) target = $region45
  $region44: #{generator_forward.1} parent=0 // pred_region
    _
  $region45: #{generator_forward.1} parent=0 // pred_fallthru
    _
  %v39 = vld [vmem:[%s0] sm:$0xff]
  %v40 = vpack.c.bf16 %v39, %v39
  %v41 = vld [vmem:[%s1] sm:$0xf]
  %v42 = vld [vmem:[%s1 + $0x4] sm:$0xf]
  %v43 = vld [vmem:[%s1 + $0x8] sm:$0xf]
  %v44 = vld [vmem:[%s1 + $0xc] sm:$0xf]
  %v45 = vld [vmem:[%s1 + $0x10] sm:$0xf]
  %v46 = vld [vmem:[%s1 + $0x14] sm:$0xf]
  %v47 = vld [vmem:[%s1 + $0x18] sm:$0xf]
  %v48 = vld [vmem:[%s1 + $0x1c] sm:$0xf]
  %v49 = vld [vmem:[%s1 + $0x20] sm:$0xf]
  %v50 = vld [vmem:[%s1 + $0x24] sm:$0xf]
  %v51 = vld [vmem:[%s1 + $0x28] sm:$0xf]
  %v52 = vld [vmem:[%s1 + $0x2c] sm:$0xf]
  %v53 = vld [vmem:[%s1 + $0x30] sm:$0xf]
  %v54 = vld [vmem:[%s1 + $0x34] sm:$0xf]
  %v55 = vld [vmem:[%s1 + $0x38] sm:$0xf]
  %v56 = vld [vmem:[%s1 + $0x3c] sm:$0xf]
  %v57 = vld [vmem:[%s2] sm:$0x1]
  %v59 = vlaneseq
  %v60 = vshrl.u32 %v59, 7
  %v61 = vsub.s32 0, %v60
  %v62 = vrot.slane %v57, %v61
  %v80 = vunpack.c.l.b16 %v41
  %v81 = vunpack.c.l.b16 %v42
  %v82 = vunpack.c.l.b16 %v43
  %v83 = vunpack.c.l.b16 %v44
  %v84 = vunpack.c.l.b16 %v45
  %v85 = vunpack.c.l.b16 %v46
  %v86 = vunpack.c.l.b16 %v47
  %v87 = vunpack.c.l.b16 %v48
  %v88 = vunpack.c.l.b16 %v49
  %v89 = vunpack.c.l.b16 %v50
  %v90 = vunpack.c.l.b16 %v51
  %v91 = vunpack.c.l.b16 %v52
  %v92 = vunpack.c.l.b16 %v53
  %v93 = vunpack.c.l.b16 %v54
  %v94 = vunpack.c.l.b16 %v55
  %v95 = vunpack.c.l.b16 %v56
  %v96 = vpack.c.b16 %v81, %v80
  %v97 = vpack.c.b16 %v83, %v82
  %v98 = vpack.c.b16 %v85, %v84
  %v99 = vpack.c.b16 %v87, %v86
  %v100 = vpack.c.b16 %v89, %v88
  %v101 = vpack.c.b16 %v91, %v90
  %v102 = vpack.c.b16 %v93, %v92
  %v103 = vpack.c.b16 %v95, %v94
  %112 = vmatprep.subr.bf16.mxu0 0
  %113 = vmatpush1.bf16.msra.mxu0 %v103
  %114 = vmatprep.subr.bf16.mxu0 0
  %115 = vmatpush1.bf16.msra.mxu0 %v102
  %116 = vmatprep.subr.bf16.mxu0 0
  %117 = vmatpush1.bf16.msra.mxu0 %v101
  %118 = vmatprep.subr.bf16.mxu0 0
  %119 = vmatpush1.bf16.msra.mxu0 %v100
  %120 = vmatprep.subr.bf16.mxu0 0
  %121 = vmatpush1.bf16.msra.mxu0 %v99
  %122 = vmatprep.subr.bf16.mxu0 0
  %123 = vmatpush1.bf16.msra.mxu0 %v98
  %124 = vmatprep.subr.bf16.mxu0 0
  %125 = vmatpush1.bf16.msra.mxu0 %v97
  %126 = vmatprep.subr.bf16.mxu0 0
  %127 = vmatpush1.bf16.msra.mxu0 %v96
  %128 = vmatprep.subr.bf16.mxu0 0
  %129 = vmatpush2.bf16.msra.mxu0 0
  %130 = vmatprep.subr.bf16.mxu0 0
  %131 = vmatpush2.bf16.msra.mxu0 0
  %132 = vmatprep.subr.bf16.mxu0 0
  %133 = vmatpush2.bf16.msra.mxu0 0
  %134 = vmatprep.subr.bf16.mxu0 0
  %135 = vmatpush2.bf16.msra.mxu0 0
  %136 = vmatprep.subr.bf16.mxu0 0
  %137 = vmatpush2.bf16.msra.mxu0 0
  %138 = vmatprep.subr.bf16.mxu0 0
  %139 = vmatpush2.bf16.msra.mxu0 0
  %140 = vmatprep.subr.bf16.mxu0 0
  %141 = vmatpush2.bf16.msra.mxu0 0
  %142 = vmatprep.subr.bf16.mxu0 0
  %143 = vmatpush2.bf16.msra.mxu0 0
  %144 = vmatprep.mubr.bf16.mxu0 0
  %145 = vmatmul.mubr.bf16.gmra.mxu0 %v40
  %v146 = vpop.f32.mrf.mxu0
  %v147 = vadd.f32 %v62, %v146
  %v148 = vpop.f32.mrf.mxu0
  %v149 = vpop.f32.mrf.mxu0
  %v150 = vpop.f32.mrf.mxu0
  %151 = vdwg.mxu0
  %vm152 = vcmp.gt.f32.partialorder %v147, 0.0
  %v153 = vmul.f32 %v147, 0.2
  %v154 = vsel %vm152, %v147, %v153
  %v155 = vld [vmem:[%s4] sm:$0x77]
  %v156 = vpack.c.bf16 %v154, %v154
  %v157 = vld [vmem:[%s3] sm:$0xff]
  %v158 = vld [vmem:[%s3 + $0x8] sm:$0xff]
  %v159 = vld [vmem:[%s3 + $0x10] sm:$0xff]
  %v160 = vld [vmem:[%s3 + $0x18] sm:$0xff]
  %v161 = vld [vmem:[%s3 + $0x20] sm:$0xff]
  %v162 = vld [vmem:[%s3 + $0x28] sm:$0xff]
  %v163 = vld [vmem:[%s3 + $0x30] sm:$0xff]
  %v164 = vld [vmem:[%s3 + $0x38] sm:$0xff]
  %v165 = vld [vmem:[%s3 + $0x40] sm:$0xff]
  %v166 = vld [vmem:[%s3 + $0x48] sm:$0xff]
  %v167 = vld [vmem:[%s3 + $0x50] sm:$0xff]
  %v168 = vld [vmem:[%s3 + $0x58] sm:$0xff]
  %v169 = vld [vmem:[%s3 + $0x60] sm:$0xff]
  %v170 = vld [vmem:[%s3 + $0x68] sm:$0xff]
  %v171 = vld [vmem:[%s3 + $0x70] sm:$0xff]
  %v172 = vld [vmem:[%s3 + $0x78] sm:$0xff]
  %v174 = vlaneseq
  %v175 = vshrl.u32 %v174, 7
  %v176 = vsub.s32 0, %v175
  %v177 = vrot.slane %v155, %v176
  %v178 = vlaneseq
  %v179 = vshrl.u32 %v178, 7
  %v180 = vsub.s32 4, %v179
  %v181 = vrot.slane %v155, %v180
  %v184 = vlaneseq
  %v185 = vshrl.u32 %v184, 7
  %v186 = vsub.s32 0, %v185
  %v187 = vrot.slane %v177, %v186
  %v188 = vlaneseq
  %v189 = vshrl.u32 %v188, 7
  %v190 = vsub.s32 0, %v189
  %v191 = vrot.slane %v181, %v190
  %v208 = vunpack.c.l.b16 %v157
  %v209 = vunpack.c.h.b16 %v157
  %v210 = vunpack.c.l.b16 %v158
  %v211 = vunpack.c.h.b16 %v158
  %v212 = vunpack.c.l.b16 %v159
  %v213 = vunpack.c.h.b16 %v159
  %v214 = vunpack.c.l.b16 %v160
  %v215 = vunpack.c.h.b16 %v160
  %v216 = vunpack.c.l.b16 %v161
  %v217 = vunpack.c.h.b16 %v161
  %v218 = vunpack.c.l.b16 %v162
  %v219 = vunpack.c.h.b16 %v162
  %v220 = vunpack.c.l.b16 %v163
  %v221 = vunpack.c.h.b16 %v163
  %v222 = vunpack.c.l.b16 %v164
  %v223 = vunpack.c.h.b16 %v164
  %v224 = vunpack.c.l.b16 %v165
  %v225 = vunpack.c.h.b16 %v165
  %v226 = vunpack.c.l.b16 %v166
  %v227 = vunpack.c.h.b16 %v166
  %v228 = vunpack.c.l.b16 %v167
  %v229 = vunpack.c.h.b16 %v167
  %v230 = vunpack.c.l.b16 %v168
  %v231 = vunpack.c.h.b16 %v168
  %v232 = vunpack.c.l.b16 %v169
  %v233 = vunpack.c.h.b16 %v169
  %v234 = vunpack.c.l.b16 %v170
  %v235 = vunpack.c.h.b16 %v170
  %v236 = vunpack.c.l.b16 %v171
  %v237 = vunpack.c.h.b16 %v171
  %v238 = vunpack.c.l.b16 %v172
  %v239 = vunpack.c.h.b16 %v172
  %v240 = vpack.c.b16 %v210, %v208
  %v241 = vpack.c.b16 %v211, %v209
  %v242 = vpack.c.b16 %v214, %v212
  %v243 = vpack.c.b16 %v215, %v213
  %v244 = vpack.c.b16 %v218, %v216
  %v245 = vpack.c.b16 %v219, %v217
  %v246 = vpack.c.b16 %v222, %v220
  %v247 = vpack.c.b16 %v223, %v221
  %v248 = vpack.c.b16 %v226, %v224
  %v249 = vpack.c.b16 %v227, %v225
  %v250 = vpack.c.b16 %v230, %v228
  %v251 = vpack.c.b16 %v231, %v229
  %v252 = vpack.c.b16 %v234, %v232
  %v253 = vpack.c.b16 %v235, %v233
  %v254 = vpack.c.b16 %v238, %v236
  %v255 = vpack.c.b16 %v239, %v237
  %272 = vmatprep.subr.bf16.mxu0 %v255
  %273 = vmatpush1.bf16.msra.mxu0 %v254
  %274 = vmatprep.subr.bf16.mxu0 %v253
  %275 = vmatpush1.bf16.msra.mxu0 %v252
  %276 = vmatprep.subr.bf16.mxu0 %v251
  %277 = vmatpush1.bf16.msra.mxu0 %v250
  %278 = vmatprep.subr.bf16.mxu0 %v249
  %279 = vmatpush1.bf16.msra.mxu0 %v248
  %280 = vmatprep.subr.bf16.mxu0 %v247
  %281 = vmatpush1.bf16.msra.mxu0 %v246
  %282 = vmatprep.subr.bf16.mxu0 %v245
  %283 = vmatpush1.bf16.msra.mxu0 %v244
  %284 = vmatprep.subr.bf16.mxu0 %v243
  %285 = vmatpush1.bf16.msra.mxu0 %v242
  %286 = vmatprep.subr.bf16.mxu0 %v241
  %287 = vmatpush1.bf16.msra.mxu0 %v240
  %288 = vmatprep.subr.bf16.mxu0 0
  %289 = vmatpush2.bf16.msra.mxu0 0
  %290 = vmatprep.subr.bf16.mxu0 0
  %291 = vmatpush2.bf16.msra.mxu0 0
  %292 = vmatprep.subr.bf16.mxu0 0
  %293 = vmatpush2.bf16.msra.mxu0 0
  %294 = vmatprep.subr.bf16.mxu0 0
  %295 = vmatpush2.bf16.msra.mxu0 0
  %296 = vmatprep.subr.bf16.mxu0 0
  %297 = vmatpush2.bf16.msra.mxu0 0
  %298 = vmatprep.subr.bf16.mxu0 0
  %299 = vmatpush2.bf16.msra.mxu0 0
  %300 = vmatprep.subr.bf16.mxu0 0
  %301 = vmatpush2.bf16.msra.mxu0 0
  %302 = vmatprep.subr.bf16.mxu0 0
  %303 = vmatpush2.bf16.msra.mxu0 0
  %304 = vmatprep.mubr.bf16.mxu0 0
  %305 = vmatmul.mubr.bf16.gmra.mxu0 %v156
  %v306 = vpop.f32.mrf.mxu0
  %v307 = vadd.f32 %v187, %v306
  %v308 = vpop.f32.mrf.mxu0
  %v309 = vadd.f32 %v191, %v308
  %v310 = vpop.f32.mrf.mxu0
  %v311 = vpop.f32.mrf.mxu0
  %312 = vdwg.mxu0
  %v313 = vrot.slane %v307, 4
  %v314 = vadd.f32 %v307, %v313
  %v315 = vrot.slane %v314, 2
  %v316 = vadd.f32 %v314, %v315
  %v317 = vrot.slane %v316, 1
  %v318 = vadd.f32 %v316, %v317
  %v319 = vrot.slane %v309, 4
  %v320 = vadd.f32 %v309, %v319
  %v321 = vrot.slane %v320, 2
  %v322 = vadd.f32 %v320, %v321
  %v323 = vrot.slane %v322, 1
  %v324 = vadd.f32 %v322, %v323
  %v325 = vrcp.pop 8.0
  %v326 = vmul.f32 %v318, %v325
  %v327 = vmul.f32 %v324, %v325
  %v328 = vmul.f32 %v307, %v307
  %v329 = vmul.f32 %v309, %v309
  %v330 = vrot.slane %v328, 4
  %v331 = vadd.f32 %v328, %v330
  %v332 = vrot.slane %v331, 2
  %v333 = vadd.f32 %v331, %v332
  %v334 = vrot.slane %v333, 1
  %v335 = vadd.f32 %v333, %v334
  %v336 = vrot.slane %v329, 4
  %v337 = vadd.f32 %v329, %v336
  %v338 = vrot.slane %v337, 2
  %v339 = vadd.f32 %v337, %v338
  %v340 = vrot.slane %v339, 1
  %v341 = vadd.f32 %v339, %v340
  %v342 = vmul.f32 %v335, %v325
  %v343 = vmul.f32 %v341, %v325
  %v344 = vmul.f32 %v326, %v326
  %v345 = vmul.f32 %v327, %v327
  %v346 = vsub.f32 %v342, %v344
  %v347 = vsub.f32 %v343, %v345
  %v348 = vmax.f32 %v346, 0.0
  %v349 = vmax.f32 %v347, 0.0
  %v350 = vadd.f32 %v348, 1e-05
  %v351 = vadd.f32 %v349, 1e-05
  %v352 = vrsqrt.pop %v350
  %v353 = vrsqrt.pop %v351
  %v354 = vlaneseq
  %v355 = vshrl.u32 %v354, 7
  %v356 = vsub.s32 1, %v355
  %v357 = vrot.slane %v155, %v356
  %v358 = vlaneseq
  %v359 = vshrl.u32 %v358, 7
  %v360 = vsub.s32 5, %v359
  %v361 = vrot.slane %v155, %v360
  %v364 = vmul.f32 %v352, %v357
  %v365 = vmul.f32 %v353, %v361
  %v366 = vmul.f32 %v326, %v364
  %v367 = vmul.f32 %v327, %v365
  %v370 = vcombine.low %v366, %v367
  %v371 = vrot.slane %v370, 6
  %v373 = vsub.f32 %v155, %v371
  %v374 = vlaneseq
  %v375 = vshrl.u32 %v374, 7
  %v376 = vsub.s32 0, %v375
  %v377 = vrot.slane %v364, %v376
  %v378 = vlaneseq
  %v379 = vshrl.u32 %v378, 7
  %v380 = vsub.s32 0, %v379
  %v381 = vrot.slane %v365, %v380
  %v382 = vmul.f32 %v307, %v377
  %v383 = vmul.f32 %v309, %v381
  %v385 = vlaneseq
  %v386 = vshrl.u32 %v385, 7
  %v387 = vsub.s32 2, %v386
  %v388 = vrot.slane %v373, %v387
  %v389 = vlaneseq
  %v390 = vshrl.u32 %v389, 7
  %v391 = vsub.s32 6, %v390
  %v392 = vrot.slane %v373, %v391
  %v395 = vlaneseq
  %v396 = vshrl.u32 %v395, 7
  %v397 = vsub.s32 2, %v396
  %v398 = vrot.slane %v388, %v397
  %v399 = vlaneseq
  %v400 = vshrl.u32 %v399, 7
  %v401 = vsub.s32 2, %v400
  %v402 = vrot.slane %v392, %v401
  %v403 = vadd.f32 %v382, %v398
  %v404 = vadd.f32 %v383, %v402
  %vm405 = vcmp.gt.f32.partialorder %v403, 0.0
  %vm406 = vcmp.gt.f32.partialorder %v404, 0.0
  %v407 = vmul.f32 %v403, 0.2
  %v408 = vmul.f32 %v404, 0.2
  %v409 = vsel %vm405, %v403, %v407
  %v410 = vsel %vm406, %v404, %v408
  %v411 = vld [vmem:[%s6] sm:$0x77]
  %v412 = vld [vmem:[%s6 + $0x8] sm:$0x77]
  %v413 = vpack.c.bf16 %v409, %v409
  %v414 = vpack.c.bf16 %v410, %v410
  %v415 = vld [vmem:[%s5] sm:$0xff]
  %v416 = vld [vmem:[%s5 + $0x8] sm:$0xff]
  %v417 = vld [vmem:[%s5 + $0x10] sm:$0xff]
  %v418 = vld [vmem:[%s5 + $0x18] sm:$0xff]
  %v419 = vld [vmem:[%s5 + $0x20] sm:$0xff]
  %v420 = vld [vmem:[%s5 + $0x28] sm:$0xff]
  %v421 = vld [vmem:[%s5 + $0x30] sm:$0xff]
  %v422 = vld [vmem:[%s5 + $0x38] sm:$0xff]
  %v423 = vld [vmem:[%s5 + $0x40] sm:$0xff]
  %v424 = vld [vmem:[%s5 + $0x48] sm:$0xff]
  %v425 = vld [vmem:[%s5 + $0x50] sm:$0xff]
  %v426 = vld [vmem:[%s5 + $0x58] sm:$0xff]
  %v427 = vld [vmem:[%s5 + $0x60] sm:$0xff]
  %v428 = vld [vmem:[%s5 + $0x68] sm:$0xff]
  %v429 = vld [vmem:[%s5 + $0x70] sm:$0xff]
  %v430 = vld [vmem:[%s5 + $0x78] sm:$0xff]
  %v431 = vld [vmem:[%s5 + $0x80] sm:$0xff]
  %v432 = vld [vmem:[%s5 + $0x88] sm:$0xff]
  %v433 = vld [vmem:[%s5 + $0x90] sm:$0xff]
  %v434 = vld [vmem:[%s5 + $0x98] sm:$0xff]
  %v435 = vld [vmem:[%s5 + $0xa0] sm:$0xff]
  %v436 = vld [vmem:[%s5 + $0xa8] sm:$0xff]
  %v437 = vld [vmem:[%s5 + $0xb0] sm:$0xff]
  %v438 = vld [vmem:[%s5 + $0xb8] sm:$0xff]
  %v439 = vld [vmem:[%s5 + $0xc0] sm:$0xff]
  %v440 = vld [vmem:[%s5 + $0xc8] sm:$0xff]
  %v441 = vld [vmem:[%s5 + $0xd0] sm:$0xff]
  %v442 = vld [vmem:[%s5 + $0xd8] sm:$0xff]
  %v443 = vld [vmem:[%s5 + $0xe0] sm:$0xff]
  %v444 = vld [vmem:[%s5 + $0xe8] sm:$0xff]
  %v445 = vld [vmem:[%s5 + $0xf0] sm:$0xff]
  %v446 = vld [vmem:[%s5 + $0xf8] sm:$0xff]
  %v447 = vld [vmem:[%s5 + $0x100] sm:$0xff]
  %v448 = vld [vmem:[%s5 + $0x108] sm:$0xff]
  %v449 = vld [vmem:[%s5 + $0x110] sm:$0xff]
  %v450 = vld [vmem:[%s5 + $0x118] sm:$0xff]
  %v451 = vld [vmem:[%s5 + $0x120] sm:$0xff]
  %v452 = vld [vmem:[%s5 + $0x128] sm:$0xff]
  %v453 = vld [vmem:[%s5 + $0x130] sm:$0xff]
  %v454 = vld [vmem:[%s5 + $0x138] sm:$0xff]
  %v455 = vld [vmem:[%s5 + $0x140] sm:$0xff]
  %v456 = vld [vmem:[%s5 + $0x148] sm:$0xff]
  %v457 = vld [vmem:[%s5 + $0x150] sm:$0xff]
  %v458 = vld [vmem:[%s5 + $0x158] sm:$0xff]
  %v459 = vld [vmem:[%s5 + $0x160] sm:$0xff]
  %v460 = vld [vmem:[%s5 + $0x168] sm:$0xff]
  %v461 = vld [vmem:[%s5 + $0x170] sm:$0xff]
  %v462 = vld [vmem:[%s5 + $0x178] sm:$0xff]
  %v463 = vld [vmem:[%s5 + $0x180] sm:$0xff]
  %v464 = vld [vmem:[%s5 + $0x188] sm:$0xff]
  %v465 = vld [vmem:[%s5 + $0x190] sm:$0xff]
  %v466 = vld [vmem:[%s5 + $0x198] sm:$0xff]
  %v467 = vld [vmem:[%s5 + $0x1a0] sm:$0xff]
  %v468 = vld [vmem:[%s5 + $0x1a8] sm:$0xff]
  %v469 = vld [vmem:[%s5 + $0x1b0] sm:$0xff]
  %v470 = vld [vmem:[%s5 + $0x1b8] sm:$0xff]
  %v471 = vld [vmem:[%s5 + $0x1c0] sm:$0xff]
  %v472 = vld [vmem:[%s5 + $0x1c8] sm:$0xff]
  %v473 = vld [vmem:[%s5 + $0x1d0] sm:$0xff]
  %v474 = vld [vmem:[%s5 + $0x1d8] sm:$0xff]
  %v475 = vld [vmem:[%s5 + $0x1e0] sm:$0xff]
  %v476 = vld [vmem:[%s5 + $0x1e8] sm:$0xff]
  %v477 = vld [vmem:[%s5 + $0x1f0] sm:$0xff]
  %v478 = vld [vmem:[%s5 + $0x1f8] sm:$0xff]
  %v481 = vlaneseq
  %v482 = vshrl.u32 %v481, 7
  %v483 = vsub.s32 0, %v482
  %v484 = vrot.slane %v411, %v483
  %v485 = vlaneseq
  %v486 = vshrl.u32 %v485, 7
  %v487 = vsub.s32 4, %v486
  %v488 = vrot.slane %v411, %v487
  %v489 = vlaneseq
  %v490 = vshrl.u32 %v489, 7
  %v491 = vsub.s32 0, %v490
  %v492 = vrot.slane %v412, %v491
  %v493 = vlaneseq
  %v494 = vshrl.u32 %v493, 7
  %v495 = vsub.s32 4, %v494
  %v496 = vrot.slane %v412, %v495
  %v501 = vlaneseq
  %v502 = vshrl.u32 %v501, 7
  %v503 = vsub.s32 0, %v502
  %v504 = vrot.slane %v484, %v503
  %v505 = vlaneseq
  %v506 = vshrl.u32 %v505, 7
  %v507 = vsub.s32 0, %v506
  %v508 = vrot.slane %v488, %v507
  %v509 = vlaneseq
  %v510 = vshrl.u32 %v509, 7
  %v511 = vsub.s32 0, %v510
  %v512 = vrot.slane %v492, %v511
  %v513 = vlaneseq
  %v514 = vshrl.u32 %v513, 7
  %v515 = vsub.s32 0, %v514
  %v516 = vrot.slane %v496, %v515
  %v581 = vunpack.c.l.b16 %v415
  %v582 = vunpack.c.h.b16 %v415
  %v583 = vunpack.c.l.b16 %v416
  %v584 = vunpack.c.h.b16 %v416
  %v585 = vunpack.c.l.b16 %v417
  %v586 = vunpack.c.h.b16 %v417
  %v587 = vunpack.c.l.b16 %v418
  %v588 = vunpack.c.h.b16 %v418
  %v589 = vunpack.c.l.b16 %v419
  %v590 = vunpack.c.h.b16 %v419
  %v591 = vunpack.c.l.b16 %v420
  %v592 = vunpack.c.h.b16 %v420
  %v593 = vunpack.c.l.b16 %v421
  %v594 = vunpack.c.h.b16 %v421
  %v595 = vunpack.c.l.b16 %v422
  %v596 = vunpack.c.h.b16 %v422
  %v597 = vunpack.c.l.b16 %v423
  %v598 = vunpack.c.h.b16 %v423
  %v599 = vunpack.c.l.b16 %v424
  %v600 = vunpack.c.h.b16 %v424
  %v601 = vunpack.c.l.b16 %v425
  %v602 = vunpack.c.h.b16 %v425
  %v603 = vunpack.c.l.b16 %v426
  %v604 = vunpack.c.h.b16 %v426
  %v605 = vunpack.c.l.b16 %v427
  %v606 = vunpack.c.h.b16 %v427
  %v607 = vunpack.c.l.b16 %v428
  %v608 = vunpack.c.h.b16 %v428
  %v609 = vunpack.c.l.b16 %v429
  %v610 = vunpack.c.h.b16 %v429
  %v611 = vunpack.c.l.b16 %v430
  %v612 = vunpack.c.h.b16 %v430
  %v613 = vunpack.c.l.b16 %v431
  %v614 = vunpack.c.h.b16 %v431
  %v615 = vunpack.c.l.b16 %v432
  %v616 = vunpack.c.h.b16 %v432
  %v617 = vunpack.c.l.b16 %v433
  %v618 = vunpack.c.h.b16 %v433
  %v619 = vunpack.c.l.b16 %v434
  %v620 = vunpack.c.h.b16 %v434
  %v621 = vunpack.c.l.b16 %v435
  %v622 = vunpack.c.h.b16 %v435
  %v623 = vunpack.c.l.b16 %v436
  %v624 = vunpack.c.h.b16 %v436
  %v625 = vunpack.c.l.b16 %v437
  %v626 = vunpack.c.h.b16 %v437
  %v627 = vunpack.c.l.b16 %v438
  %v628 = vunpack.c.h.b16 %v438
  %v629 = vunpack.c.l.b16 %v439
  %v630 = vunpack.c.h.b16 %v439
  %v631 = vunpack.c.l.b16 %v440
  %v632 = vunpack.c.h.b16 %v440
  %v633 = vunpack.c.l.b16 %v441
  %v634 = vunpack.c.h.b16 %v441
  %v635 = vunpack.c.l.b16 %v442
  %v636 = vunpack.c.h.b16 %v442
  %v637 = vunpack.c.l.b16 %v443
  %v638 = vunpack.c.h.b16 %v443
  %v639 = vunpack.c.l.b16 %v444
  %v640 = vunpack.c.h.b16 %v444
  %v641 = vunpack.c.l.b16 %v445
  %v642 = vunpack.c.h.b16 %v445
  %v643 = vunpack.c.l.b16 %v446
  %v644 = vunpack.c.h.b16 %v446
  %v645 = vunpack.c.l.b16 %v447
  %v646 = vunpack.c.h.b16 %v447
  %v647 = vunpack.c.l.b16 %v448
  %v648 = vunpack.c.h.b16 %v448
  %v649 = vunpack.c.l.b16 %v449
  %v650 = vunpack.c.h.b16 %v449
  %v651 = vunpack.c.l.b16 %v450
  %v652 = vunpack.c.h.b16 %v450
  %v653 = vunpack.c.l.b16 %v451
  %v654 = vunpack.c.h.b16 %v451
  %v655 = vunpack.c.l.b16 %v452
  %v656 = vunpack.c.h.b16 %v452
  %v657 = vunpack.c.l.b16 %v453
  %v658 = vunpack.c.h.b16 %v453
  %v659 = vunpack.c.l.b16 %v454
  %v660 = vunpack.c.h.b16 %v454
  %v661 = vunpack.c.l.b16 %v455
  %v662 = vunpack.c.h.b16 %v455
  %v663 = vunpack.c.l.b16 %v456
  %v664 = vunpack.c.h.b16 %v456
  %v665 = vunpack.c.l.b16 %v457
  %v666 = vunpack.c.h.b16 %v457
  %v667 = vunpack.c.l.b16 %v458
  %v668 = vunpack.c.h.b16 %v458
  %v669 = vunpack.c.l.b16 %v459
  %v670 = vunpack.c.h.b16 %v459
  %v671 = vunpack.c.l.b16 %v460
  %v672 = vunpack.c.h.b16 %v460
  %v673 = vunpack.c.l.b16 %v461
  %v674 = vunpack.c.h.b16 %v461
  %v675 = vunpack.c.l.b16 %v462
  %v676 = vunpack.c.h.b16 %v462
  %v677 = vunpack.c.l.b16 %v463
  %v678 = vunpack.c.h.b16 %v463
  %v679 = vunpack.c.l.b16 %v464
  %v680 = vunpack.c.h.b16 %v464
  %v681 = vunpack.c.l.b16 %v465
  %v682 = vunpack.c.h.b16 %v465
  %v683 = vunpack.c.l.b16 %v466
  %v684 = vunpack.c.h.b16 %v466
  %v685 = vunpack.c.l.b16 %v467
  %v686 = vunpack.c.h.b16 %v467
  %v687 = vunpack.c.l.b16 %v468
  %v688 = vunpack.c.h.b16 %v468
  %v689 = vunpack.c.l.b16 %v469
  %v690 = vunpack.c.h.b16 %v469
  %v691 = vunpack.c.l.b16 %v470
  %v692 = vunpack.c.h.b16 %v470
  %v693 = vunpack.c.l.b16 %v471
  %v694 = vunpack.c.h.b16 %v471
  %v695 = vunpack.c.l.b16 %v472
  %v696 = vunpack.c.h.b16 %v472
  %v697 = vunpack.c.l.b16 %v473
  %v698 = vunpack.c.h.b16 %v473
  %v699 = vunpack.c.l.b16 %v474
  %v700 = vunpack.c.h.b16 %v474
  %v701 = vunpack.c.l.b16 %v475
  %v702 = vunpack.c.h.b16 %v475
  %v703 = vunpack.c.l.b16 %v476
  %v704 = vunpack.c.h.b16 %v476
  %v705 = vunpack.c.l.b16 %v477
  %v706 = vunpack.c.h.b16 %v477
  %v707 = vunpack.c.l.b16 %v478
  %v708 = vunpack.c.h.b16 %v478
  %v709 = vpack.c.b16 %v585, %v581
  %v710 = vpack.c.b16 %v586, %v582
  %v711 = vpack.c.b16 %v587, %v583
  %v712 = vpack.c.b16 %v588, %v584
  %v713 = vpack.c.b16 %v593, %v589
  %v714 = vpack.c.b16 %v594, %v590
  %v715 = vpack.c.b16 %v595, %v591
  %v716 = vpack.c.b16 %v596, %v592
  %v717 = vpack.c.b16 %v601, %v597
  %v718 = vpack.c.b16 %v602, %v598
  %v719 = vpack.c.b16 %v603, %v599
  %v720 = vpack.c.b16 %v604, %v600
  %v721 = vpack.c.b16 %v609, %v605
  %v722 = vpack.c.b16 %v610, %v606
  %v723 = vpack.c.b16 %v611, %v607
  %v724 = vpack.c.b16 %v612, %v608
  %v725 = vpack.c.b16 %v617, %v613
  %v726 = vpack.c.b16 %v618, %v614
  %v727 = vpack.c.b16 %v619, %v615
  %v728 = vpack.c.b16 %v620, %v616
  %v729 = vpack.c.b16 %v625, %v621
  %v730 = vpack.c.b16 %v626, %v622
  %v731 = vpack.c.b16 %v627, %v623
  %v732 = vpack.c.b16 %v628, %v624
  %v733 = vpack.c.b16 %v633, %v629
  %v734 = vpack.c.b16 %v634, %v630
  %v735 = vpack.c.b16 %v635, %v631
  %v736 = vpack.c.b16 %v636, %v632
  %v737 = vpack.c.b16 %v641, %v637
  %v738 = vpack.c.b16 %v642, %v638
  %v739 = vpack.c.b16 %v643, %v639
  %v740 = vpack.c.b16 %v644, %v640
  %v741 = vpack.c.b16 %v649, %v645
  %v742 = vpack.c.b16 %v650, %v646
  %v743 = vpack.c.b16 %v651, %v647
  %v744 = vpack.c.b16 %v652, %v648
  %v745 = vpack.c.b16 %v657, %v653
  %v746 = vpack.c.b16 %v658, %v654
  %v747 = vpack.c.b16 %v659, %v655
  %v748 = vpack.c.b16 %v660, %v656
  %v749 = vpack.c.b16 %v665, %v661
  %v750 = vpack.c.b16 %v666, %v662
  %v751 = vpack.c.b16 %v667, %v663
  %v752 = vpack.c.b16 %v668, %v664
  %v753 = vpack.c.b16 %v673, %v669
  %v754 = vpack.c.b16 %v674, %v670
  %v755 = vpack.c.b16 %v675, %v671
  %v756 = vpack.c.b16 %v676, %v672
  %v757 = vpack.c.b16 %v681, %v677
  %v758 = vpack.c.b16 %v682, %v678
  %v759 = vpack.c.b16 %v683, %v679
  %v760 = vpack.c.b16 %v684, %v680
  %v761 = vpack.c.b16 %v689, %v685
  %v762 = vpack.c.b16 %v690, %v686
  %v763 = vpack.c.b16 %v691, %v687
  %v764 = vpack.c.b16 %v692, %v688
  %v765 = vpack.c.b16 %v697, %v693
  %v766 = vpack.c.b16 %v698, %v694
  %v767 = vpack.c.b16 %v699, %v695
  %v768 = vpack.c.b16 %v700, %v696
  %v769 = vpack.c.b16 %v705, %v701
  %v770 = vpack.c.b16 %v706, %v702
  %v771 = vpack.c.b16 %v707, %v703
  %v772 = vpack.c.b16 %v708, %v704
  %837 = vmatprep.subr.bf16.mxu0 %v738
  %838 = vmatpush1.bf16.msra.mxu0 %v737
  %839 = vmatprep.subr.bf16.mxu0 %v734
  %840 = vmatpush1.bf16.msra.mxu0 %v733
  %841 = vmatprep.subr.bf16.mxu0 %v730
  %842 = vmatpush1.bf16.msra.mxu0 %v729
  %843 = vmatprep.subr.bf16.mxu0 %v726
  %844 = vmatpush1.bf16.msra.mxu0 %v725
  %845 = vmatprep.subr.bf16.mxu0 %v722
  %846 = vmatpush1.bf16.msra.mxu0 %v721
  %847 = vmatprep.subr.bf16.mxu0 %v718
  %848 = vmatpush1.bf16.msra.mxu0 %v717
  %849 = vmatprep.subr.bf16.mxu0 %v714
  %850 = vmatpush1.bf16.msra.mxu0 %v713
  %851 = vmatprep.subr.bf16.mxu0 %v710
  %852 = vmatpush1.bf16.msra.mxu0 %v709
  %853 = vmatprep.subr.bf16.mxu0 %v770
  %854 = vmatpush2.bf16.msra.mxu0 %v769
  %855 = vmatprep.subr.bf16.mxu0 %v766
  %856 = vmatpush2.bf16.msra.mxu0 %v765
  %857 = vmatprep.subr.bf16.mxu0 %v762
  %858 = vmatpush2.bf16.msra.mxu0 %v761
  %859 = vmatprep.subr.bf16.mxu0 %v758
  %860 = vmatpush2.bf16.msra.mxu0 %v757
  %861 = vmatprep.subr.bf16.mxu0 %v754
  %862 = vmatpush2.bf16.msra.mxu0 %v753
  %863 = vmatprep.subr.bf16.mxu0 %v750
  %864 = vmatpush2.bf16.msra.mxu0 %v749
  %865 = vmatprep.subr.bf16.mxu0 %v746
  %866 = vmatpush2.bf16.msra.mxu0 %v745
  %867 = vmatprep.subr.bf16.mxu0 %v742
  %868 = vmatpush2.bf16.msra.mxu0 %v741
  %869 = vmatprep.mubr.bf16.mxu0 %v414
  %870 = vmatmul.mubr.bf16.gmra.mxu0 %v413
  %v871 = vpop.f32.mrf.mxu0
  %v872 = vadd.f32 %v504, %v871
  %v873 = vpop.f32.mrf.mxu0
  %v874 = vadd.f32 %v508, %v873
  %v875 = vpop.f32.mrf.mxu0
  %v876 = vpop.f32.mrf.mxu0
  %877 = vdwg.mxu0
  %878 = vmatprep.subr.bf16.mxu0 %v740
  %879 = vmatpush1.bf16.msra.mxu0 %v739
  %880 = vmatprep.subr.bf16.mxu0 %v736
  %881 = vmatpush1.bf16.msra.mxu0 %v735
  %882 = vmatprep.subr.bf16.mxu0 %v732
  %883 = vmatpush1.bf16.msra.mxu0 %v731
  %884 = vmatprep.subr.bf16.mxu0 %v728
  %885 = vmatpush1.bf16.msra.mxu0 %v727
  %886 = vmatprep.subr.bf16.mxu0 %v724
  %887 = vmatpush1.bf16.msra.mxu0 %v723
  %888 = vmatprep.subr.bf16.mxu0 %v720
  %889 = vmatpush1.bf16.msra.mxu0 %v719
  %890 = vmatprep.subr.bf16.mxu0 %v716
  %891 = vmatpush1.bf16.msra.mxu0 %v715
  %892 = vmatprep.subr.bf16.mxu0 %v712
  %893 = vmatpush1.bf16.msra.mxu0 %v711
  %894 = vmatprep.subr.bf16.mxu0 %v772
  %895 = vmatpush2.bf16.msra.mxu0 %v771
  %896 = vmatprep.subr.bf16.mxu0 %v768
  %897 = vmatpush2.bf16.msra.mxu0 %v767
  %898 = vmatprep.subr.bf16.mxu0 %v764
  %899 = vmatpush2.bf16.msra.mxu0 %v763
  %900 = vmatprep.subr.bf16.mxu0 %v760
  %901 = vmatpush2.bf16.msra.mxu0 %v759
  %902 = vmatprep.subr.bf16.mxu0 %v756
  %903 = vmatpush2.bf16.msra.mxu0 %v755
  %904 = vmatprep.subr.bf16.mxu0 %v752
  %905 = vmatpush2.bf16.msra.mxu0 %v751
  %906 = vmatprep.subr.bf16.mxu0 %v748
  %907 = vmatpush2.bf16.msra.mxu0 %v747
  %908 = vmatprep.subr.bf16.mxu0 %v744
  %909 = vmatpush2.bf16.msra.mxu0 %v743
  %910 = vmatprep.mubr.bf16.mxu0 %v414
  %911 = vmatmul.mubr.bf16.gmra.mxu0 %v413
  %v912 = vpop.f32.mrf.mxu0
  %v913 = vadd.f32 %v512, %v912
  %v914 = vpop.f32.mrf.mxu0
  %v915 = vadd.f32 %v516, %v914
  %v916 = vpop.f32.mrf.mxu0
  %v917 = vpop.f32.mrf.mxu0
  %918 = vdwg.mxu0
  %v919 = vrot.slane %v872, 4
  %v920 = vadd.f32 %v872, %v919
  %v921 = vrot.slane %v920, 2
  %v922 = vadd.f32 %v920, %v921
  %v923 = vrot.slane %v922, 1
  %v924 = vadd.f32 %v922, %v923
  %v925 = vrot.slane %v874, 4
  %v926 = vadd.f32 %v874, %v925
  %v927 = vrot.slane %v926, 2
  %v928 = vadd.f32 %v926, %v927
  %v929 = vrot.slane %v928, 1
  %v930 = vadd.f32 %v928, %v929
  %v931 = vrot.slane %v913, 4
  %v932 = vadd.f32 %v913, %v931
  %v933 = vrot.slane %v932, 2
  %v934 = vadd.f32 %v932, %v933
  %v935 = vrot.slane %v934, 1
  %v936 = vadd.f32 %v934, %v935
  %v937 = vrot.slane %v915, 4
  %v938 = vadd.f32 %v915, %v937
  %v939 = vrot.slane %v938, 2
  %v940 = vadd.f32 %v938, %v939
  %v941 = vrot.slane %v940, 1
  %v942 = vadd.f32 %v940, %v941
  %v943 = vmul.f32 %v924, %v325
  %v944 = vmul.f32 %v930, %v325
  %v945 = vmul.f32 %v936, %v325
  %v946 = vmul.f32 %v942, %v325
  %v947 = vmul.f32 %v872, %v872
  %v948 = vmul.f32 %v874, %v874
  %v949 = vmul.f32 %v913, %v913
  %v950 = vmul.f32 %v915, %v915
  %v951 = vrot.slane %v947, 4
  %v952 = vadd.f32 %v947, %v951
  %v953 = vrot.slane %v952, 2
  %v954 = vadd.f32 %v952, %v953
  %v955 = vrot.slane %v954, 1
  %v956 = vadd.f32 %v954, %v955
  %v957 = vrot.slane %v948, 4
  %v958 = vadd.f32 %v948, %v957
  %v959 = vrot.slane %v958, 2
  %v960 = vadd.f32 %v958, %v959
  %v961 = vrot.slane %v960, 1
  %v962 = vadd.f32 %v960, %v961
  %v963 = vrot.slane %v949, 4
  %v964 = vadd.f32 %v949, %v963
  %v965 = vrot.slane %v964, 2
  %v966 = vadd.f32 %v964, %v965
  %v967 = vrot.slane %v966, 1
  %v968 = vadd.f32 %v966, %v967
  %v969 = vrot.slane %v950, 4
  %v970 = vadd.f32 %v950, %v969
  %v971 = vrot.slane %v970, 2
  %v972 = vadd.f32 %v970, %v971
  %v973 = vrot.slane %v972, 1
  %v974 = vadd.f32 %v972, %v973
  %v975 = vmul.f32 %v956, %v325
  %v976 = vmul.f32 %v962, %v325
  %v977 = vmul.f32 %v968, %v325
  %v978 = vmul.f32 %v974, %v325
  %v979 = vmul.f32 %v943, %v943
  %v980 = vmul.f32 %v944, %v944
  %v981 = vmul.f32 %v945, %v945
  %v982 = vmul.f32 %v946, %v946
  %v983 = vsub.f32 %v975, %v979
  %v984 = vsub.f32 %v976, %v980
  %v985 = vsub.f32 %v977, %v981
  %v986 = vsub.f32 %v978, %v982
  %v987 = vmax.f32 %v983, 0.0
  %v988 = vmax.f32 %v984, 0.0
  %v989 = vmax.f32 %v985, 0.0
  %v990 = vmax.f32 %v986, 0.0
  %v991 = vadd.f32 %v987, 1e-05
  %v992 = vadd.f32 %v988, 1e-05
  %v993 = vadd.f32 %v989, 1e-05
  %v994 = vadd.f32 %v990, 1e-05
  %v995 = vrsqrt.pop %v991
  %v996 = vrsqrt.pop %v992
  %v997 = vrsqrt.pop %v993
  %v998 = vrsqrt.pop %v994
  %v999 = vlaneseq
  %v1000 = vshrl.u32 %v999, 7
  %v1001 = vsub.s32 1, %v1000
  %v1002 = vrot.slane %v411, %v1001
  %v1003 = vlaneseq
  %v1004 = vshrl.u32 %v1003, 7
  %v1005 = vsub.s32 5, %v1004
  %v1006 = vrot.slane %v411, %v1005
  %v1007 = vlaneseq
  %v1008 = vshrl.u32 %v1007, 7
  %v1009 = vsub.s32 1, %v1008
  %v1010 = vrot.slane %v412, %v1009
  %v1011 = vlaneseq
  %v1012 = vshrl.u32 %v1011, 7
  %v1013 = vsub.s32 5, %v1012
  %v1014 = vrot.slane %v412, %v1013
  %v1019 = vmul.f32 %v995, %v1002
  %v1020 = vmul.f32 %v996, %v1006
  %v1021 = vmul.f32 %v997, %v1010
  %v1022 = vmul.f32 %v998, %v1014
  %v1023 = vmul.f32 %v943, %v1019
  %v1024 = vmul.f32 %v944, %v1020
  %v1025 = vmul.f32 %v945, %v1021
  %v1026 = vmul.f32 %v946, %v1022
  %v1031 = vcombine.low %v1023, %v1024
  %v1032 = vcombine.low %v1025, %v1026
  %v1033 = vrot.slane %v1031, 6
  %v1034 = vrot.slane %v1032, 6
  %v1037 = vsub.f32 %v411, %v1033
  %v1038 = vsub.f32 %v412, %v1034
  %v1039 = vlaneseq
  %v1040 = vshrl.u32 %v1039, 7
  %v1041 = vsub.s32 0, %v1040
  %v1042 = vrot.slane %v1019, %v1041
  %v1043 = vlaneseq
  %v1044 = vshrl.u32 %v1043, 7
  %v1045 = vsub.s32 0, %v1044
  %v1046 = vrot.slane %v1020, %v1045
  %v1047 = vlaneseq
  %v1048 = vshrl.u32 %v1047, 7
  %v1049 = vsub.s32 0, %v1048
  %v1050 = vrot.slane %v1021, %v1049
  %v1051 = vlaneseq
  %v1052 = vshrl.u32 %v1051, 7
  %v1053 = vsub.s32 0, %v1052
  %v1054 = vrot.slane %v1022, %v1053
  %v1055 = vmul.f32 %v872, %v1042
  %v1056 = vmul.f32 %v874, %v1046
  %v1057 = vmul.f32 %v913, %v1050
  %v1058 = vmul.f32 %v915, %v1054
  %v1061 = vlaneseq
  %v1062 = vshrl.u32 %v1061, 7
  %v1063 = vsub.s32 2, %v1062
  %v1064 = vrot.slane %v1037, %v1063
  %v1065 = vlaneseq
  %v1066 = vshrl.u32 %v1065, 7
  %v1067 = vsub.s32 6, %v1066
  %v1068 = vrot.slane %v1037, %v1067
  %v1069 = vlaneseq
  %v1070 = vshrl.u32 %v1069, 7
  %v1071 = vsub.s32 2, %v1070
  %v1072 = vrot.slane %v1038, %v1071
  %v1073 = vlaneseq
  %v1074 = vshrl.u32 %v1073, 7
  %v1075 = vsub.s32 6, %v1074
  %v1076 = vrot.slane %v1038, %v1075
  %v1081 = vlaneseq
  %v1082 = vshrl.u32 %v1081, 7
  %v1083 = vsub.s32 2, %v1082
  %v1084 = vrot.slane %v1064, %v1083
  %v1085 = vlaneseq
  %v1086 = vshrl.u32 %v1085, 7
  %v1087 = vsub.s32 2, %v1086
  %v1088 = vrot.slane %v1068, %v1087
  %v1089 = vlaneseq
  %v1090 = vshrl.u32 %v1089, 7
  %v1091 = vsub.s32 2, %v1090
  %v1092 = vrot.slane %v1072, %v1091
  %v1093 = vlaneseq
  %v1094 = vshrl.u32 %v1093, 7
  %v1095 = vsub.s32 2, %v1094
  %v1096 = vrot.slane %v1076, %v1095
  %v1097 = vadd.f32 %v1055, %v1084
  %v1098 = vadd.f32 %v1056, %v1088
  %v1099 = vadd.f32 %v1057, %v1092
  %v1100 = vadd.f32 %v1058, %v1096
  %vm1101 = vcmp.gt.f32.partialorder %v1097, 0.0
  %vm1102 = vcmp.gt.f32.partialorder %v1098, 0.0
  %vm1103 = vcmp.gt.f32.partialorder %v1099, 0.0
  %vm1104 = vcmp.gt.f32.partialorder %v1100, 0.0
  %v1105 = vmul.f32 %v1097, 0.2
  %v1106 = vmul.f32 %v1098, 0.2
  %v1107 = vmul.f32 %v1099, 0.2
  %v1108 = vmul.f32 %v1100, 0.2
  %v1109 = vsel %vm1101, %v1097, %v1105
  %v1110 = vsel %vm1102, %v1098, %v1106
  %v1111 = vsel %vm1103, %v1099, %v1107
  %v1112 = vsel %vm1104, %v1100, %v1108
  %v1113 = vld [vmem:[%s8] sm:$0x77]
  %v1114 = vld [vmem:[%s8 + $0x8] sm:$0x77]
  %v1115 = vld [vmem:[%s8 + $0x10] sm:$0x77]
  %v1116 = vld [vmem:[%s8 + $0x18] sm:$0x77]
  %v1117 = vpack.c.bf16 %v1109, %v1109
  %v1118 = vpack.c.bf16 %v1110, %v1110
  %v1119 = vpack.c.bf16 %v1111, %v1111
  %v1120 = vpack.c.bf16 %v1112, %v1112
  %v1121 = vld [vmem:[%s7] sm:$0xff]
  %v1122 = vld [vmem:[%s7 + $0x8] sm:$0xff]
  %v1123 = vld [vmem:[%s7 + $0x10] sm:$0xff]
  %v1124 = vld [vmem:[%s7 + $0x18] sm:$0xff]
  %v1125 = vld [vmem:[%s7 + $0x20] sm:$0xff]
  %v1126 = vld [vmem:[%s7 + $0x28] sm:$0xff]
  %v1127 = vld [vmem:[%s7 + $0x30] sm:$0xff]
  %v1128 = vld [vmem:[%s7 + $0x38] sm:$0xff]
  %v1129 = vld [vmem:[%s7 + $0x40] sm:$0xff]
  %v1130 = vld [vmem:[%s7 + $0x48] sm:$0xff]
  %v1131 = vld [vmem:[%s7 + $0x50] sm:$0xff]
  %v1132 = vld [vmem:[%s7 + $0x58] sm:$0xff]
  %v1133 = vld [vmem:[%s7 + $0x60] sm:$0xff]
  %v1134 = vld [vmem:[%s7 + $0x68] sm:$0xff]
  %v1135 = vld [vmem:[%s7 + $0x70] sm:$0xff]
  %v1136 = vld [vmem:[%s7 + $0x78] sm:$0xff]
  %v1137 = vld [vmem:[%s7 + $0x80] sm:$0xff]
  %v1138 = vld [vmem:[%s7 + $0x88] sm:$0xff]
  %v1139 = vld [vmem:[%s7 + $0x90] sm:$0xff]
  %v1140 = vld [vmem:[%s7 + $0x98] sm:$0xff]
  %v1141 = vld [vmem:[%s7 + $0xa0] sm:$0xff]
  %v1142 = vld [vmem:[%s7 + $0xa8] sm:$0xff]
  %v1143 = vld [vmem:[%s7 + $0xb0] sm:$0xff]
  %v1144 = vld [vmem:[%s7 + $0xb8] sm:$0xff]
  %v1145 = vld [vmem:[%s7 + $0xc0] sm:$0xff]
  %v1146 = vld [vmem:[%s7 + $0xc8] sm:$0xff]
  %v1147 = vld [vmem:[%s7 + $0xd0] sm:$0xff]
  %v1148 = vld [vmem:[%s7 + $0xd8] sm:$0xff]
  %v1149 = vld [vmem:[%s7 + $0xe0] sm:$0xff]
  %v1150 = vld [vmem:[%s7 + $0xe8] sm:$0xff]
  %v1151 = vld [vmem:[%s7 + $0xf0] sm:$0xff]
  %v1152 = vld [vmem:[%s7 + $0xf8] sm:$0xff]
  %v1153 = vld [vmem:[%s7 + $0x100] sm:$0xff]
  %v1154 = vld [vmem:[%s7 + $0x108] sm:$0xff]
  %v1155 = vld [vmem:[%s7 + $0x110] sm:$0xff]
  %v1156 = vld [vmem:[%s7 + $0x118] sm:$0xff]
  %v1157 = vld [vmem:[%s7 + $0x120] sm:$0xff]
  %v1158 = vld [vmem:[%s7 + $0x128] sm:$0xff]
  %v1159 = vld [vmem:[%s7 + $0x130] sm:$0xff]
  %v1160 = vld [vmem:[%s7 + $0x138] sm:$0xff]
  %v1161 = vld [vmem:[%s7 + $0x140] sm:$0xff]
  %v1162 = vld [vmem:[%s7 + $0x148] sm:$0xff]
  %v1163 = vld [vmem:[%s7 + $0x150] sm:$0xff]
  %v1164 = vld [vmem:[%s7 + $0x158] sm:$0xff]
  %v1165 = vld [vmem:[%s7 + $0x160] sm:$0xff]
  %v1166 = vld [vmem:[%s7 + $0x168] sm:$0xff]
  %v1167 = vld [vmem:[%s7 + $0x170] sm:$0xff]
  %v1168 = vld [vmem:[%s7 + $0x178] sm:$0xff]
  %v1169 = vld [vmem:[%s7 + $0x180] sm:$0xff]
  %v1170 = vld [vmem:[%s7 + $0x188] sm:$0xff]
  %v1171 = vld [vmem:[%s7 + $0x190] sm:$0xff]
  %v1172 = vld [vmem:[%s7 + $0x198] sm:$0xff]
  %v1173 = vld [vmem:[%s7 + $0x1a0] sm:$0xff]
  %v1174 = vld [vmem:[%s7 + $0x1a8] sm:$0xff]
  %v1175 = vld [vmem:[%s7 + $0x1b0] sm:$0xff]
  %v1176 = vld [vmem:[%s7 + $0x1b8] sm:$0xff]
  %v1177 = vld [vmem:[%s7 + $0x1c0] sm:$0xff]
  %v1178 = vld [vmem:[%s7 + $0x1c8] sm:$0xff]
  %v1179 = vld [vmem:[%s7 + $0x1d0] sm:$0xff]
  %v1180 = vld [vmem:[%s7 + $0x1d8] sm:$0xff]
  %v1181 = vld [vmem:[%s7 + $0x1e0] sm:$0xff]
  %v1182 = vld [vmem:[%s7 + $0x1e8] sm:$0xff]
  %v1183 = vld [vmem:[%s7 + $0x1f0] sm:$0xff]
  %v1184 = vld [vmem:[%s7 + $0x1f8] sm:$0xff]
  %v1185 = vld [vmem:[%s7 + $0x200] sm:$0xff]
  %v1186 = vld [vmem:[%s7 + $0x208] sm:$0xff]
  %v1187 = vld [vmem:[%s7 + $0x210] sm:$0xff]
  %v1188 = vld [vmem:[%s7 + $0x218] sm:$0xff]
  %v1189 = vld [vmem:[%s7 + $0x220] sm:$0xff]
  %v1190 = vld [vmem:[%s7 + $0x228] sm:$0xff]
  %v1191 = vld [vmem:[%s7 + $0x230] sm:$0xff]
  %v1192 = vld [vmem:[%s7 + $0x238] sm:$0xff]
  %v1193 = vld [vmem:[%s7 + $0x240] sm:$0xff]
  %v1194 = vld [vmem:[%s7 + $0x248] sm:$0xff]
  %v1195 = vld [vmem:[%s7 + $0x250] sm:$0xff]
  %v1196 = vld [vmem:[%s7 + $0x258] sm:$0xff]
  %v1197 = vld [vmem:[%s7 + $0x260] sm:$0xff]
  %v1198 = vld [vmem:[%s7 + $0x268] sm:$0xff]
  %v1199 = vld [vmem:[%s7 + $0x270] sm:$0xff]
  %v1200 = vld [vmem:[%s7 + $0x278] sm:$0xff]
  %v1201 = vld [vmem:[%s7 + $0x280] sm:$0xff]
  %v1202 = vld [vmem:[%s7 + $0x288] sm:$0xff]
  %v1203 = vld [vmem:[%s7 + $0x290] sm:$0xff]
  %v1204 = vld [vmem:[%s7 + $0x298] sm:$0xff]
  %v1205 = vld [vmem:[%s7 + $0x2a0] sm:$0xff]
  %v1206 = vld [vmem:[%s7 + $0x2a8] sm:$0xff]
  %v1207 = vld [vmem:[%s7 + $0x2b0] sm:$0xff]
  %v1208 = vld [vmem:[%s7 + $0x2b8] sm:$0xff]
  %v1209 = vld [vmem:[%s7 + $0x2c0] sm:$0xff]
  %v1210 = vld [vmem:[%s7 + $0x2c8] sm:$0xff]
  %v1211 = vld [vmem:[%s7 + $0x2d0] sm:$0xff]
  %v1212 = vld [vmem:[%s7 + $0x2d8] sm:$0xff]
  %v1213 = vld [vmem:[%s7 + $0x2e0] sm:$0xff]
  %v1214 = vld [vmem:[%s7 + $0x2e8] sm:$0xff]
  %v1215 = vld [vmem:[%s7 + $0x2f0] sm:$0xff]
  %v1216 = vld [vmem:[%s7 + $0x2f8] sm:$0xff]
  %v1217 = vld [vmem:[%s7 + $0x300] sm:$0xff]
  %v1218 = vld [vmem:[%s7 + $0x308] sm:$0xff]
  %v1219 = vld [vmem:[%s7 + $0x310] sm:$0xff]
  %v1220 = vld [vmem:[%s7 + $0x318] sm:$0xff]
  %v1221 = vld [vmem:[%s7 + $0x320] sm:$0xff]
  %v1222 = vld [vmem:[%s7 + $0x328] sm:$0xff]
  %v1223 = vld [vmem:[%s7 + $0x330] sm:$0xff]
  %v1224 = vld [vmem:[%s7 + $0x338] sm:$0xff]
  %v1225 = vld [vmem:[%s7 + $0x340] sm:$0xff]
  %v1226 = vld [vmem:[%s7 + $0x348] sm:$0xff]
  %v1227 = vld [vmem:[%s7 + $0x350] sm:$0xff]
  %v1228 = vld [vmem:[%s7 + $0x358] sm:$0xff]
  %v1229 = vld [vmem:[%s7 + $0x360] sm:$0xff]
  %v1230 = vld [vmem:[%s7 + $0x368] sm:$0xff]
  %v1231 = vld [vmem:[%s7 + $0x370] sm:$0xff]
  %v1232 = vld [vmem:[%s7 + $0x378] sm:$0xff]
  %v1233 = vld [vmem:[%s7 + $0x380] sm:$0xff]
  %v1234 = vld [vmem:[%s7 + $0x388] sm:$0xff]
  %v1235 = vld [vmem:[%s7 + $0x390] sm:$0xff]
  %v1236 = vld [vmem:[%s7 + $0x398] sm:$0xff]
  %v1237 = vld [vmem:[%s7 + $0x3a0] sm:$0xff]
  %v1238 = vld [vmem:[%s7 + $0x3a8] sm:$0xff]
  %v1239 = vld [vmem:[%s7 + $0x3b0] sm:$0xff]
  %v1240 = vld [vmem:[%s7 + $0x3b8] sm:$0xff]
  %v1241 = vld [vmem:[%s7 + $0x3c0] sm:$0xff]
  %v1242 = vld [vmem:[%s7 + $0x3c8] sm:$0xff]
  %v1243 = vld [vmem:[%s7 + $0x3d0] sm:$0xff]
  %v1244 = vld [vmem:[%s7 + $0x3d8] sm:$0xff]
  %v1245 = vld [vmem:[%s7 + $0x3e0] sm:$0xff]
  %v1246 = vld [vmem:[%s7 + $0x3e8] sm:$0xff]
  %v1247 = vld [vmem:[%s7 + $0x3f0] sm:$0xff]
  %v1248 = vld [vmem:[%s7 + $0x3f8] sm:$0xff]
  %v1249 = vld [vmem:[%s7 + $0x400] sm:$0xff]
  %v1250 = vld [vmem:[%s7 + $0x408] sm:$0xff]
  %v1251 = vld [vmem:[%s7 + $0x410] sm:$0xff]
  %v1252 = vld [vmem:[%s7 + $0x418] sm:$0xff]
  %v1253 = vld [vmem:[%s7 + $0x420] sm:$0xff]
  %v1254 = vld [vmem:[%s7 + $0x428] sm:$0xff]
  %v1255 = vld [vmem:[%s7 + $0x430] sm:$0xff]
  %v1256 = vld [vmem:[%s7 + $0x438] sm:$0xff]
  %v1257 = vld [vmem:[%s7 + $0x440] sm:$0xff]
  %v1258 = vld [vmem:[%s7 + $0x448] sm:$0xff]
  %v1259 = vld [vmem:[%s7 + $0x450] sm:$0xff]
  %v1260 = vld [vmem:[%s7 + $0x458] sm:$0xff]
  %v1261 = vld [vmem:[%s7 + $0x460] sm:$0xff]
  %v1262 = vld [vmem:[%s7 + $0x468] sm:$0xff]
  %v1263 = vld [vmem:[%s7 + $0x470] sm:$0xff]
  %v1264 = vld [vmem:[%s7 + $0x478] sm:$0xff]
  %v1265 = vld [vmem:[%s7 + $0x480] sm:$0xff]
  %v1266 = vld [vmem:[%s7 + $0x488] sm:$0xff]
  %v1267 = vld [vmem:[%s7 + $0x490] sm:$0xff]
  %v1268 = vld [vmem:[%s7 + $0x498] sm:$0xff]
  %v1269 = vld [vmem:[%s7 + $0x4a0] sm:$0xff]
  %v1270 = vld [vmem:[%s7 + $0x4a8] sm:$0xff]
  %v1271 = vld [vmem:[%s7 + $0x4b0] sm:$0xff]
  %v1272 = vld [vmem:[%s7 + $0x4b8] sm:$0xff]
  %v1273 = vld [vmem:[%s7 + $0x4c0] sm:$0xff]
  %v1274 = vld [vmem:[%s7 + $0x4c8] sm:$0xff]
  %v1275 = vld [vmem:[%s7 + $0x4d0] sm:$0xff]
  %v1276 = vld [vmem:[%s7 + $0x4d8] sm:$0xff]
  %v1277 = vld [vmem:[%s7 + $0x4e0] sm:$0xff]
  %v1278 = vld [vmem:[%s7 + $0x4e8] sm:$0xff]
  %v1279 = vld [vmem:[%s7 + $0x4f0] sm:$0xff]
  %v1280 = vld [vmem:[%s7 + $0x4f8] sm:$0xff]
  %v1281 = vld [vmem:[%s7 + $0x500] sm:$0xff]
  %v1282 = vld [vmem:[%s7 + $0x508] sm:$0xff]
  %v1283 = vld [vmem:[%s7 + $0x510] sm:$0xff]
  %v1284 = vld [vmem:[%s7 + $0x518] sm:$0xff]
  %v1285 = vld [vmem:[%s7 + $0x520] sm:$0xff]
  %v1286 = vld [vmem:[%s7 + $0x528] sm:$0xff]
  %v1287 = vld [vmem:[%s7 + $0x530] sm:$0xff]
  %v1288 = vld [vmem:[%s7 + $0x538] sm:$0xff]
  %v1289 = vld [vmem:[%s7 + $0x540] sm:$0xff]
  %v1290 = vld [vmem:[%s7 + $0x548] sm:$0xff]
  %v1291 = vld [vmem:[%s7 + $0x550] sm:$0xff]
  %v1292 = vld [vmem:[%s7 + $0x558] sm:$0xff]
  %v1293 = vld [vmem:[%s7 + $0x560] sm:$0xff]
  %v1294 = vld [vmem:[%s7 + $0x568] sm:$0xff]
  %v1295 = vld [vmem:[%s7 + $0x570] sm:$0xff]
  %v1296 = vld [vmem:[%s7 + $0x578] sm:$0xff]
  %v1297 = vld [vmem:[%s7 + $0x580] sm:$0xff]
  %v1298 = vld [vmem:[%s7 + $0x588] sm:$0xff]
  %v1299 = vld [vmem:[%s7 + $0x590] sm:$0xff]
  %v1300 = vld [vmem:[%s7 + $0x598] sm:$0xff]
  %v1301 = vld [vmem:[%s7 + $0x5a0] sm:$0xff]
  %v1302 = vld [vmem:[%s7 + $0x5a8] sm:$0xff]
  %v1303 = vld [vmem:[%s7 + $0x5b0] sm:$0xff]
  %v1304 = vld [vmem:[%s7 + $0x5b8] sm:$0xff]
  %v1305 = vld [vmem:[%s7 + $0x5c0] sm:$0xff]
  %v1306 = vld [vmem:[%s7 + $0x5c8] sm:$0xff]
  %v1307 = vld [vmem:[%s7 + $0x5d0] sm:$0xff]
  %v1308 = vld [vmem:[%s7 + $0x5d8] sm:$0xff]
  %v1309 = vld [vmem:[%s7 + $0x5e0] sm:$0xff]
  %v1310 = vld [vmem:[%s7 + $0x5e8] sm:$0xff]
  %v1311 = vld [vmem:[%s7 + $0x5f0] sm:$0xff]
  %v1312 = vld [vmem:[%s7 + $0x5f8] sm:$0xff]
  %v1313 = vld [vmem:[%s7 + $0x600] sm:$0xff]
  %v1314 = vld [vmem:[%s7 + $0x608] sm:$0xff]
  %v1315 = vld [vmem:[%s7 + $0x610] sm:$0xff]
  %v1316 = vld [vmem:[%s7 + $0x618] sm:$0xff]
  %v1317 = vld [vmem:[%s7 + $0x620] sm:$0xff]
  %v1318 = vld [vmem:[%s7 + $0x628] sm:$0xff]
  %v1319 = vld [vmem:[%s7 + $0x630] sm:$0xff]
  %v1320 = vld [vmem:[%s7 + $0x638] sm:$0xff]
  %v1321 = vld [vmem:[%s7 + $0x640] sm:$0xff]
  %v1322 = vld [vmem:[%s7 + $0x648] sm:$0xff]
  %v1323 = vld [vmem:[%s7 + $0x650] sm:$0xff]
  %v1324 = vld [vmem:[%s7 + $0x658] sm:$0xff]
  %v1325 = vld [vmem:[%s7 + $0x660] sm:$0xff]
  %v1326 = vld [vmem:[%s7 + $0x668] sm:$0xff]
  %v1327 = vld [vmem:[%s7 + $0x670] sm:$0xff]
  %v1328 = vld [vmem:[%s7 + $0x678] sm:$0xff]
  %v1329 = vld [vmem:[%s7 + $0x680] sm:$0xff]
  %v1330 = vld [vmem:[%s7 + $0x688] sm:$0xff]
  %v1331 = vld [vmem:[%s7 + $0x690] sm:$0xff]
  %v1332 = vld [vmem:[%s7 + $0x698] sm:$0xff]
  %v1333 = vld [vmem:[%s7 + $0x6a0] sm:$0xff]
  %v1334 = vld [vmem:[%s7 + $0x6a8] sm:$0xff]
  %v1335 = vld [vmem:[%s7 + $0x6b0] sm:$0xff]
  %v1336 = vld [vmem:[%s7 + $0x6b8] sm:$0xff]
  %v1337 = vld [vmem:[%s7 + $0x6c0] sm:$0xff]
  %v1338 = vld [vmem:[%s7 + $0x6c8] sm:$0xff]
  %v1339 = vld [vmem:[%s7 + $0x6d0] sm:$0xff]
  %v1340 = vld [vmem:[%s7 + $0x6d8] sm:$0xff]
  %v1341 = vld [vmem:[%s7 + $0x6e0] sm:$0xff]
  %v1342 = vld [vmem:[%s7 + $0x6e8] sm:$0xff]
  %v1343 = vld [vmem:[%s7 + $0x6f0] sm:$0xff]
  %v1344 = vld [vmem:[%s7 + $0x6f8] sm:$0xff]
  %v1345 = vld [vmem:[%s7 + $0x700] sm:$0xff]
  %v1346 = vld [vmem:[%s7 + $0x708] sm:$0xff]
  %v1347 = vld [vmem:[%s7 + $0x710] sm:$0xff]
  %v1348 = vld [vmem:[%s7 + $0x718] sm:$0xff]
  %v1349 = vld [vmem:[%s7 + $0x720] sm:$0xff]
  %v1350 = vld [vmem:[%s7 + $0x728] sm:$0xff]
  %v1351 = vld [vmem:[%s7 + $0x730] sm:$0xff]
  %v1352 = vld [vmem:[%s7 + $0x738] sm:$0xff]
  %v1353 = vld [vmem:[%s7 + $0x740] sm:$0xff]
  %v1354 = vld [vmem:[%s7 + $0x748] sm:$0xff]
  %v1355 = vld [vmem:[%s7 + $0x750] sm:$0xff]
  %v1356 = vld [vmem:[%s7 + $0x758] sm:$0xff]
  %v1357 = vld [vmem:[%s7 + $0x760] sm:$0xff]
  %v1358 = vld [vmem:[%s7 + $0x768] sm:$0xff]
  %v1359 = vld [vmem:[%s7 + $0x770] sm:$0xff]
  %v1360 = vld [vmem:[%s7 + $0x778] sm:$0xff]
  %v1361 = vld [vmem:[%s7 + $0x780] sm:$0xff]
  %v1362 = vld [vmem:[%s7 + $0x788] sm:$0xff]
  %v1363 = vld [vmem:[%s7 + $0x790] sm:$0xff]
  %v1364 = vld [vmem:[%s7 + $0x798] sm:$0xff]
  %v1365 = vld [vmem:[%s7 + $0x7a0] sm:$0xff]
  %v1366 = vld [vmem:[%s7 + $0x7a8] sm:$0xff]
  %v1367 = vld [vmem:[%s7 + $0x7b0] sm:$0xff]
  %v1368 = vld [vmem:[%s7 + $0x7b8] sm:$0xff]
  %v1369 = vld [vmem:[%s7 + $0x7c0] sm:$0xff]
  %v1370 = vld [vmem:[%s7 + $0x7c8] sm:$0xff]
  %v1371 = vld [vmem:[%s7 + $0x7d0] sm:$0xff]
  %v1372 = vld [vmem:[%s7 + $0x7d8] sm:$0xff]
  %v1373 = vld [vmem:[%s7 + $0x7e0] sm:$0xff]
  %v1374 = vld [vmem:[%s7 + $0x7e8] sm:$0xff]
  %v1375 = vld [vmem:[%s7 + $0x7f0] sm:$0xff]
  %v1376 = vld [vmem:[%s7 + $0x7f8] sm:$0xff]
  %v1381 = vlaneseq
  %v1382 = vshrl.u32 %v1381, 7
  %v1383 = vsub.s32 0, %v1382
  %v1384 = vrot.slane %v1113, %v1383
  %v1385 = vlaneseq
  %v1386 = vshrl.u32 %v1385, 7
  %v1387 = vsub.s32 4, %v1386
  %v1388 = vrot.slane %v1113, %v1387
  %v1389 = vlaneseq
  %v1390 = vshrl.u32 %v1389, 7
  %v1391 = vsub.s32 0, %v1390
  %v1392 = vrot.slane %v1114, %v1391
  %v1393 = vlaneseq
  %v1394 = vshrl.u32 %v1393, 7
  %v1395 = vsub.s32 4, %v1394
  %v1396 = vrot.slane %v1114, %v1395
  %v1397 = vlaneseq
  %v1398 = vshrl.u32 %v1397, 7
  %v1399 = vsub.s32 0, %v1398
  %v1400 = vrot.slane %v1115, %v1399
  %v1401 = vlaneseq
  %v1402 = vshrl.u32 %v1401, 7
  %v1403 = vsub.s32 4, %v1402
  %v1404 = vrot.slane %v1115, %v1403
  %v1405 = vlaneseq
  %v1406 = vshrl.u32 %v1405, 7
  %v1407 = vsub.s32 0, %v1406
  %v1408 = vrot.slane %v1116, %v1407
  %v1409 = vlaneseq
  %v1410 = vshrl.u32 %v1409, 7
  %v1411 = vsub.s32 4, %v1410
  %v1412 = vrot.slane %v1116, %v1411
  %v1421 = vlaneseq
  %v1422 = vshrl.u32 %v1421, 7
  %v1423 = vsub.s32 0, %v1422
  %v1424 = vrot.slane %v1384, %v1423
  %v1425 = vlaneseq
  %v1426 = vshrl.u32 %v1425, 7
  %v1427 = vsub.s32 0, %v1426
  %v1428 = vrot.slane %v1388, %v1427
  %v1429 = vlaneseq
  %v1430 = vshrl.u32 %v1429, 7
  %v1431 = vsub.s32 0, %v1430
  %v1432 = vrot.slane %v1392, %v1431
  %v1433 = vlaneseq
  %v1434 = vshrl.u32 %v1433, 7
  %v1435 = vsub.s32 0, %v1434
  %v1436 = vrot.slane %v1396, %v1435
  %v1437 = vlaneseq
  %v1438 = vshrl.u32 %v1437, 7
  %v1439 = vsub.s32 0, %v1438
  %v1440 = vrot.slane %v1400, %v1439
  %v1441 = vlaneseq
  %v1442 = vshrl.u32 %v1441, 7
  %v1443 = vsub.s32 0, %v1442
  %v1444 = vrot.slane %v1404, %v1443
  %v1445 = vlaneseq
  %v1446 = vshrl.u32 %v1445, 7
  %v1447 = vsub.s32 0, %v1446
  %v1448 = vrot.slane %v1408, %v1447
  %v1449 = vlaneseq
  %v1450 = vshrl.u32 %v1449, 7
  %v1451 = vsub.s32 0, %v1450
  %v1452 = vrot.slane %v1412, %v1451
  %v1709 = vunpack.c.l.b16 %v1121
  %v1710 = vunpack.c.h.b16 %v1121
  %v1711 = vunpack.c.l.b16 %v1122
  %v1712 = vunpack.c.h.b16 %v1122
  %v1713 = vunpack.c.l.b16 %v1123
  %v1714 = vunpack.c.h.b16 %v1123
  %v1715 = vunpack.c.l.b16 %v1124
  %v1716 = vunpack.c.h.b16 %v1124
  %v1717 = vunpack.c.l.b16 %v1125
  %v1718 = vunpack.c.h.b16 %v1125
  %v1719 = vunpack.c.l.b16 %v1126
  %v1720 = vunpack.c.h.b16 %v1126
  %v1721 = vunpack.c.l.b16 %v1127
  %v1722 = vunpack.c.h.b16 %v1127
  %v1723 = vunpack.c.l.b16 %v1128
  %v1724 = vunpack.c.h.b16 %v1128
  %v1725 = vunpack.c.l.b16 %v1129
  %v1726 = vunpack.c.h.b16 %v1129
  %v1727 = vunpack.c.l.b16 %v1130
  %v1728 = vunpack.c.h.b16 %v1130
  %v1729 = vunpack.c.l.b16 %v1131
  %v1730 = vunpack.c.h.b16 %v1131
  %v1731 = vunpack.c.l.b16 %v1132
  %v1732 = vunpack.c.h.b16 %v1132
  %v1733 = vunpack.c.l.b16 %v1133
  %v1734 = vunpack.c.h.b16 %v1133
  %v1735 = vunpack.c.l.b16 %v1134
  %v1736 = vunpack.c.h.b16 %v1134
  %v1737 = vunpack.c.l.b16 %v1135
  %v1738 = vunpack.c.h.b16 %v1135
  %v1739 = vunpack.c.l.b16 %v1136
  %v1740 = vunpack.c.h.b16 %v1136
  %v1741 = vunpack.c.l.b16 %v1137
  %v1742 = vunpack.c.h.b16 %v1137
  %v1743 = vunpack.c.l.b16 %v1138
  %v1744 = vunpack.c.h.b16 %v1138
  %v1745 = vunpack.c.l.b16 %v1139
  %v1746 = vunpack.c.h.b16 %v1139
  %v1747 = vunpack.c.l.b16 %v1140
  %v1748 = vunpack.c.h.b16 %v1140
  %v1749 = vunpack.c.l.b16 %v1141
  %v1750 = vunpack.c.h.b16 %v1141
  %v1751 = vunpack.c.l.b16 %v1142
  %v1752 = vunpack.c.h.b16 %v1142
  %v1753 = vunpack.c.l.b16 %v1143
  %v1754 = vunpack.c.h.b16 %v1143
  %v1755 = vunpack.c.l.b16 %v1144
  %v1756 = vunpack.c.h.b16 %v1144
  %v1757 = vunpack.c.l.b16 %v1145
  %v1758 = vunpack.c.h.b16 %v1145
  %v1759 = vunpack.c.l.b16 %v1146
  %v1760 = vunpack.c.h.b16 %v1146
  %v1761 = vunpack.c.l.b16 %v1147
  %v1762 = vunpack.c.h.b16 %v1147
  %v1763 = vunpack.c.l.b16 %v1148
  %v1764 = vunpack.c.h.b16 %v1148
  %v1765 = vunpack.c.l.b16 %v1149
  %v1766 = vunpack.c.h.b16 %v1149
  %v1767 = vunpack.c.l.b16 %v1150
  %v1768 = vunpack.c.h.b16 %v1150
  %v1769 = vunpack.c.l.b16 %v1151
  %v1770 = vunpack.c.h.b16 %v1151
  %v1771 = vunpack.c.l.b16 %v1152
  %v1772 = vunpack.c.h.b16 %v1152
  %v1773 = vunpack.c.l.b16 %v1153
  %v1774 = vunpack.c.h.b16 %v1153
  %v1775 = vunpack.c.l.b16 %v1154
  %v1776 = vunpack.c.h.b16 %v1154
  %v1777 = vunpack.c.l.b16 %v1155
  %v1778 = vunpack.c.h.b16 %v1155
  %v1779 = vunpack.c.l.b16 %v1156
  %v1780 = vunpack.c.h.b16 %v1156
  %v1781 = vunpack.c.l.b16 %v1157
  %v1782 = vunpack.c.h.b16 %v1157
  %v1783 = vunpack.c.l.b16 %v1158
  %v1784 = vunpack.c.h.b16 %v1158
  %v1785 = vunpack.c.l.b16 %v1159
  %v1786 = vunpack.c.h.b16 %v1159
  %v1787 = vunpack.c.l.b16 %v1160
  %v1788 = vunpack.c.h.b16 %v1160
  %v1789 = vunpack.c.l.b16 %v1161
  %v1790 = vunpack.c.h.b16 %v1161
  %v1791 = vunpack.c.l.b16 %v1162
  %v1792 = vunpack.c.h.b16 %v1162
  %v1793 = vunpack.c.l.b16 %v1163
  %v1794 = vunpack.c.h.b16 %v1163
  %v1795 = vunpack.c.l.b16 %v1164
  %v1796 = vunpack.c.h.b16 %v1164
  %v1797 = vunpack.c.l.b16 %v1165
  %v1798 = vunpack.c.h.b16 %v1165
  %v1799 = vunpack.c.l.b16 %v1166
  %v1800 = vunpack.c.h.b16 %v1166
  %v1801 = vunpack.c.l.b16 %v1167
  %v1802 = vunpack.c.h.b16 %v1167
  %v1803 = vunpack.c.l.b16 %v1168
  %v1804 = vunpack.c.h.b16 %v1168
  %v1805 = vunpack.c.l.b16 %v1169
  %v1806 = vunpack.c.h.b16 %v1169
  %v1807 = vunpack.c.l.b16 %v1170
  %v1808 = vunpack.c.h.b16 %v1170
  %v1809 = vunpack.c.l.b16 %v1171
  %v1810 = vunpack.c.h.b16 %v1171
  %v1811 = vunpack.c.l.b16 %v1172
  %v1812 = vunpack.c.h.b16 %v1172
  %v1813 = vunpack.c.l.b16 %v1173
  %v1814 = vunpack.c.h.b16 %v1173
  %v1815 = vunpack.c.l.b16 %v1174
  %v1816 = vunpack.c.h.b16 %v1174
  %v1817 = vunpack.c.l.b16 %v1175
  %v1818 = vunpack.c.h.b16 %v1175
  %v1819 = vunpack.c.l.b16 %v1176
  %v1820 = vunpack.c.h.b16 %v1176
  %v1821 = vunpack.c.l.b16 %v1177
  %v1822 = vunpack.c.h.b16 %v1177
  %v1823 = vunpack.c.l.b16 %v1178
  %v1824 = vunpack.c.h.b16 %v1178
  %v1825 = vunpack.c.l.b16 %v1179
  %v1826 = vunpack.c.h.b16 %v1179
  %v1827 = vunpack.c.l.b16 %v1180
  %v1828 = vunpack.c.h.b16 %v1180
  %v1829 = vunpack.c.l.b16 %v1181
  %v1830 = vunpack.c.h.b16 %v1181
  %v1831 = vunpack.c.l.b16 %v1182
  %v1832 = vunpack.c.h.b16 %v1182
  %v1833 = vunpack.c.l.b16 %v1183
  %v1834 = vunpack.c.h.b16 %v1183
  %v1835 = vunpack.c.l.b16 %v1184
  %v1836 = vunpack.c.h.b16 %v1184
  %v1837 = vunpack.c.l.b16 %v1185
  %v1838 = vunpack.c.h.b16 %v1185
  %v1839 = vunpack.c.l.b16 %v1186
  %v1840 = vunpack.c.h.b16 %v1186
  %v1841 = vunpack.c.l.b16 %v1187
  %v1842 = vunpack.c.h.b16 %v1187
  %v1843 = vunpack.c.l.b16 %v1188
  %v1844 = vunpack.c.h.b16 %v1188
  %v1845 = vunpack.c.l.b16 %v1189
  %v1846 = vunpack.c.h.b16 %v1189
  %v1847 = vunpack.c.l.b16 %v1190
  %v1848 = vunpack.c.h.b16 %v1190
  %v1849 = vunpack.c.l.b16 %v1191
  %v1850 = vunpack.c.h.b16 %v1191
  %v1851 = vunpack.c.l.b16 %v1192
  %v1852 = vunpack.c.h.b16 %v1192
  %v1853 = vunpack.c.l.b16 %v1193
  %v1854 = vunpack.c.h.b16 %v1193
  %v1855 = vunpack.c.l.b16 %v1194
  %v1856 = vunpack.c.h.b16 %v1194
  %v1857 = vunpack.c.l.b16 %v1195
  %v1858 = vunpack.c.h.b16 %v1195
  %v1859 = vunpack.c.l.b16 %v1196
  %v1860 = vunpack.c.h.b16 %v1196
  %v1861 = vunpack.c.l.b16 %v1197
  %v1862 = vunpack.c.h.b16 %v1197
  %v1863 = vunpack.c.l.b16 %v1198
  %v1864 = vunpack.c.h.b16 %v1198
  %v1865 = vunpack.c.l.b16 %v1199
  %v1866 = vunpack.c.h.b16 %v1199
  %v1867 = vunpack.c.l.b16 %v1200
  %v1868 = vunpack.c.h.b16 %v1200
  %v1869 = vunpack.c.l.b16 %v1201
  %v1870 = vunpack.c.h.b16 %v1201
  %v1871 = vunpack.c.l.b16 %v1202
  %v1872 = vunpack.c.h.b16 %v1202
  %v1873 = vunpack.c.l.b16 %v1203
  %v1874 = vunpack.c.h.b16 %v1203
  %v1875 = vunpack.c.l.b16 %v1204
  %v1876 = vunpack.c.h.b16 %v1204
  %v1877 = vunpack.c.l.b16 %v1205
  %v1878 = vunpack.c.h.b16 %v1205
  %v1879 = vunpack.c.l.b16 %v1206
  %v1880 = vunpack.c.h.b16 %v1206
  %v1881 = vunpack.c.l.b16 %v1207
  %v1882 = vunpack.c.h.b16 %v1207
  %v1883 = vunpack.c.l.b16 %v1208
  %v1884 = vunpack.c.h.b16 %v1208
  %v1885 = vunpack.c.l.b16 %v1209
  %v1886 = vunpack.c.h.b16 %v1209
  %v1887 = vunpack.c.l.b16 %v1210
  %v1888 = vunpack.c.h.b16 %v1210
  %v1889 = vunpack.c.l.b16 %v1211
  %v1890 = vunpack.c.h.b16 %v1211
  %v1891 = vunpack.c.l.b16 %v1212
  %v1892 = vunpack.c.h.b16 %v1212
  %v1893 = vunpack.c.l.b16 %v1213
  %v1894 = vunpack.c.h.b16 %v1213
  %v1895 = vunpack.c.l.b16 %v1214
  %v1896 = vunpack.c.h.b16 %v1214
  %v1897 = vunpack.c.l.b16 %v1215
  %v1898 = vunpack.c.h.b16 %v1215
  %v1899 = vunpack.c.l.b16 %v1216
  %v1900 = vunpack.c.h.b16 %v1216
  %v1901 = vunpack.c.l.b16 %v1217
  %v1902 = vunpack.c.h.b16 %v1217
  %v1903 = vunpack.c.l.b16 %v1218
  %v1904 = vunpack.c.h.b16 %v1218
  %v1905 = vunpack.c.l.b16 %v1219
  %v1906 = vunpack.c.h.b16 %v1219
  %v1907 = vunpack.c.l.b16 %v1220
  %v1908 = vunpack.c.h.b16 %v1220
  %v1909 = vunpack.c.l.b16 %v1221
  %v1910 = vunpack.c.h.b16 %v1221
  %v1911 = vunpack.c.l.b16 %v1222
  %v1912 = vunpack.c.h.b16 %v1222
  %v1913 = vunpack.c.l.b16 %v1223
  %v1914 = vunpack.c.h.b16 %v1223
  %v1915 = vunpack.c.l.b16 %v1224
  %v1916 = vunpack.c.h.b16 %v1224
  %v1917 = vunpack.c.l.b16 %v1225
  %v1918 = vunpack.c.h.b16 %v1225
  %v1919 = vunpack.c.l.b16 %v1226
  %v1920 = vunpack.c.h.b16 %v1226
  %v1921 = vunpack.c.l.b16 %v1227
  %v1922 = vunpack.c.h.b16 %v1227
  %v1923 = vunpack.c.l.b16 %v1228
  %v1924 = vunpack.c.h.b16 %v1228
  %v1925 = vunpack.c.l.b16 %v1229
  %v1926 = vunpack.c.h.b16 %v1229
  %v1927 = vunpack.c.l.b16 %v1230
  %v1928 = vunpack.c.h.b16 %v1230
  %v1929 = vunpack.c.l.b16 %v1231
  %v1930 = vunpack.c.h.b16 %v1231
  %v1931 = vunpack.c.l.b16 %v1232
  %v1932 = vunpack.c.h.b16 %v1232
  %v1933 = vunpack.c.l.b16 %v1233
  %v1934 = vunpack.c.h.b16 %v1233
  %v1935 = vunpack.c.l.b16 %v1234
  %v1936 = vunpack.c.h.b16 %v1234
  %v1937 = vunpack.c.l.b16 %v1235
  %v1938 = vunpack.c.h.b16 %v1235
  %v1939 = vunpack.c.l.b16 %v1236
  %v1940 = vunpack.c.h.b16 %v1236
  %v1941 = vunpack.c.l.b16 %v1237
  %v1942 = vunpack.c.h.b16 %v1237
  %v1943 = vunpack.c.l.b16 %v1238
  %v1944 = vunpack.c.h.b16 %v1238
  %v1945 = vunpack.c.l.b16 %v1239
  %v1946 = vunpack.c.h.b16 %v1239
  %v1947 = vunpack.c.l.b16 %v1240
  %v1948 = vunpack.c.h.b16 %v1240
  %v1949 = vunpack.c.l.b16 %v1241
  %v1950 = vunpack.c.h.b16 %v1241
  %v1951 = vunpack.c.l.b16 %v1242
  %v1952 = vunpack.c.h.b16 %v1242
  %v1953 = vunpack.c.l.b16 %v1243
  %v1954 = vunpack.c.h.b16 %v1243
  %v1955 = vunpack.c.l.b16 %v1244
  %v1956 = vunpack.c.h.b16 %v1244
  %v1957 = vunpack.c.l.b16 %v1245
  %v1958 = vunpack.c.h.b16 %v1245
  %v1959 = vunpack.c.l.b16 %v1246
  %v1960 = vunpack.c.h.b16 %v1246
  %v1961 = vunpack.c.l.b16 %v1247
  %v1962 = vunpack.c.h.b16 %v1247
  %v1963 = vunpack.c.l.b16 %v1248
  %v1964 = vunpack.c.h.b16 %v1248
  %v1965 = vunpack.c.l.b16 %v1249
  %v1966 = vunpack.c.h.b16 %v1249
  %v1967 = vunpack.c.l.b16 %v1250
  %v1968 = vunpack.c.h.b16 %v1250
  %v1969 = vunpack.c.l.b16 %v1251
  %v1970 = vunpack.c.h.b16 %v1251
  %v1971 = vunpack.c.l.b16 %v1252
  %v1972 = vunpack.c.h.b16 %v1252
  %v1973 = vunpack.c.l.b16 %v1253
  %v1974 = vunpack.c.h.b16 %v1253
  %v1975 = vunpack.c.l.b16 %v1254
  %v1976 = vunpack.c.h.b16 %v1254
  %v1977 = vunpack.c.l.b16 %v1255
  %v1978 = vunpack.c.h.b16 %v1255
  %v1979 = vunpack.c.l.b16 %v1256
  %v1980 = vunpack.c.h.b16 %v1256
  %v1981 = vunpack.c.l.b16 %v1257
  %v1982 = vunpack.c.h.b16 %v1257
  %v1983 = vunpack.c.l.b16 %v1258
  %v1984 = vunpack.c.h.b16 %v1258
  %v1985 = vunpack.c.l.b16 %v1259
  %v1986 = vunpack.c.h.b16 %v1259
  %v1987 = vunpack.c.l.b16 %v1260
  %v1988 = vunpack.c.h.b16 %v1260
  %v1989 = vunpack.c.l.b16 %v1261
  %v1990 = vunpack.c.h.b16 %v1261
  %v1991 = vunpack.c.l.b16 %v1262
  %v1992 = vunpack.c.h.b16 %v1262
  %v1993 = vunpack.c.l.b16 %v1263
  %v1994 = vunpack.c.h.b16 %v1263
  %v1995 = vunpack.c.l.b16 %v1264
  %v1996 = vunpack.c.h.b16 %v1264
  %v1997 = vunpack.c.l.b16 %v1265
  %v1998 = vunpack.c.h.b16 %v1265
  %v1999 = vunpack.c.l.b16 %v1266
  %v2000 = vunpack.c.h.b16 %v1266
  %v2001 = vunpack.c.l.b16 %v1267
  %v2002 = vunpack.c.h.b16 %v1267
  %v2003 = vunpack.c.l.b16 %v1268
  %v2004 = vunpack.c.h.b16 %v1268
  %v2005 = vunpack.c.l.b16 %v1269
  %v2006 = vunpack.c.h.b16 %v1269
  %v2007 = vunpack.c.l.b16 %v1270
  %v2008 = vunpack.c.h.b16 %v1270
  %v2009 = vunpack.c.l.b16 %v1271
  %v2010 = vunpack.c.h.b16 %v1271
  %v2011 = vunpack.c.l.b16 %v1272
  %v2012 = vunpack.c.h.b16 %v1272
  %v2013 = vunpack.c.l.b16 %v1273
  %v2014 = vunpack.c.h.b16 %v1273
  %v2015 = vunpack.c.l.b16 %v1274
  %v2016 = vunpack.c.h.b16 %v1274
  %v2017 = vunpack.c.l.b16 %v1275
  %v2018 = vunpack.c.h.b16 %v1275
  %v2019 = vunpack.c.l.b16 %v1276
  %v2020 = vunpack.c.h.b16 %v1276
  %v2021 = vunpack.c.l.b16 %v1277
  %v2022 = vunpack.c.h.b16 %v1277
  %v2023 = vunpack.c.l.b16 %v1278
  %v2024 = vunpack.c.h.b16 %v1278
  %v2025 = vunpack.c.l.b16 %v1279
  %v2026 = vunpack.c.h.b16 %v1279
  %v2027 = vunpack.c.l.b16 %v1280
  %v2028 = vunpack.c.h.b16 %v1280
  %v2029 = vunpack.c.l.b16 %v1281
  %v2030 = vunpack.c.h.b16 %v1281
  %v2031 = vunpack.c.l.b16 %v1282
  %v2032 = vunpack.c.h.b16 %v1282
  %v2033 = vunpack.c.l.b16 %v1283
  %v2034 = vunpack.c.h.b16 %v1283
  %v2035 = vunpack.c.l.b16 %v1284
  %v2036 = vunpack.c.h.b16 %v1284
  %v2037 = vunpack.c.l.b16 %v1285
  %v2038 = vunpack.c.h.b16 %v1285
  %v2039 = vunpack.c.l.b16 %v1286
  %v2040 = vunpack.c.h.b16 %v1286
  %v2041 = vunpack.c.l.b16 %v1287
  %v2042 = vunpack.c.h.b16 %v1287
  %v2043 = vunpack.c.l.b16 %v1288
  %v2044 = vunpack.c.h.b16 %v1288
  %v2045 = vunpack.c.l.b16 %v1289
  %v2046 = vunpack.c.h.b16 %v1289
  %v2047 = vunpack.c.l.b16 %v1290
  %v2048 = vunpack.c.h.b16 %v1290
  %v2049 = vunpack.c.l.b16 %v1291
  %v2050 = vunpack.c.h.b16 %v1291
  %v2051 = vunpack.c.l.b16 %v1292
  %v2052 = vunpack.c.h.b16 %v1292
  %v2053 = vunpack.c.l.b16 %v1293
  %v2054 = vunpack.c.h.b16 %v1293
  %v2055 = vunpack.c.l.b16 %v1294
  %v2056 = vunpack.c.h.b16 %v1294
  %v2057 = vunpack.c.l.b16 %v1295
  %v2058 = vunpack.c.h.b16 %v1295
  %v2059 = vunpack.c.l.b16 %v1296
  %v2060 = vunpack.c.h.b16 %v1296
  %v2061 = vunpack.c.l.b16 %v1297
  %v2062 = vunpack.c.h.b16 %v1297
  %v2063 = vunpack.c.l.b16 %v1298
  %v2064 = vunpack.c.h.b16 %v1298
  %v2065 = vunpack.c.l.b16 %v1299
  %v2066 = vunpack.c.h.b16 %v1299
  %v2067 = vunpack.c.l.b16 %v1300
  %v2068 = vunpack.c.h.b16 %v1300
  %v2069 = vunpack.c.l.b16 %v1301
  %v2070 = vunpack.c.h.b16 %v1301
  %v2071 = vunpack.c.l.b16 %v1302
  %v2072 = vunpack.c.h.b16 %v1302
  %v2073 = vunpack.c.l.b16 %v1303
  %v2074 = vunpack.c.h.b16 %v1303
  %v2075 = vunpack.c.l.b16 %v1304
  %v2076 = vunpack.c.h.b16 %v1304
  %v2077 = vunpack.c.l.b16 %v1305
  %v2078 = vunpack.c.h.b16 %v1305
  %v2079 = vunpack.c.l.b16 %v1306
  %v2080 = vunpack.c.h.b16 %v1306
  %v2081 = vunpack.c.l.b16 %v1307
  %v2082 = vunpack.c.h.b16 %v1307
  %v2083 = vunpack.c.l.b16 %v1308
  %v2084 = vunpack.c.h.b16 %v1308
  %v2085 = vunpack.c.l.b16 %v1309
  %v2086 = vunpack.c.h.b16 %v1309
  %v2087 = vunpack.c.l.b16 %v1310
  %v2088 = vunpack.c.h.b16 %v1310
  %v2089 = vunpack.c.l.b16 %v1311
  %v2090 = vunpack.c.h.b16 %v1311
  %v2091 = vunpack.c.l.b16 %v1312
  %v2092 = vunpack.c.h.b16 %v1312
  %v2093 = vunpack.c.l.b16 %v1313
  %v2094 = vunpack.c.h.b16 %v1313
  %v2095 = vunpack.c.l.b16 %v1314
  %v2096 = vunpack.c.h.b16 %v1314
  %v2097 = vunpack.c.l.b16 %v1315
  %v2098 = vunpack.c.h.b16 %v1315
  %v2099 = vunpack.c.l.b16 %v1316
  %v2100 = vunpack.c.h.b16 %v1316
  %v2101 = vunpack.c.l.b16 %v1317
  %v2102 = vunpack.c.h.b16 %v1317
  %v2103 = vunpack.c.l.b16 %v1318
  %v2104 = vunpack.c.h.b16 %v1318
  %v2105 = vunpack.c.l.b16 %v1319
  %v2106 = vunpack.c.h.b16 %v1319
  %v2107 = vunpack.c.l.b16 %v1320
  %v2108 = vunpack.c.h.b16 %v1320
  %v2109 = vunpack.c.l.b16 %v1321
  %v2110 = vunpack.c.h.b16 %v1321
  %v2111 = vunpack.c.l.b16 %v1322
  %v2112 = vunpack.c.h.b16 %v1322
  %v2113 = vunpack.c.l.b16 %v1323
  %v2114 = vunpack.c.h.b16 %v1323
  %v2115 = vunpack.c.l.b16 %v1324
  %v2116 = vunpack.c.h.b16 %v1324
  %v2117 = vunpack.c.l.b16 %v1325
  %v2118 = vunpack.c.h.b16 %v1325
  %v2119 = vunpack.c.l.b16 %v1326
  %v2120 = vunpack.c.h.b16 %v1326
  %v2121 = vunpack.c.l.b16 %v1327
  %v2122 = vunpack.c.h.b16 %v1327
  %v2123 = vunpack.c.l.b16 %v1328
  %v2124 = vunpack.c.h.b16 %v1328
  %v2125 = vunpack.c.l.b16 %v1329
  %v2126 = vunpack.c.h.b16 %v1329
  %v2127 = vunpack.c.l.b16 %v1330
  %v2128 = vunpack.c.h.b16 %v1330
  %v2129 = vunpack.c.l.b16 %v1331
  %v2130 = vunpack.c.h.b16 %v1331
  %v2131 = vunpack.c.l.b16 %v1332
  %v2132 = vunpack.c.h.b16 %v1332
  %v2133 = vunpack.c.l.b16 %v1333
  %v2134 = vunpack.c.h.b16 %v1333
  %v2135 = vunpack.c.l.b16 %v1334
  %v2136 = vunpack.c.h.b16 %v1334
  %v2137 = vunpack.c.l.b16 %v1335
  %v2138 = vunpack.c.h.b16 %v1335
  %v2139 = vunpack.c.l.b16 %v1336
  %v2140 = vunpack.c.h.b16 %v1336
  %v2141 = vunpack.c.l.b16 %v1337
  %v2142 = vunpack.c.h.b16 %v1337
  %v2143 = vunpack.c.l.b16 %v1338
  %v2144 = vunpack.c.h.b16 %v1338
  %v2145 = vunpack.c.l.b16 %v1339
  %v2146 = vunpack.c.h.b16 %v1339
  %v2147 = vunpack.c.l.b16 %v1340
  %v2148 = vunpack.c.h.b16 %v1340
  %v2149 = vunpack.c.l.b16 %v1341
  %v2150 = vunpack.c.h.b16 %v1341
  %v2151 = vunpack.c.l.b16 %v1342
  %v2152 = vunpack.c.h.b16 %v1342
  %v2153 = vunpack.c.l.b16 %v1343
  %v2154 = vunpack.c.h.b16 %v1343
  %v2155 = vunpack.c.l.b16 %v1344
  %v2156 = vunpack.c.h.b16 %v1344
  %v2157 = vunpack.c.l.b16 %v1345
  %v2158 = vunpack.c.h.b16 %v1345
  %v2159 = vunpack.c.l.b16 %v1346
  %v2160 = vunpack.c.h.b16 %v1346
  %v2161 = vunpack.c.l.b16 %v1347
  %v2162 = vunpack.c.h.b16 %v1347
  %v2163 = vunpack.c.l.b16 %v1348
  %v2164 = vunpack.c.h.b16 %v1348
  %v2165 = vunpack.c.l.b16 %v1349
  %v2166 = vunpack.c.h.b16 %v1349
  %v2167 = vunpack.c.l.b16 %v1350
  %v2168 = vunpack.c.h.b16 %v1350
  %v2169 = vunpack.c.l.b16 %v1351
  %v2170 = vunpack.c.h.b16 %v1351
  %v2171 = vunpack.c.l.b16 %v1352
  %v2172 = vunpack.c.h.b16 %v1352
  %v2173 = vunpack.c.l.b16 %v1353
  %v2174 = vunpack.c.h.b16 %v1353
  %v2175 = vunpack.c.l.b16 %v1354
  %v2176 = vunpack.c.h.b16 %v1354
  %v2177 = vunpack.c.l.b16 %v1355
  %v2178 = vunpack.c.h.b16 %v1355
  %v2179 = vunpack.c.l.b16 %v1356
  %v2180 = vunpack.c.h.b16 %v1356
  %v2181 = vunpack.c.l.b16 %v1357
  %v2182 = vunpack.c.h.b16 %v1357
  %v2183 = vunpack.c.l.b16 %v1358
  %v2184 = vunpack.c.h.b16 %v1358
  %v2185 = vunpack.c.l.b16 %v1359
  %v2186 = vunpack.c.h.b16 %v1359
  %v2187 = vunpack.c.l.b16 %v1360
  %v2188 = vunpack.c.h.b16 %v1360
  %v2189 = vunpack.c.l.b16 %v1361
  %v2190 = vunpack.c.h.b16 %v1361
  %v2191 = vunpack.c.l.b16 %v1362
  %v2192 = vunpack.c.h.b16 %v1362
  %v2193 = vunpack.c.l.b16 %v1363
  %v2194 = vunpack.c.h.b16 %v1363
  %v2195 = vunpack.c.l.b16 %v1364
  %v2196 = vunpack.c.h.b16 %v1364
  %v2197 = vunpack.c.l.b16 %v1365
  %v2198 = vunpack.c.h.b16 %v1365
  %v2199 = vunpack.c.l.b16 %v1366
  %v2200 = vunpack.c.h.b16 %v1366
  %v2201 = vunpack.c.l.b16 %v1367
  %v2202 = vunpack.c.h.b16 %v1367
  %v2203 = vunpack.c.l.b16 %v1368
  %v2204 = vunpack.c.h.b16 %v1368
  %v2205 = vunpack.c.l.b16 %v1369
  %v2206 = vunpack.c.h.b16 %v1369
  %v2207 = vunpack.c.l.b16 %v1370
  %v2208 = vunpack.c.h.b16 %v1370
  %v2209 = vunpack.c.l.b16 %v1371
  %v2210 = vunpack.c.h.b16 %v1371
  %v2211 = vunpack.c.l.b16 %v1372
  %v2212 = vunpack.c.h.b16 %v1372
  %v2213 = vunpack.c.l.b16 %v1373
  %v2214 = vunpack.c.h.b16 %v1373
  %v2215 = vunpack.c.l.b16 %v1374
  %v2216 = vunpack.c.h.b16 %v1374
  %v2217 = vunpack.c.l.b16 %v1375
  %v2218 = vunpack.c.h.b16 %v1375
  %v2219 = vunpack.c.l.b16 %v1376
  %v2220 = vunpack.c.h.b16 %v1376
  %v2221 = vpack.c.b16 %v1717, %v1709
  %v2222 = vpack.c.b16 %v1718, %v1710
  %v2223 = vpack.c.b16 %v1719, %v1711
  %v2224 = vpack.c.b16 %v1720, %v1712
  %v2225 = vpack.c.b16 %v1721, %v1713
  %v2226 = vpack.c.b16 %v1722, %v1714
  %v2227 = vpack.c.b16 %v1723, %v1715
  %v2228 = vpack.c.b16 %v1724, %v1716
  %v2229 = vpack.c.b16 %v1733, %v1725
  %v2230 = vpack.c.b16 %v1734, %v1726
  %v2231 = vpack.c.b16 %v1735, %v1727
  %v2232 = vpack.c.b16 %v1736, %v1728
  %v2233 = vpack.c.b16 %v1737, %v1729
  %v2234 = vpack.c.b16 %v1738, %v1730
  %v2235 = vpack.c.b16 %v1739, %v1731
  %v2236 = vpack.c.b16 %v1740, %v1732
  %v2237 = vpack.c.b16 %v1749, %v1741
  %v2238 = vpack.c.b16 %v1750, %v1742
  %v2239 = vpack.c.b16 %v1751, %v1743
  %v2240 = vpack.c.b16 %v1752, %v1744
  %v2241 = vpack.c.b16 %v1753, %v1745
  %v2242 = vpack.c.b16 %v1754, %v1746
  %v2243 = vpack.c.b16 %v1755, %v1747
  %v2244 = vpack.c.b16 %v1756, %v1748
  %v2245 = vpack.c.b16 %v1765, %v1757
  %v2246 = vpack.c.b16 %v1766, %v1758
  %v2247 = vpack.c.b16 %v1767, %v1759
  %v2248 = vpack.c.b16 %v1768, %v1760
  %v2249 = vpack.c.b16 %v1769, %v1761
  %v2250 = vpack.c.b16 %v1770, %v1762
  %v2251 = vpack.c.b16 %v1771, %v1763
  %v2252 = vpack.c.b16 %v1772, %v1764
  %v2253 = vpack.c.b16 %v1781, %v1773
  %v2254 = vpack.c.b16 %v1782, %v1774
  %v2255 = vpack.c.b16 %v1783, %v1775
  %v2256 = vpack.c.b16 %v1784, %v1776
  %v2257 = vpack.c.b16 %v1785, %v1777
  %v2258 = vpack.c.b16 %v1786, %v1778
  %v2259 = vpack.c.b16 %v1787, %v1779
  %v2260 = vpack.c.b16 %v1788, %v1780
  %v2261 = vpack.c.b16 %v1797, %v1789
  %v2262 = vpack.c.b16 %v1798, %v1790
  %v2263 = vpack.c.b16 %v1799, %v1791
  %v2264 = vpack.c.b16 %v1800, %v1792
  %v2265 = vpack.c.b16 %v1801, %v1793
  %v2266 = vpack.c.b16 %v1802, %v1794
  %v2267 = vpack.c.b16 %v1803, %v1795
  %v2268 = vpack.c.b16 %v1804, %v1796
  %v2269 = vpack.c.b16 %v1813, %v1805
  %v2270 = vpack.c.b16 %v1814, %v1806
  %v2271 = vpack.c.b16 %v1815, %v1807
  %v2272 = vpack.c.b16 %v1816, %v1808
  %v2273 = vpack.c.b16 %v1817, %v1809
  %v2274 = vpack.c.b16 %v1818, %v1810
  %v2275 = vpack.c.b16 %v1819, %v1811
  %v2276 = vpack.c.b16 %v1820, %v1812
  %v2277 = vpack.c.b16 %v1829, %v1821
  %v2278 = vpack.c.b16 %v1830, %v1822
  %v2279 = vpack.c.b16 %v1831, %v1823
  %v2280 = vpack.c.b16 %v1832, %v1824
  %v2281 = vpack.c.b16 %v1833, %v1825
  %v2282 = vpack.c.b16 %v1834, %v1826
  %v2283 = vpack.c.b16 %v1835, %v1827
  %v2284 = vpack.c.b16 %v1836, %v1828
  %v2285 = vpack.c.b16 %v1845, %v1837
  %v2286 = vpack.c.b16 %v1846, %v1838
  %v2287 = vpack.c.b16 %v1847, %v1839
  %v2288 = vpack.c.b16 %v1848, %v1840
  %v2289 = vpack.c.b16 %v1849, %v1841
  %v2290 = vpack.c.b16 %v1850, %v1842
  %v2291 = vpack.c.b16 %v1851, %v1843
  %v2292 = vpack.c.b16 %v1852, %v1844
  %v2293 = vpack.c.b16 %v1861, %v1853
  %v2294 = vpack.c.b16 %v1862, %v1854
  %v2295 = vpack.c.b16 %v1863, %v1855
  %v2296 = vpack.c.b16 %v1864, %v1856
  %v2297 = vpack.c.b16 %v1865, %v1857
  %v2298 = vpack.c.b16 %v1866, %v1858
  %v2299 = vpack.c.b16 %v1867, %v1859
  %v2300 = vpack.c.b16 %v1868, %v1860
  %v2301 = vpack.c.b16 %v1877, %v1869
  %v2302 = vpack.c.b16 %v1878, %v1870
  %v2303 = vpack.c.b16 %v1879, %v1871
  %v2304 = vpack.c.b16 %v1880, %v1872
  %v2305 = vpack.c.b16 %v1881, %v1873
  %v2306 = vpack.c.b16 %v1882, %v1874
  %v2307 = vpack.c.b16 %v1883, %v1875
  %v2308 = vpack.c.b16 %v1884, %v1876
  %v2309 = vpack.c.b16 %v1893, %v1885
  %v2310 = vpack.c.b16 %v1894, %v1886
  %v2311 = vpack.c.b16 %v1895, %v1887
  %v2312 = vpack.c.b16 %v1896, %v1888
  %v2313 = vpack.c.b16 %v1897, %v1889
  %v2314 = vpack.c.b16 %v1898, %v1890
  %v2315 = vpack.c.b16 %v1899, %v1891
  %v2316 = vpack.c.b16 %v1900, %v1892
  %v2317 = vpack.c.b16 %v1909, %v1901
  %v2318 = vpack.c.b16 %v1910, %v1902
  %v2319 = vpack.c.b16 %v1911, %v1903
  %v2320 = vpack.c.b16 %v1912, %v1904
  %v2321 = vpack.c.b16 %v1913, %v1905
  %v2322 = vpack.c.b16 %v1914, %v1906
  %v2323 = vpack.c.b16 %v1915, %v1907
  %v2324 = vpack.c.b16 %v1916, %v1908
  %v2325 = vpack.c.b16 %v1925, %v1917
  %v2326 = vpack.c.b16 %v1926, %v1918
  %v2327 = vpack.c.b16 %v1927, %v1919
  %v2328 = vpack.c.b16 %v1928, %v1920
  %v2329 = vpack.c.b16 %v1929, %v1921
  %v2330 = vpack.c.b16 %v1930, %v1922
  %v2331 = vpack.c.b16 %v1931, %v1923
  %v2332 = vpack.c.b16 %v1932, %v1924
  %v2333 = vpack.c.b16 %v1941, %v1933
  %v2334 = vpack.c.b16 %v1942, %v1934
  %v2335 = vpack.c.b16 %v1943, %v1935
  %v2336 = vpack.c.b16 %v1944, %v1936
  %v2337 = vpack.c.b16 %v1945, %v1937
  %v2338 = vpack.c.b16 %v1946, %v1938
  %v2339 = vpack.c.b16 %v1947, %v1939
  %v2340 = vpack.c.b16 %v1948, %v1940
  %v2341 = vpack.c.b16 %v1957, %v1949
  %v2342 = vpack.c.b16 %v1958, %v1950
  %v2343 = vpack.c.b16 %v1959, %v1951
  %v2344 = vpack.c.b16 %v1960, %v1952
  %v2345 = vpack.c.b16 %v1961, %v1953
  %v2346 = vpack.c.b16 %v1962, %v1954
  %v2347 = vpack.c.b16 %v1963, %v1955
  %v2348 = vpack.c.b16 %v1964, %v1956
  %v2349 = vpack.c.b16 %v1973, %v1965
  %v2350 = vpack.c.b16 %v1974, %v1966
  %v2351 = vpack.c.b16 %v1975, %v1967
  %v2352 = vpack.c.b16 %v1976, %v1968
  %v2353 = vpack.c.b16 %v1977, %v1969
  %v2354 = vpack.c.b16 %v1978, %v1970
  %v2355 = vpack.c.b16 %v1979, %v1971
  %v2356 = vpack.c.b16 %v1980, %v1972
  %v2357 = vpack.c.b16 %v1989, %v1981
  %v2358 = vpack.c.b16 %v1990, %v1982
  %v2359 = vpack.c.b16 %v1991, %v1983
  %v2360 = vpack.c.b16 %v1992, %v1984
  %v2361 = vpack.c.b16 %v1993, %v1985
  %v2362 = vpack.c.b16 %v1994, %v1986
  %v2363 = vpack.c.b16 %v1995, %v1987
  %v2364 = vpack.c.b16 %v1996, %v1988
  %v2365 = vpack.c.b16 %v2005, %v1997
  %v2366 = vpack.c.b16 %v2006, %v1998
  %v2367 = vpack.c.b16 %v2007, %v1999
  %v2368 = vpack.c.b16 %v2008, %v2000
  %v2369 = vpack.c.b16 %v2009, %v2001
  %v2370 = vpack.c.b16 %v2010, %v2002
  %v2371 = vpack.c.b16 %v2011, %v2003
  %v2372 = vpack.c.b16 %v2012, %v2004
  %v2373 = vpack.c.b16 %v2021, %v2013
  %v2374 = vpack.c.b16 %v2022, %v2014
  %v2375 = vpack.c.b16 %v2023, %v2015
  %v2376 = vpack.c.b16 %v2024, %v2016
  %v2377 = vpack.c.b16 %v2025, %v2017
  %v2378 = vpack.c.b16 %v2026, %v2018
  %v2379 = vpack.c.b16 %v2027, %v2019
  %v2380 = vpack.c.b16 %v2028, %v2020
  %v2381 = vpack.c.b16 %v2037, %v2029
  %v2382 = vpack.c.b16 %v2038, %v2030
  %v2383 = vpack.c.b16 %v2039, %v2031
  %v2384 = vpack.c.b16 %v2040, %v2032
  %v2385 = vpack.c.b16 %v2041, %v2033
  %v2386 = vpack.c.b16 %v2042, %v2034
  %v2387 = vpack.c.b16 %v2043, %v2035
  %v2388 = vpack.c.b16 %v2044, %v2036
  %v2389 = vpack.c.b16 %v2053, %v2045
  %v2390 = vpack.c.b16 %v2054, %v2046
  %v2391 = vpack.c.b16 %v2055, %v2047
  %v2392 = vpack.c.b16 %v2056, %v2048
  %v2393 = vpack.c.b16 %v2057, %v2049
  %v2394 = vpack.c.b16 %v2058, %v2050
  %v2395 = vpack.c.b16 %v2059, %v2051
  %v2396 = vpack.c.b16 %v2060, %v2052
  %v2397 = vpack.c.b16 %v2069, %v2061
  %v2398 = vpack.c.b16 %v2070, %v2062
  %v2399 = vpack.c.b16 %v2071, %v2063
  %v2400 = vpack.c.b16 %v2072, %v2064
  %v2401 = vpack.c.b16 %v2073, %v2065
  %v2402 = vpack.c.b16 %v2074, %v2066
  %v2403 = vpack.c.b16 %v2075, %v2067
  %v2404 = vpack.c.b16 %v2076, %v2068
  %v2405 = vpack.c.b16 %v2085, %v2077
  %v2406 = vpack.c.b16 %v2086, %v2078
  %v2407 = vpack.c.b16 %v2087, %v2079
  %v2408 = vpack.c.b16 %v2088, %v2080
  %v2409 = vpack.c.b16 %v2089, %v2081
  %v2410 = vpack.c.b16 %v2090, %v2082
  %v2411 = vpack.c.b16 %v2091, %v2083
  %v2412 = vpack.c.b16 %v2092, %v2084
  %v2413 = vpack.c.b16 %v2101, %v2093
  %v2414 = vpack.c.b16 %v2102, %v2094
  %v2415 = vpack.c.b16 %v2103, %v2095
  %v2416 = vpack.c.b16 %v2104, %v2096
  %v2417 = vpack.c.b16 %v2105, %v2097
  %v2418 = vpack.c.b16 %v2106, %v2098
  %v2419 = vpack.c.b16 %v2107, %v2099
  %v2420 = vpack.c.b16 %v2108, %v2100
  %v2421 = vpack.c.b16 %v2117, %v2109
  %v2422 = vpack.c.b16 %v2118, %v2110
  %v2423 = vpack.c.b16 %v2119, %v2111
  %v2424 = vpack.c.b16 %v2120, %v2112
  %v2425 = vpack.c.b16 %v2121, %v2113
  %v2426 = vpack.c.b16 %v2122, %v2114
  %v2427 = vpack.c.b16 %v2123, %v2115
  %v2428 = vpack.c.b16 %v2124, %v2116
  %v2429 = vpack.c.b16 %v2133, %v2125
  %v2430 = vpack.c.b16 %v2134, %v2126
  %v2431 = vpack.c.b16 %v2135, %v2127
  %v2432 = vpack.c.b16 %v2136, %v2128
  %v2433 = vpack.c.b16 %v2137, %v2129
  %v2434 = vpack.c.b16 %v2138, %v2130
  %v2435 = vpack.c.b16 %v2139, %v2131
  %v2436 = vpack.c.b16 %v2140, %v2132
  %v2437 = vpack.c.b16 %v2149, %v2141
  %v2438 = vpack.c.b16 %v2150, %v2142
  %v2439 = vpack.c.b16 %v2151, %v2143
  %v2440 = vpack.c.b16 %v2152, %v2144
  %v2441 = vpack.c.b16 %v2153, %v2145
  %v2442 = vpack.c.b16 %v2154, %v2146
  %v2443 = vpack.c.b16 %v2155, %v2147
  %v2444 = vpack.c.b16 %v2156, %v2148
  %v2445 = vpack.c.b16 %v2165, %v2157
  %v2446 = vpack.c.b16 %v2166, %v2158
  %v2447 = vpack.c.b16 %v2167, %v2159
  %v2448 = vpack.c.b16 %v2168, %v2160
  %v2449 = vpack.c.b16 %v2169, %v2161
  %v2450 = vpack.c.b16 %v2170, %v2162
  %v2451 = vpack.c.b16 %v2171, %v2163
  %v2452 = vpack.c.b16 %v2172, %v2164
  %v2453 = vpack.c.b16 %v2181, %v2173
  %v2454 = vpack.c.b16 %v2182, %v2174
  %v2455 = vpack.c.b16 %v2183, %v2175
  %v2456 = vpack.c.b16 %v2184, %v2176
  %v2457 = vpack.c.b16 %v2185, %v2177
  %v2458 = vpack.c.b16 %v2186, %v2178
  %v2459 = vpack.c.b16 %v2187, %v2179
  %v2460 = vpack.c.b16 %v2188, %v2180
  %v2461 = vpack.c.b16 %v2197, %v2189
  %v2462 = vpack.c.b16 %v2198, %v2190
  %v2463 = vpack.c.b16 %v2199, %v2191
  %v2464 = vpack.c.b16 %v2200, %v2192
  %v2465 = vpack.c.b16 %v2201, %v2193
  %v2466 = vpack.c.b16 %v2202, %v2194
  %v2467 = vpack.c.b16 %v2203, %v2195
  %v2468 = vpack.c.b16 %v2204, %v2196
  %v2469 = vpack.c.b16 %v2213, %v2205
  %v2470 = vpack.c.b16 %v2214, %v2206
  %v2471 = vpack.c.b16 %v2215, %v2207
  %v2472 = vpack.c.b16 %v2216, %v2208
  %v2473 = vpack.c.b16 %v2217, %v2209
  %v2474 = vpack.c.b16 %v2218, %v2210
  %v2475 = vpack.c.b16 %v2219, %v2211
  %v2476 = vpack.c.b16 %v2220, %v2212
  %2733 = vmatprep.subr.bf16.mxu0 %v2278
  %2734 = vmatpush1.bf16.msra.mxu0 %v2277
  %2735 = vmatprep.subr.bf16.mxu0 %v2270
  %2736 = vmatpush1.bf16.msra.mxu0 %v2269
  %2737 = vmatprep.subr.bf16.mxu0 %v2262
  %2738 = vmatpush1.bf16.msra.mxu0 %v2261
  %2739 = vmatprep.subr.bf16.mxu0 %v2254
  %2740 = vmatpush1.bf16.msra.mxu0 %v2253
  %2741 = vmatprep.subr.bf16.mxu0 %v2246
  %2742 = vmatpush1.bf16.msra.mxu0 %v2245
  %2743 = vmatprep.subr.bf16.mxu0 %v2238
  %2744 = vmatpush1.bf16.msra.mxu0 %v2237
  %2745 = vmatprep.subr.bf16.mxu0 %v2230
  %2746 = vmatpush1.bf16.msra.mxu0 %v2229
  %2747 = vmatprep.subr.bf16.mxu0 %v2222
  %2748 = vmatpush1.bf16.msra.mxu0 %v2221
  %2749 = vmatprep.subr.bf16.mxu0 %v2342
  %2750 = vmatpush2.bf16.msra.mxu0 %v2341
  %2751 = vmatprep.subr.bf16.mxu0 %v2334
  %2752 = vmatpush2.bf16.msra.mxu0 %v2333
  %2753 = vmatprep.subr.bf16.mxu0 %v2326
  %2754 = vmatpush2.bf16.msra.mxu0 %v2325
  %2755 = vmatprep.subr.bf16.mxu0 %v2318
  %2756 = vmatpush2.bf16.msra.mxu0 %v2317
  %2757 = vmatprep.subr.bf16.mxu0 %v2310
  %2758 = vmatpush2.bf16.msra.mxu0 %v2309
  %2759 = vmatprep.subr.bf16.mxu0 %v2302
  %2760 = vmatpush2.bf16.msra.mxu0 %v2301
  %2761 = vmatprep.subr.bf16.mxu0 %v2294
  %2762 = vmatpush2.bf16.msra.mxu0 %v2293
  %2763 = vmatprep.subr.bf16.mxu0 %v2286
  %2764 = vmatpush2.bf16.msra.mxu0 %v2285
  %2765 = vmatprep.mubr.bf16.mxu0 %v1118
  %2766 = vmatmul.mubr.bf16.gmra.mxu0 %v1117
  %v2767 = vpop.f32.mrf.mxu0
  %v2768 = vadd.f32 %v1424, %v2767
  %v2769 = vpop.f32.mrf.mxu0
  %v2770 = vadd.f32 %v1428, %v2769
  %v2771 = vpop.f32.mrf.mxu0
  %v2772 = vpop.f32.mrf.mxu0
  %2773 = vdwg.mxu0
  %2774 = vmatprep.subr.bf16.mxu0 %v2406
  %2775 = vmatpush1.bf16.msra.mxu0 %v2405
  %2776 = vmatprep.subr.bf16.mxu0 %v2398
  %2777 = vmatpush1.bf16.msra.mxu0 %v2397
  %2778 = vmatprep.subr.bf16.mxu0 %v2390
  %2779 = vmatpush1.bf16.msra.mxu0 %v2389
  %2780 = vmatprep.subr.bf16.mxu0 %v2382
  %2781 = vmatpush1.bf16.msra.mxu0 %v2381
  %2782 = vmatprep.subr.bf16.mxu0 %v2374
  %2783 = vmatpush1.bf16.msra.mxu0 %v2373
  %2784 = vmatprep.subr.bf16.mxu0 %v2366
  %2785 = vmatpush1.bf16.msra.mxu0 %v2365
  %2786 = vmatprep.subr.bf16.mxu0 %v2358
  %2787 = vmatpush1.bf16.msra.mxu0 %v2357
  %2788 = vmatprep.subr.bf16.mxu0 %v2350
  %2789 = vmatpush1.bf16.msra.mxu0 %v2349
  %2790 = vmatprep.subr.bf16.mxu0 %v2470
  %2791 = vmatpush2.bf16.msra.mxu0 %v2469
  %2792 = vmatprep.subr.bf16.mxu0 %v2462
  %2793 = vmatpush2.bf16.msra.mxu0 %v2461
  %2794 = vmatprep.subr.bf16.mxu0 %v2454
  %2795 = vmatpush2.bf16.msra.mxu0 %v2453
  %2796 = vmatprep.subr.bf16.mxu0 %v2446
  %2797 = vmatpush2.bf16.msra.mxu0 %v2445
  %2798 = vmatprep.subr.bf16.mxu0 %v2438
  %2799 = vmatpush2.bf16.msra.mxu0 %v2437
  %2800 = vmatprep.subr.bf16.mxu0 %v2430
  %2801 = vmatpush2.bf16.msra.mxu0 %v2429
  %2802 = vmatprep.subr.bf16.mxu0 %v2422
  %2803 = vmatpush2.bf16.msra.mxu0 %v2421
  %2804 = vmatprep.subr.bf16.mxu0 %v2414
  %2805 = vmatpush2.bf16.msra.mxu0 %v2413
  %2806 = vmatprep.mubr.bf16.mxu0 %v1120
  %2807 = vmatmul.mubr.bf16.gmra.mxu0 %v1119
  %v2808 = vpop.f32.mrf.mxu0
  %v2809 = vadd.f32 %v2768, %v2808
  %v2810 = vpop.f32.mrf.mxu0
  %v2811 = vadd.f32 %v2770, %v2810
  %v2812 = vpop.f32.mrf.mxu0
  %v2813 = vpop.f32.mrf.mxu0
  %2814 = vdwg.mxu0
  %2815 = vmatprep.subr.bf16.mxu0 %v2280
  %2816 = vmatpush1.bf16.msra.mxu0 %v2279
  %2817 = vmatprep.subr.bf16.mxu0 %v2272
  %2818 = vmatpush1.bf16.msra.mxu0 %v2271
  %2819 = vmatprep.subr.bf16.mxu0 %v2264
  %2820 = vmatpush1.bf16.msra.mxu0 %v2263
  %2821 = vmatprep.subr.bf16.mxu0 %v2256
  %2822 = vmatpush1.bf16.msra.mxu0 %v2255
  %2823 = vmatprep.subr.bf16.mxu0 %v2248
  %2824 = vmatpush1.bf16.msra.mxu0 %v2247
  %2825 = vmatprep.subr.bf16.mxu0 %v2240
  %2826 = vmatpush1.bf16.msra.mxu0 %v2239
  %2827 = vmatprep.subr.bf16.mxu0 %v2232
  %2828 = vmatpush1.bf16.msra.mxu0 %v2231
  %2829 = vmatprep.subr.bf16.mxu0 %v2224
  %2830 = vmatpush1.bf16.msra.mxu0 %v2223
  %2831 = vmatprep.subr.bf16.mxu0 %v2344
  %2832 = vmatpush2.bf16.msra.mxu0 %v2343
  %2833 = vmatprep.subr.bf16.mxu0 %v2336
  %2834 = vmatpush2.bf16.msra.mxu0 %v2335
  %2835 = vmatprep.subr.bf16.mxu0 %v2328
  %2836 = vmatpush2.bf16.msra.mxu0 %v2327
  %2837 = vmatprep.subr.bf16.mxu0 %v2320
  %2838 = vmatpush2.bf16.msra.mxu0 %v2319
  %2839 = vmatprep.subr.bf16.mxu0 %v2312
  %2840 = vmatpush2.bf16.msra.mxu0 %v2311
  %2841 = vmatprep.subr.bf16.mxu0 %v2304
  %2842 = vmatpush2.bf16.msra.mxu0 %v2303
  %2843 = vmatprep.subr.bf16.mxu0 %v2296
  %2844 = vmatpush2.bf16.msra.mxu0 %v2295
  %2845 = vmatprep.subr.bf16.mxu0 %v2288
  %2846 = vmatpush2.bf16.msra.mxu0 %v2287
  %2847 = vmatprep.mubr.bf16.mxu0 %v1118
  %2848 = vmatmul.mubr.bf16.gmra.mxu0 %v1117
  %v2849 = vpop.f32.mrf.mxu0
  %v2850 = vadd.f32 %v1432, %v2849
  %v2851 = vpop.f32.mrf.mxu0
  %v2852 = vadd.f32 %v1436, %v2851
  %v2853 = vpop.f32.mrf.mxu0
  %v2854 = vpop.f32.mrf.mxu0
  %2855 = vdwg.mxu0
  %2856 = vmatprep.subr.bf16.mxu0 %v2408
  %2857 = vmatpush1.bf16.msra.mxu0 %v2407
  %2858 = vmatprep.subr.bf16.mxu0 %v2400
  %2859 = vmatpush1.bf16.msra.mxu0 %v2399
  %2860 = vmatprep.subr.bf16.mxu0 %v2392
  %2861 = vmatpush1.bf16.msra.mxu0 %v2391
  %2862 = vmatprep.subr.bf16.mxu0 %v2384
  %2863 = vmatpush1.bf16.msra.mxu0 %v2383
  %2864 = vmatprep.subr.bf16.mxu0 %v2376
  %2865 = vmatpush1.bf16.msra.mxu0 %v2375
  %2866 = vmatprep.subr.bf16.mxu0 %v2368
  %2867 = vmatpush1.bf16.msra.mxu0 %v2367
  %2868 = vmatprep.subr.bf16.mxu0 %v2360
  %2869 = vmatpush1.bf16.msra.mxu0 %v2359
  %2870 = vmatprep.subr.bf16.mxu0 %v2352
  %2871 = vmatpush1.bf16.msra.mxu0 %v2351
  %2872 = vmatprep.subr.bf16.mxu0 %v2472
  %2873 = vmatpush2.bf16.msra.mxu0 %v2471
  %2874 = vmatprep.subr.bf16.mxu0 %v2464
  %2875 = vmatpush2.bf16.msra.mxu0 %v2463
  %2876 = vmatprep.subr.bf16.mxu0 %v2456
  %2877 = vmatpush2.bf16.msra.mxu0 %v2455
  %2878 = vmatprep.subr.bf16.mxu0 %v2448
  %2879 = vmatpush2.bf16.msra.mxu0 %v2447
  %2880 = vmatprep.subr.bf16.mxu0 %v2440
  %2881 = vmatpush2.bf16.msra.mxu0 %v2439
  %2882 = vmatprep.subr.bf16.mxu0 %v2432
  %2883 = vmatpush2.bf16.msra.mxu0 %v2431
  %2884 = vmatprep.subr.bf16.mxu0 %v2424
  %2885 = vmatpush2.bf16.msra.mxu0 %v2423
  %2886 = vmatprep.subr.bf16.mxu0 %v2416
  %2887 = vmatpush2.bf16.msra.mxu0 %v2415
  %2888 = vmatprep.mubr.bf16.mxu0 %v1120
  %2889 = vmatmul.mubr.bf16.gmra.mxu0 %v1119
  %v2890 = vpop.f32.mrf.mxu0
  %v2891 = vadd.f32 %v2850, %v2890
  %v2892 = vpop.f32.mrf.mxu0
  %v2893 = vadd.f32 %v2852, %v2892
  %v2894 = vpop.f32.mrf.mxu0
  %v2895 = vpop.f32.mrf.mxu0
  %2896 = vdwg.mxu0
  %2897 = vmatprep.subr.bf16.mxu0 %v2282
  %2898 = vmatpush1.bf16.msra.mxu0 %v2281
  %2899 = vmatprep.subr.bf16.mxu0 %v2274
  %2900 = vmatpush1.bf16.msra.mxu0 %v2273
  %2901 = vmatprep.subr.bf16.mxu0 %v2266
  %2902 = vmatpush1.bf16.msra.mxu0 %v2265
  %2903 = vmatprep.subr.bf16.mxu0 %v2258
  %2904 = vmatpush1.bf16.msra.mxu0 %v2257
  %2905 = vmatprep.subr.bf16.mxu0 %v2250
  %2906 = vmatpush1.bf16.msra.mxu0 %v2249
  %2907 = vmatprep.subr.bf16.mxu0 %v2242
  %2908 = vmatpush1.bf16.msra.mxu0 %v2241
  %2909 = vmatprep.subr.bf16.mxu0 %v2234
  %2910 = vmatpush1.bf16.msra.mxu0 %v2233
  %2911 = vmatprep.subr.bf16.mxu0 %v2226
  %2912 = vmatpush1.bf16.msra.mxu0 %v2225
  %2913 = vmatprep.subr.bf16.mxu0 %v2346
  %2914 = vmatpush2.bf16.msra.mxu0 %v2345
  %2915 = vmatprep.subr.bf16.mxu0 %v2338
  %2916 = vmatpush2.bf16.msra.mxu0 %v2337
  %2917 = vmatprep.subr.bf16.mxu0 %v2330
  %2918 = vmatpush2.bf16.msra.mxu0 %v2329
  %2919 = vmatprep.subr.bf16.mxu0 %v2322
  %2920 = vmatpush2.bf16.msra.mxu0 %v2321
  %2921 = vmatprep.subr.bf16.mxu0 %v2314
  %2922 = vmatpush2.bf16.msra.mxu0 %v2313
  %2923 = vmatprep.subr.bf16.mxu0 %v2306
  %2924 = vmatpush2.bf16.msra.mxu0 %v2305
  %2925 = vmatprep.subr.bf16.mxu0 %v2298
  %2926 = vmatpush2.bf16.msra.mxu0 %v2297
  %2927 = vmatprep.subr.bf16.mxu0 %v2290
  %2928 = vmatpush2.bf16.msra.mxu0 %v2289
  %2929 = vmatprep.mubr.bf16.mxu0 %v1118
  %2930 = vmatmul.mubr.bf16.gmra.mxu0 %v1117
  %v2931 = vpop.f32.mrf.mxu0
  %v2932 = vadd.f32 %v1440, %v2931
  %v2933 = vpop.f32.mrf.mxu0
  %v2934 = vadd.f32 %v1444, %v2933
  %v2935 = vpop.f32.mrf.mxu0
  %v2936 = vpop.f32.mrf.mxu0
  %2937 = vdwg.mxu0
  %2938 = vmatprep.subr.bf16.mxu0 %v2410
  %2939 = vmatpush1.bf16.msra.mxu0 %v2409
  %2940 = vmatprep.subr.bf16.mxu0 %v2402
  %2941 = vmatpush1.bf16.msra.mxu0 %v2401
  %2942 = vmatprep.subr.bf16.mxu0 %v2394
  %2943 = vmatpush1.bf16.msra.mxu0 %v2393
  %2944 = vmatprep.subr.bf16.mxu0 %v2386
  %2945 = vmatpush1.bf16.msra.mxu0 %v2385
  %2946 = vmatprep.subr.bf16.mxu0 %v2378
  %2947 = vmatpush1.bf16.msra.mxu0 %v2377
  %2948 = vmatprep.subr.bf16.mxu0 %v2370
  %2949 = vmatpush1.bf16.msra.mxu0 %v2369
  %2950 = vmatprep.subr.bf16.mxu0 %v2362
  %2951 = vmatpush1.bf16.msra.mxu0 %v2361
  %2952 = vmatprep.subr.bf16.mxu0 %v2354
  %2953 = vmatpush1.bf16.msra.mxu0 %v2353
  %2954 = vmatprep.subr.bf16.mxu0 %v2474
  %2955 = vmatpush2.bf16.msra.mxu0 %v2473
  %2956 = vmatprep.subr.bf16.mxu0 %v2466
  %2957 = vmatpush2.bf16.msra.mxu0 %v2465
  %2958 = vmatprep.subr.bf16.mxu0 %v2458
  %2959 = vmatpush2.bf16.msra.mxu0 %v2457
  %2960 = vmatprep.subr.bf16.mxu0 %v2450
  %2961 = vmatpush2.bf16.msra.mxu0 %v2449
  %2962 = vmatprep.subr.bf16.mxu0 %v2442
  %2963 = vmatpush2.bf16.msra.mxu0 %v2441
  %2964 = vmatprep.subr.bf16.mxu0 %v2434
  %2965 = vmatpush2.bf16.msra.mxu0 %v2433
  %2966 = vmatprep.subr.bf16.mxu0 %v2426
  %2967 = vmatpush2.bf16.msra.mxu0 %v2425
  %2968 = vmatprep.subr.bf16.mxu0 %v2418
  %2969 = vmatpush2.bf16.msra.mxu0 %v2417
  %2970 = vmatprep.mubr.bf16.mxu0 %v1120
  %2971 = vmatmul.mubr.bf16.gmra.mxu0 %v1119
  %v2972 = vpop.f32.mrf.mxu0
  %v2973 = vadd.f32 %v2932, %v2972
  %v2974 = vpop.f32.mrf.mxu0
  %v2975 = vadd.f32 %v2934, %v2974
  %v2976 = vpop.f32.mrf.mxu0
  %v2977 = vpop.f32.mrf.mxu0
  %2978 = vdwg.mxu0
  %2979 = vmatprep.subr.bf16.mxu0 %v2284
  %2980 = vmatpush1.bf16.msra.mxu0 %v2283
  %2981 = vmatprep.subr.bf16.mxu0 %v2276
  %2982 = vmatpush1.bf16.msra.mxu0 %v2275
  %2983 = vmatprep.subr.bf16.mxu0 %v2268
  %2984 = vmatpush1.bf16.msra.mxu0 %v2267
  %2985 = vmatprep.subr.bf16.mxu0 %v2260
  %2986 = vmatpush1.bf16.msra.mxu0 %v2259
  %2987 = vmatprep.subr.bf16.mxu0 %v2252
  %2988 = vmatpush1.bf16.msra.mxu0 %v2251
  %2989 = vmatprep.subr.bf16.mxu0 %v2244
  %2990 = vmatpush1.bf16.msra.mxu0 %v2243
  %2991 = vmatprep.subr.bf16.mxu0 %v2236
  %2992 = vmatpush1.bf16.msra.mxu0 %v2235
  %2993 = vmatprep.subr.bf16.mxu0 %v2228
  %2994 = vmatpush1.bf16.msra.mxu0 %v2227
  %2995 = vmatprep.subr.bf16.mxu0 %v2348
  %2996 = vmatpush2.bf16.msra.mxu0 %v2347
  %2997 = vmatprep.subr.bf16.mxu0 %v2340
  %2998 = vmatpush2.bf16.msra.mxu0 %v2339
  %2999 = vmatprep.subr.bf16.mxu0 %v2332
  %3000 = vmatpush2.bf16.msra.mxu0 %v2331
  %3001 = vmatprep.subr.bf16.mxu0 %v2324
  %3002 = vmatpush2.bf16.msra.mxu0 %v2323
  %3003 = vmatprep.subr.bf16.mxu0 %v2316
  %3004 = vmatpush2.bf16.msra.mxu0 %v2315
  %3005 = vmatprep.subr.bf16.mxu0 %v2308
  %3006 = vmatpush2.bf16.msra.mxu0 %v2307
  %3007 = vmatprep.subr.bf16.mxu0 %v2300
  %3008 = vmatpush2.bf16.msra.mxu0 %v2299
  %3009 = vmatprep.subr.bf16.mxu0 %v2292
  %3010 = vmatpush2.bf16.msra.mxu0 %v2291
  %3011 = vmatprep.mubr.bf16.mxu0 %v1118
  %3012 = vmatmul.mubr.bf16.gmra.mxu0 %v1117
  %v3013 = vpop.f32.mrf.mxu0
  %v3014 = vadd.f32 %v1448, %v3013
  %v3015 = vpop.f32.mrf.mxu0
  %v3016 = vadd.f32 %v1452, %v3015
  %v3017 = vpop.f32.mrf.mxu0
  %v3018 = vpop.f32.mrf.mxu0
  %3019 = vdwg.mxu0
  %3020 = vmatprep.subr.bf16.mxu0 %v2412
  %3021 = vmatpush1.bf16.msra.mxu0 %v2411
  %3022 = vmatprep.subr.bf16.mxu0 %v2404
  %3023 = vmatpush1.bf16.msra.mxu0 %v2403
  %3024 = vmatprep.subr.bf16.mxu0 %v2396
  %3025 = vmatpush1.bf16.msra.mxu0 %v2395
  %3026 = vmatprep.subr.bf16.mxu0 %v2388
  %3027 = vmatpush1.bf16.msra.mxu0 %v2387
  %3028 = vmatprep.subr.bf16.mxu0 %v2380
  %3029 = vmatpush1.bf16.msra.mxu0 %v2379
  %3030 = vmatprep.subr.bf16.mxu0 %v2372
  %3031 = vmatpush1.bf16.msra.mxu0 %v2371
  %3032 = vmatprep.subr.bf16.mxu0 %v2364
  %3033 = vmatpush1.bf16.msra.mxu0 %v2363
  %3034 = vmatprep.subr.bf16.mxu0 %v2356
  %3035 = vmatpush1.bf16.msra.mxu0 %v2355
  %3036 = vmatprep.subr.bf16.mxu0 %v2476
  %3037 = vmatpush2.bf16.msra.mxu0 %v2475
  %3038 = vmatprep.subr.bf16.mxu0 %v2468
  %3039 = vmatpush2.bf16.msra.mxu0 %v2467
  %3040 = vmatprep.subr.bf16.mxu0 %v2460
  %3041 = vmatpush2.bf16.msra.mxu0 %v2459
  %3042 = vmatprep.subr.bf16.mxu0 %v2452
  %3043 = vmatpush2.bf16.msra.mxu0 %v2451
  %3044 = vmatprep.subr.bf16.mxu0 %v2444
  %3045 = vmatpush2.bf16.msra.mxu0 %v2443
  %3046 = vmatprep.subr.bf16.mxu0 %v2436
  %3047 = vmatpush2.bf16.msra.mxu0 %v2435
  %3048 = vmatprep.subr.bf16.mxu0 %v2428
  %3049 = vmatpush2.bf16.msra.mxu0 %v2427
  %3050 = vmatprep.subr.bf16.mxu0 %v2420
  %3051 = vmatpush2.bf16.msra.mxu0 %v2419
  %3052 = vmatprep.mubr.bf16.mxu0 %v1120
  %3053 = vmatmul.mubr.bf16.gmra.mxu0 %v1119
  %v3054 = vpop.f32.mrf.mxu0
  %v3055 = vadd.f32 %v3014, %v3054
  %v3056 = vpop.f32.mrf.mxu0
  %v3057 = vadd.f32 %v3016, %v3056
  %v3058 = vpop.f32.mrf.mxu0
  %v3059 = vpop.f32.mrf.mxu0
  %3060 = vdwg.mxu0
  %v3061 = vrot.slane %v2809, 4
  %v3062 = vadd.f32 %v2809, %v3061
  %v3063 = vrot.slane %v3062, 2
  %v3064 = vadd.f32 %v3062, %v3063
  %v3065 = vrot.slane %v3064, 1
  %v3066 = vadd.f32 %v3064, %v3065
  %v3067 = vrot.slane %v2811, 4
  %v3068 = vadd.f32 %v2811, %v3067
  %v3069 = vrot.slane %v3068, 2
  %v3070 = vadd.f32 %v3068, %v3069
  %v3071 = vrot.slane %v3070, 1
  %v3072 = vadd.f32 %v3070, %v3071
  %v3073 = vrot.slane %v2891, 4
  %v3074 = vadd.f32 %v2891, %v3073
  %v3075 = vrot.slane %v3074, 2
  %v3076 = vadd.f32 %v3074, %v3075
  %v3077 = vrot.slane %v3076, 1
  %v3078 = vadd.f32 %v3076, %v3077
  %v3079 = vrot.slane %v2893, 4
  %v3080 = vadd.f32 %v2893, %v3079
  %v3081 = vrot.slane %v3080, 2
  %v3082 = vadd.f32 %v3080, %v3081
  %v3083 = vrot.slane %v3082, 1
  %v3084 = vadd.f32 %v3082, %v3083
  %v3085 = vrot.slane %v2973, 4
  %v3086 = vadd.f32 %v2973, %v3085
  %v3087 = vrot.slane %v3086, 2
  %v3088 = vadd.f32 %v3086, %v3087
  %v3089 = vrot.slane %v3088, 1
  %v3090 = vadd.f32 %v3088, %v3089
  %v3091 = vrot.slane %v2975, 4
  %v3092 = vadd.f32 %v2975, %v3091
  %v3093 = vrot.slane %v3092, 2
  %v3094 = vadd.f32 %v3092, %v3093
  %v3095 = vrot.slane %v3094, 1
  %v3096 = vadd.f32 %v3094, %v3095
  %v3097 = vrot.slane %v3055, 4
  %v3098 = vadd.f32 %v3055, %v3097
  %v3099 = vrot.slane %v3098, 2
  %v3100 = vadd.f32 %v3098, %v3099
  %v3101 = vrot.slane %v3100, 1
  %v3102 = vadd.f32 %v3100, %v3101
  %v3103 = vrot.slane %v3057, 4
  %v3104 = vadd.f32 %v3057, %v3103
  %v3105 = vrot.slane %v3104, 2
  %v3106 = vadd.f32 %v3104, %v3105
  %v3107 = vrot.slane %v3106, 1
  %v3108 = vadd.f32 %v3106, %v3107
  %v3109 = vmul.f32 %v3066, %v325
  %v3110 = vmul.f32 %v3072, %v325
  %v3111 = vmul.f32 %v3078, %v325
  %v3112 = vmul.f32 %v3084, %v325
  %v3113 = vmul.f32 %v3090, %v325
  %v3114 = vmul.f32 %v3096, %v325
  %v3115 = vmul.f32 %v3102, %v325
  %v3116 = vmul.f32 %v3108, %v325
  %v3117 = vmul.f32 %v2809, %v2809
  %v3118 = vmul.f32 %v2811, %v2811
  %v3119 = vmul.f32 %v2891, %v2891
  %v3120 = vmul.f32 %v2893, %v2893
  %v3121 = vmul.f32 %v2973, %v2973
  %v3122 = vmul.f32 %v2975, %v2975
  %v3123 = vmul.f32 %v3055, %v3055
  %v3124 = vmul.f32 %v3057, %v3057
  %v3125 = vrot.slane %v3117, 4
  %v3126 = vadd.f32 %v3117, %v3125
  %v3127 = vrot.slane %v3126, 2
  %v3128 = vadd.f32 %v3126, %v3127
  %v3129 = vrot.slane %v3128, 1
  %v3130 = vadd.f32 %v3128, %v3129
  %v3131 = vrot.slane %v3118, 4
  %v3132 = vadd.f32 %v3118, %v3131
  %v3133 = vrot.slane %v3132, 2
  %v3134 = vadd.f32 %v3132, %v3133
  %v3135 = vrot.slane %v3134, 1
  %v3136 = vadd.f32 %v3134, %v3135
  %v3137 = vrot.slane %v3119, 4
  %v3138 = vadd.f32 %v3119, %v3137
  %v3139 = vrot.slane %v3138, 2
  %v3140 = vadd.f32 %v3138, %v3139
  %v3141 = vrot.slane %v3140, 1
  %v3142 = vadd.f32 %v3140, %v3141
  %v3143 = vrot.slane %v3120, 4
  %v3144 = vadd.f32 %v3120, %v3143
  %v3145 = vrot.slane %v3144, 2
  %v3146 = vadd.f32 %v3144, %v3145
  %v3147 = vrot.slane %v3146, 1
  %v3148 = vadd.f32 %v3146, %v3147
  %v3149 = vrot.slane %v3121, 4
  %v3150 = vadd.f32 %v3121, %v3149
  %v3151 = vrot.slane %v3150, 2
  %v3152 = vadd.f32 %v3150, %v3151
  %v3153 = vrot.slane %v3152, 1
  %v3154 = vadd.f32 %v3152, %v3153
  %v3155 = vrot.slane %v3122, 4
  %v3156 = vadd.f32 %v3122, %v3155
  %v3157 = vrot.slane %v3156, 2
  %v3158 = vadd.f32 %v3156, %v3157
  %v3159 = vrot.slane %v3158, 1
  %v3160 = vadd.f32 %v3158, %v3159
  %v3161 = vrot.slane %v3123, 4
  %v3162 = vadd.f32 %v3123, %v3161
  %v3163 = vrot.slane %v3162, 2
  %v3164 = vadd.f32 %v3162, %v3163
  %v3165 = vrot.slane %v3164, 1
  %v3166 = vadd.f32 %v3164, %v3165
  %v3167 = vrot.slane %v3124, 4
  %v3168 = vadd.f32 %v3124, %v3167
  %v3169 = vrot.slane %v3168, 2
  %v3170 = vadd.f32 %v3168, %v3169
  %v3171 = vrot.slane %v3170, 1
  %v3172 = vadd.f32 %v3170, %v3171
  %v3173 = vmul.f32 %v3130, %v325
  %v3174 = vmul.f32 %v3136, %v325
  %v3175 = vmul.f32 %v3142, %v325
  %v3176 = vmul.f32 %v3148, %v325
  %v3177 = vmul.f32 %v3154, %v325
  %v3178 = vmul.f32 %v3160, %v325
  %v3179 = vmul.f32 %v3166, %v325
  %v3180 = vmul.f32 %v3172, %v325
  %v3181 = vmul.f32 %v3109, %v3109
  %v3182 = vmul.f32 %v3110, %v3110
  %v3183 = vmul.f32 %v3111, %v3111
  %v3184 = vmul.f32 %v3112, %v3112
  %v3185 = vmul.f32 %v3113, %v3113
  %v3186 = vmul.f32 %v3114, %v3114
  %v3187 = vmul.f32 %v3115, %v3115
  %v3188 = vmul.f32 %v3116, %v3116
  %v3189 = vsub.f32 %v3173, %v3181
  %v3190 = vsub.f32 %v3174, %v3182
  %v3191 = vsub.f32 %v3175, %v3183
  %v3192 = vsub.f32 %v3176, %v3184
  %v3193 = vsub.f32 %v3177, %v3185
  %v3194 = vsub.f32 %v3178, %v3186
  %v3195 = vsub.f32 %v3179, %v3187
  %v3196 = vsub.f32 %v3180, %v3188
  %v3197 = vmax.f32 %v3189, 0.0
  %v3198 = vmax.f32 %v3190, 0.0
  %v3199 = vmax.f32 %v3191, 0.0
  %v3200 = vmax.f32 %v3192, 0.0
  %v3201 = vmax.f32 %v3193, 0.0
  %v3202 = vmax.f32 %v3194, 0.0
  %v3203 = vmax.f32 %v3195, 0.0
  %v3204 = vmax.f32 %v3196, 0.0
  %v3205 = vadd.f32 %v3197, 1e-05
  %v3206 = vadd.f32 %v3198, 1e-05
  %v3207 = vadd.f32 %v3199, 1e-05
  %v3208 = vadd.f32 %v3200, 1e-05
  %v3209 = vadd.f32 %v3201, 1e-05
  %v3210 = vadd.f32 %v3202, 1e-05
  %v3211 = vadd.f32 %v3203, 1e-05
  %v3212 = vadd.f32 %v3204, 1e-05
  %v3213 = vrsqrt.pop %v3205
  %v3214 = vrsqrt.pop %v3206
  %v3215 = vrsqrt.pop %v3207
  %v3216 = vrsqrt.pop %v3208
  %v3217 = vrsqrt.pop %v3209
  %v3218 = vrsqrt.pop %v3210
  %v3219 = vrsqrt.pop %v3211
  %v3220 = vrsqrt.pop %v3212
  %v3221 = vlaneseq
  %v3222 = vshrl.u32 %v3221, 7
  %v3223 = vsub.s32 1, %v3222
  %v3224 = vrot.slane %v1113, %v3223
  %v3225 = vlaneseq
  %v3226 = vshrl.u32 %v3225, 7
  %v3227 = vsub.s32 5, %v3226
  %v3228 = vrot.slane %v1113, %v3227
  %v3229 = vlaneseq
  %v3230 = vshrl.u32 %v3229, 7
  %v3231 = vsub.s32 1, %v3230
  %v3232 = vrot.slane %v1114, %v3231
  %v3233 = vlaneseq
  %v3234 = vshrl.u32 %v3233, 7
  %v3235 = vsub.s32 5, %v3234
  %v3236 = vrot.slane %v1114, %v3235
  %v3237 = vlaneseq
  %v3238 = vshrl.u32 %v3237, 7
  %v3239 = vsub.s32 1, %v3238
  %v3240 = vrot.slane %v1115, %v3239
  %v3241 = vlaneseq
  %v3242 = vshrl.u32 %v3241, 7
  %v3243 = vsub.s32 5, %v3242
  %v3244 = vrot.slane %v1115, %v3243
  %v3245 = vlaneseq
  %v3246 = vshrl.u32 %v3245, 7
  %v3247 = vsub.s32 1, %v3246
  %v3248 = vrot.slane %v1116, %v3247
  %v3249 = vlaneseq
  %v3250 = vshrl.u32 %v3249, 7
  %v3251 = vsub.s32 5, %v3250
  %v3252 = vrot.slane %v1116, %v3251
  %v3261 = vmul.f32 %v3213, %v3224
  %v3262 = vmul.f32 %v3214, %v3228
  %v3263 = vmul.f32 %v3215, %v3232
  %v3264 = vmul.f32 %v3216, %v3236
  %v3265 = vmul.f32 %v3217, %v3240
  %v3266 = vmul.f32 %v3218, %v3244
  %v3267 = vmul.f32 %v3219, %v3248
  %v3268 = vmul.f32 %v3220, %v3252
  %v3269 = vmul.f32 %v3109, %v3261
  %v3270 = vmul.f32 %v3110, %v3262
  %v3271 = vmul.f32 %v3111, %v3263
  %v3272 = vmul.f32 %v3112, %v3264
  %v3273 = vmul.f32 %v3113, %v3265
  %v3274 = vmul.f32 %v3114, %v3266
  %v3275 = vmul.f32 %v3115, %v3267
  %v3276 = vmul.f32 %v3116, %v3268
  %v3285 = vcombine.low %v3269, %v3270
  %v3286 = vcombine.low %v3271, %v3272
  %v3287 = vcombine.low %v3273, %v3274
  %v3288 = vcombine.low %v3275, %v3276
  %v3289 = vrot.slane %v3285, 6
  %v3290 = vrot.slane %v3286, 6
  %v3291 = vrot.slane %v3287, 6
  %v3292 = vrot.slane %v3288, 6
  %v3297 = vsub.f32 %v1113, %v3289
  %v3298 = vsub.f32 %v1114, %v3290
  %v3299 = vsub.f32 %v1115, %v3291
  %v3300 = vsub.f32 %v1116, %v3292
  %v3301 = vlaneseq
  %v3302 = vshrl.u32 %v3301, 7
  %v3303 = vsub.s32 0, %v3302
  %v3304 = vrot.slane %v3261, %v3303
  %v3305 = vlaneseq
  %v3306 = vshrl.u32 %v3305, 7
  %v3307 = vsub.s32 0, %v3306
  %v3308 = vrot.slane %v3262, %v3307
  %v3309 = vlaneseq
  %v3310 = vshrl.u32 %v3309, 7
  %v3311 = vsub.s32 0, %v3310
  %v3312 = vrot.slane %v3263, %v3311
  %v3313 = vlaneseq
  %v3314 = vshrl.u32 %v3313, 7
  %v3315 = vsub.s32 0, %v3314
  %v3316 = vrot.slane %v3264, %v3315
  %v3317 = vlaneseq
  %v3318 = vshrl.u32 %v3317, 7
  %v3319 = vsub.s32 0, %v3318
  %v3320 = vrot.slane %v3265, %v3319
  %v3321 = vlaneseq
  %v3322 = vshrl.u32 %v3321, 7
  %v3323 = vsub.s32 0, %v3322
  %v3324 = vrot.slane %v3266, %v3323
  %v3325 = vlaneseq
  %v3326 = vshrl.u32 %v3325, 7
  %v3327 = vsub.s32 0, %v3326
  %v3328 = vrot.slane %v3267, %v3327
  %v3329 = vlaneseq
  %v3330 = vshrl.u32 %v3329, 7
  %v3331 = vsub.s32 0, %v3330
  %v3332 = vrot.slane %v3268, %v3331
  %v3333 = vmul.f32 %v2809, %v3304
  %v3334 = vmul.f32 %v2811, %v3308
  %v3335 = vmul.f32 %v2891, %v3312
  %v3336 = vmul.f32 %v2893, %v3316
  %v3337 = vmul.f32 %v2973, %v3320
  %v3338 = vmul.f32 %v2975, %v3324
  %v3339 = vmul.f32 %v3055, %v3328
  %v3340 = vmul.f32 %v3057, %v3332
  %v3345 = vlaneseq
  %v3346 = vshrl.u32 %v3345, 7
  %v3347 = vsub.s32 2, %v3346
  %v3348 = vrot.slane %v3297, %v3347
  %v3349 = vlaneseq
  %v3350 = vshrl.u32 %v3349, 7
  %v3351 = vsub.s32 6, %v3350
  %v3352 = vrot.slane %v3297, %v3351
  %v3353 = vlaneseq
  %v3354 = vshrl.u32 %v3353, 7
  %v3355 = vsub.s32 2, %v3354
  %v3356 = vrot.slane %v3298, %v3355
  %v3357 = vlaneseq
  %v3358 = vshrl.u32 %v3357, 7
  %v3359 = vsub.s32 6, %v3358
  %v3360 = vrot.slane %v3298, %v3359
  %v3361 = vlaneseq
  %v3362 = vshrl.u32 %v3361, 7
  %v3363 = vsub.s32 2, %v3362
  %v3364 = vrot.slane %v3299, %v3363
  %v3365 = vlaneseq
  %v3366 = vshrl.u32 %v3365, 7
  %v3367 = vsub.s32 6, %v3366
  %v3368 = vrot.slane %v3299, %v3367
  %v3369 = vlaneseq
  %v3370 = vshrl.u32 %v3369, 7
  %v3371 = vsub.s32 2, %v3370
  %v3372 = vrot.slane %v3300, %v3371
  %v3373 = vlaneseq
  %v3374 = vshrl.u32 %v3373, 7
  %v3375 = vsub.s32 6, %v3374
  %v3376 = vrot.slane %v3300, %v3375
  %v3385 = vlaneseq
  %v3386 = vshrl.u32 %v3385, 7
  %v3387 = vsub.s32 2, %v3386
  %v3388 = vrot.slane %v3348, %v3387
  %v3389 = vlaneseq
  %v3390 = vshrl.u32 %v3389, 7
  %v3391 = vsub.s32 2, %v3390
  %v3392 = vrot.slane %v3352, %v3391
  %v3393 = vlaneseq
  %v3394 = vshrl.u32 %v3393, 7
  %v3395 = vsub.s32 2, %v3394
  %v3396 = vrot.slane %v3356, %v3395
  %v3397 = vlaneseq
  %v3398 = vshrl.u32 %v3397, 7
  %v3399 = vsub.s32 2, %v3398
  %v3400 = vrot.slane %v3360, %v3399
  %v3401 = vlaneseq
  %v3402 = vshrl.u32 %v3401, 7
  %v3403 = vsub.s32 2, %v3402
  %v3404 = vrot.slane %v3364, %v3403
  %v3405 = vlaneseq
  %v3406 = vshrl.u32 %v3405, 7
  %v3407 = vsub.s32 2, %v3406
  %v3408 = vrot.slane %v3368, %v3407
  %v3409 = vlaneseq
  %v3410 = vshrl.u32 %v3409, 7
  %v3411 = vsub.s32 2, %v3410
  %v3412 = vrot.slane %v3372, %v3411
  %v3413 = vlaneseq
  %v3414 = vshrl.u32 %v3413, 7
  %v3415 = vsub.s32 2, %v3414
  %v3416 = vrot.slane %v3376, %v3415
  %v3417 = vadd.f32 %v3333, %v3388
  %v3418 = vadd.f32 %v3334, %v3392
  %v3419 = vadd.f32 %v3335, %v3396
  %v3420 = vadd.f32 %v3336, %v3400
  %v3421 = vadd.f32 %v3337, %v3404
  %v3422 = vadd.f32 %v3338, %v3408
  %v3423 = vadd.f32 %v3339, %v3412
  %v3424 = vadd.f32 %v3340, %v3416
  %vm3425 = vcmp.gt.f32.partialorder %v3417, 0.0
  %vm3426 = vcmp.gt.f32.partialorder %v3418, 0.0
  %vm3427 = vcmp.gt.f32.partialorder %v3419, 0.0
  %vm3428 = vcmp.gt.f32.partialorder %v3420, 0.0
  %vm3429 = vcmp.gt.f32.partialorder %v3421, 0.0
  %vm3430 = vcmp.gt.f32.partialorder %v3422, 0.0
  %vm3431 = vcmp.gt.f32.partialorder %v3423, 0.0
  %vm3432 = vcmp.gt.f32.partialorder %v3424, 0.0
  %v3433 = vmul.f32 %v3417, 0.2
  %v3434 = vmul.f32 %v3418, 0.2
  %v3435 = vmul.f32 %v3419, 0.2
  %v3436 = vmul.f32 %v3420, 0.2
  %v3437 = vmul.f32 %v3421, 0.2
  %v3438 = vmul.f32 %v3422, 0.2
  %v3439 = vmul.f32 %v3423, 0.2
  %v3440 = vmul.f32 %v3424, 0.2
  %v3441 = vsel %vm3425, %v3417, %v3433
  %v3442 = vsel %vm3426, %v3418, %v3434
  %v3443 = vsel %vm3427, %v3419, %v3435
  %v3444 = vsel %vm3428, %v3420, %v3436
  %v3445 = vsel %vm3429, %v3421, %v3437
  %v3446 = vsel %vm3430, %v3422, %v3438
  %v3447 = vsel %vm3431, %v3423, %v3439
  %v3448 = vsel %vm3432, %v3424, %v3440
  %v3449 = vpack.c.bf16 %v3441, %v3441
  %v3450 = vpack.c.bf16 %v3442, %v3442
  %v3451 = vpack.c.bf16 %v3443, %v3443
  %v3452 = vpack.c.bf16 %v3444, %v3444
  %v3453 = vpack.c.bf16 %v3445, %v3445
  %v3454 = vpack.c.bf16 %v3446, %v3446
  %v3455 = vpack.c.bf16 %v3447, %v3447
  %v3456 = vpack.c.bf16 %v3448, %v3448
  %v3457 = vld [vmem:[%s9] sm:$0xff]
  %v3458 = vld [vmem:[%s9 + $0x8] sm:$0xff]
  %v3459 = vld [vmem:[%s9 + $0x10] sm:$0xff]
  %v3460 = vld [vmem:[%s9 + $0x18] sm:$0xf]
  %v3461 = vld [vmem:[%s9 + $0x1c] sm:$0xff]
  %v3462 = vld [vmem:[%s9 + $0x24] sm:$0xff]
  %v3463 = vld [vmem:[%s9 + $0x2c] sm:$0xff]
  %v3464 = vld [vmem:[%s9 + $0x34] sm:$0xf]
  %v3465 = vld [vmem:[%s9 + $0x38] sm:$0xff]
  %v3466 = vld [vmem:[%s9 + $0x40] sm:$0xff]
  %v3467 = vld [vmem:[%s9 + $0x48] sm:$0xff]
  %v3468 = vld [vmem:[%s9 + $0x50] sm:$0xf]
  %v3469 = vld [vmem:[%s9 + $0x54] sm:$0xff]
  %v3470 = vld [vmem:[%s9 + $0x5c] sm:$0xff]
  %v3471 = vld [vmem:[%s9 + $0x64] sm:$0xff]
  %v3472 = vld [vmem:[%s9 + $0x6c] sm:$0xf]
  %v3473 = vld [vmem:[%s9 + $0x70] sm:$0xff]
  %v3474 = vld [vmem:[%s9 + $0x78] sm:$0xff]
  %v3475 = vld [vmem:[%s9 + $0x80] sm:$0xff]
  %v3476 = vld [vmem:[%s9 + $0x88] sm:$0xf]
  %v3477 = vld [vmem:[%s9 + $0x8c] sm:$0xff]
  %v3478 = vld [vmem:[%s9 + $0x94] sm:$0xff]
  %v3479 = vld [vmem:[%s9 + $0x9c] sm:$0xff]
  %v3480 = vld [vmem:[%s9 + $0xa4] sm:$0xf]
  %v3481 = vld [vmem:[%s9 + $0xa8] sm:$0xff]
  %v3482 = vld [vmem:[%s9 + $0xb0] sm:$0xff]
  %v3483 = vld [vmem:[%s9 + $0xb8] sm:$0xff]
  %v3484 = vld [vmem:[%s9 + $0xc0] sm:$0xf]
  %v3485 = vld [vmem:[%s9 + $0xc4] sm:$0xff]
  %v3486 = vld [vmem:[%s9 + $0xcc] sm:$0xff]
  %v3487 = vld [vmem:[%s9 + $0xd4] sm:$0xff]
  %v3488 = vld [vmem:[%s9 + $0xdc] sm:$0xf]
  %v3489 = vld [vmem:[%s9 + $0xe0] sm:$0xff]
  %v3490 = vld [vmem:[%s9 + $0xe8] sm:$0xff]
  %v3491 = vld [vmem:[%s9 + $0xf0] sm:$0xff]
  %v3492 = vld [vmem:[%s9 + $0xf8] sm:$0xf]
  %v3493 = vld [vmem:[%s9 + $0xfc] sm:$0xff]
  %v3494 = vld [vmem:[%s9 + $0x104] sm:$0xff]
  %v3495 = vld [vmem:[%s9 + $0x10c] sm:$0xff]
  %v3496 = vld [vmem:[%s9 + $0x114] sm:$0xf]
  %v3497 = vld [vmem:[%s9 + $0x118] sm:$0xff]
  %v3498 = vld [vmem:[%s9 + $0x120] sm:$0xff]
  %v3499 = vld [vmem:[%s9 + $0x128] sm:$0xff]
  %v3500 = vld [vmem:[%s9 + $0x130] sm:$0xf]
  %v3501 = vld [vmem:[%s9 + $0x134] sm:$0xff]
  %v3502 = vld [vmem:[%s9 + $0x13c] sm:$0xff]
  %v3503 = vld [vmem:[%s9 + $0x144] sm:$0xff]
  %v3504 = vld [vmem:[%s9 + $0x14c] sm:$0xf]
  %v3505 = vld [vmem:[%s9 + $0x150] sm:$0xff]
  %v3506 = vld [vmem:[%s9 + $0x158] sm:$0xff]
  %v3507 = vld [vmem:[%s9 + $0x160] sm:$0xff]
  %v3508 = vld [vmem:[%s9 + $0x168] sm:$0xf]
  %v3509 = vld [vmem:[%s9 + $0x16c] sm:$0xff]
  %v3510 = vld [vmem:[%s9 + $0x174] sm:$0xff]
  %v3511 = vld [vmem:[%s9 + $0x17c] sm:$0xff]
  %v3512 = vld [vmem:[%s9 + $0x184] sm:$0xf]
  %v3513 = vld [vmem:[%s9 + $0x188] sm:$0xff]
  %v3514 = vld [vmem:[%s9 + $0x190] sm:$0xff]
  %v3515 = vld [vmem:[%s9 + $0x198] sm:$0xff]
  %v3516 = vld [vmem:[%s9 + $0x1a0] sm:$0xf]
  %v3517 = vld [vmem:[%s9 + $0x1a4] sm:$0xff]
  %v3518 = vld [vmem:[%s9 + $0x1ac] sm:$0xff]
  %v3519 = vld [vmem:[%s9 + $0x1b4] sm:$0xff]
  %v3520 = vld [vmem:[%s9 + $0x1bc] sm:$0xf]
  %v3521 = vld [vmem:[%s9 + $0x1c0] sm:$0xff]
  %v3522 = vld [vmem:[%s9 + $0x1c8] sm:$0xff]
  %v3523 = vld [vmem:[%s9 + $0x1d0] sm:$0xff]
  %v3524 = vld [vmem:[%s9 + $0x1d8] sm:$0xf]
  %v3525 = vld [vmem:[%s9 + $0x1dc] sm:$0xff]
  %v3526 = vld [vmem:[%s9 + $0x1e4] sm:$0xff]
  %v3527 = vld [vmem:[%s9 + $0x1ec] sm:$0xff]
  %v3528 = vld [vmem:[%s9 + $0x1f4] sm:$0xf]
  %v3529 = vld [vmem:[%s9 + $0x1f8] sm:$0xff]
  %v3530 = vld [vmem:[%s9 + $0x200] sm:$0xff]
  %v3531 = vld [vmem:[%s9 + $0x208] sm:$0xff]
  %v3532 = vld [vmem:[%s9 + $0x210] sm:$0xf]
  %v3533 = vld [vmem:[%s9 + $0x214] sm:$0xff]
  %v3534 = vld [vmem:[%s9 + $0x21c] sm:$0xff]
  %v3535 = vld [vmem:[%s9 + $0x224] sm:$0xff]
  %v3536 = vld [vmem:[%s9 + $0x22c] sm:$0xf]
  %v3537 = vld [vmem:[%s9 + $0x230] sm:$0xff]
  %v3538 = vld [vmem:[%s9 + $0x238] sm:$0xff]
  %v3539 = vld [vmem:[%s9 + $0x240] sm:$0xff]
  %v3540 = vld [vmem:[%s9 + $0x248] sm:$0xf]
  %v3541 = vld [vmem:[%s9 + $0x24c] sm:$0xff]
  %v3542 = vld [vmem:[%s9 + $0x254] sm:$0xff]
  %v3543 = vld [vmem:[%s9 + $0x25c] sm:$0xff]
  %v3544 = vld [vmem:[%s9 + $0x264] sm:$0xf]
  %v3545 = vld [vmem:[%s9 + $0x268] sm:$0xff]
  %v3546 = vld [vmem:[%s9 + $0x270] sm:$0xff]
  %v3547 = vld [vmem:[%s9 + $0x278] sm:$0xff]
  %v3548 = vld [vmem:[%s9 + $0x280] sm:$0xf]
  %v3549 = vld [vmem:[%s9 + $0x284] sm:$0xff]
  %v3550 = vld [vmem:[%s9 + $0x28c] sm:$0xff]
  %v3551 = vld [vmem:[%s9 + $0x294] sm:$0xff]
  %v3552 = vld [vmem:[%s9 + $0x29c] sm:$0xf]
  %v3553 = vld [vmem:[%s9 + $0x2a0] sm:$0xff]
  %v3554 = vld [vmem:[%s9 + $0x2a8] sm:$0xff]
  %v3555 = vld [vmem:[%s9 + $0x2b0] sm:$0xff]
  %v3556 = vld [vmem:[%s9 + $0x2b8] sm:$0xf]
  %v3557 = vld [vmem:[%s9 + $0x2bc] sm:$0xff]
  %v3558 = vld [vmem:[%s9 + $0x2c4] sm:$0xff]
  %v3559 = vld [vmem:[%s9 + $0x2cc] sm:$0xff]
  %v3560 = vld [vmem:[%s9 + $0x2d4] sm:$0xf]
  %v3561 = vld [vmem:[%s9 + $0x2d8] sm:$0xff]
  %v3562 = vld [vmem:[%s9 + $0x2e0] sm:$0xff]
  %v3563 = vld [vmem:[%s9 + $0x2e8] sm:$0xff]
  %v3564 = vld [vmem:[%s9 + $0x2f0] sm:$0xf]
  %v3565 = vld [vmem:[%s9 + $0x2f4] sm:$0xff]
  %v3566 = vld [vmem:[%s9 + $0x2fc] sm:$0xff]
  %v3567 = vld [vmem:[%s9 + $0x304] sm:$0xff]
  %v3568 = vld [vmem:[%s9 + $0x30c] sm:$0xf]
  %v3569 = vld [vmem:[%s9 + $0x310] sm:$0xff]
  %v3570 = vld [vmem:[%s9 + $0x318] sm:$0xff]
  %v3571 = vld [vmem:[%s9 + $0x320] sm:$0xff]
  %v3572 = vld [vmem:[%s9 + $0x328] sm:$0xf]
  %v3573 = vld [vmem:[%s9 + $0x32c] sm:$0xff]
  %v3574 = vld [vmem:[%s9 + $0x334] sm:$0xff]
  %v3575 = vld [vmem:[%s9 + $0x33c] sm:$0xff]
  %v3576 = vld [vmem:[%s9 + $0x344] sm:$0xf]
  %v3577 = vld [vmem:[%s9 + $0x348] sm:$0xff]
  %v3578 = vld [vmem:[%s9 + $0x350] sm:$0xff]
  %v3579 = vld [vmem:[%s9 + $0x358] sm:$0xff]
  %v3580 = vld [vmem:[%s9 + $0x360] sm:$0xf]
  %v3581 = vld [vmem:[%s9 + $0x364] sm:$0xff]
  %v3582 = vld [vmem:[%s9 + $0x36c] sm:$0xff]
  %v3583 = vld [vmem:[%s9 + $0x374] sm:$0xff]
  %v3584 = vld [vmem:[%s9 + $0x37c] sm:$0xf]
  %v3585 = vld [vmem:[%s9 + $0x380] sm:$0xff]
  %v3586 = vld [vmem:[%s9 + $0x388] sm:$0xff]
  %v3587 = vld [vmem:[%s9 + $0x390] sm:$0xff]
  %v3588 = vld [vmem:[%s9 + $0x398] sm:$0xf]
  %v3589 = vld [vmem:[%s9 + $0x39c] sm:$0xff]
  %v3590 = vld [vmem:[%s9 + $0x3a4] sm:$0xff]
  %v3591 = vld [vmem:[%s9 + $0x3ac] sm:$0xff]
  %v3592 = vld [vmem:[%s9 + $0x3b4] sm:$0xf]
  %v3593 = vld [vmem:[%s9 + $0x3b8] sm:$0xff]
  %v3594 = vld [vmem:[%s9 + $0x3c0] sm:$0xff]
  %v3595 = vld [vmem:[%s9 + $0x3c8] sm:$0xff]
  %v3596 = vld [vmem:[%s9 + $0x3d0] sm:$0xf]
  %v3597 = vld [vmem:[%s9 + $0x3d4] sm:$0xff]
  %v3598 = vld [vmem:[%s9 + $0x3dc] sm:$0xff]
  %v3599 = vld [vmem:[%s9 + $0x3e4] sm:$0xff]
  %v3600 = vld [vmem:[%s9 + $0x3ec] sm:$0xf]
  %v3601 = vld [vmem:[%s9 + $0x3f0] sm:$0xff]
  %v3602 = vld [vmem:[%s9 + $0x3f8] sm:$0xff]
  %v3603 = vld [vmem:[%s9 + $0x400] sm:$0xff]
  %v3604 = vld [vmem:[%s9 + $0x408] sm:$0xf]
  %v3605 = vld [vmem:[%s9 + $0x40c] sm:$0xff]
  %v3606 = vld [vmem:[%s9 + $0x414] sm:$0xff]
  %v3607 = vld [vmem:[%s9 + $0x41c] sm:$0xff]
  %v3608 = vld [vmem:[%s9 + $0x424] sm:$0xf]
  %v3609 = vld [vmem:[%s9 + $0x428] sm:$0xff]
  %v3610 = vld [vmem:[%s9 + $0x430] sm:$0xff]
  %v3611 = vld [vmem:[%s9 + $0x438] sm:$0xff]
  %v3612 = vld [vmem:[%s9 + $0x440] sm:$0xf]
  %v3613 = vld [vmem:[%s9 + $0x444] sm:$0xff]
  %v3614 = vld [vmem:[%s9 + $0x44c] sm:$0xff]
  %v3615 = vld [vmem:[%s9 + $0x454] sm:$0xff]
  %v3616 = vld [vmem:[%s9 + $0x45c] sm:$0xf]
  %v3617 = vld [vmem:[%s9 + $0x460] sm:$0xff]
  %v3618 = vld [vmem:[%s9 + $0x468] sm:$0xff]
  %v3619 = vld [vmem:[%s9 + $0x470] sm:$0xff]
  %v3620 = vld [vmem:[%s9 + $0x478] sm:$0xf]
  %v3621 = vld [vmem:[%s9 + $0x47c] sm:$0xff]
  %v3622 = vld [vmem:[%s9 + $0x484] sm:$0xff]
  %v3623 = vld [vmem:[%s9 + $0x48c] sm:$0xff]
  %v3624 = vld [vmem:[%s9 + $0x494] sm:$0xf]
  %v3625 = vld [vmem:[%s9 + $0x498] sm:$0xff]
  %v3626 = vld [vmem:[%s9 + $0x4a0] sm:$0xff]
  %v3627 = vld [vmem:[%s9 + $0x4a8] sm:$0xff]
  %v3628 = vld [vmem:[%s9 + $0x4b0] sm:$0xf]
  %v3629 = vld [vmem:[%s9 + $0x4b4] sm:$0xff]
  %v3630 = vld [vmem:[%s9 + $0x4bc] sm:$0xff]
  %v3631 = vld [vmem:[%s9 + $0x4c4] sm:$0xff]
  %v3632 = vld [vmem:[%s9 + $0x4cc] sm:$0xf]
  %v3633 = vld [vmem:[%s9 + $0x4d0] sm:$0xff]
  %v3634 = vld [vmem:[%s9 + $0x4d8] sm:$0xff]
  %v3635 = vld [vmem:[%s9 + $0x4e0] sm:$0xff]
  %v3636 = vld [vmem:[%s9 + $0x4e8] sm:$0xf]
  %v3637 = vld [vmem:[%s9 + $0x4ec] sm:$0xff]
  %v3638 = vld [vmem:[%s9 + $0x4f4] sm:$0xff]
  %v3639 = vld [vmem:[%s9 + $0x4fc] sm:$0xff]
  %v3640 = vld [vmem:[%s9 + $0x504] sm:$0xf]
  %v3641 = vld [vmem:[%s9 + $0x508] sm:$0xff]
  %v3642 = vld [vmem:[%s9 + $0x510] sm:$0xff]
  %v3643 = vld [vmem:[%s9 + $0x518] sm:$0xff]
  %v3644 = vld [vmem:[%s9 + $0x520] sm:$0xf]
  %v3645 = vld [vmem:[%s9 + $0x524] sm:$0xff]
  %v3646 = vld [vmem:[%s9 + $0x52c] sm:$0xff]
  %v3647 = vld [vmem:[%s9 + $0x534] sm:$0xff]
  %v3648 = vld [vmem:[%s9 + $0x53c] sm:$0xf]
  %v3649 = vld [vmem:[%s9 + $0x540] sm:$0xff]
  %v3650 = vld [vmem:[%s9 + $0x548] sm:$0xff]
  %v3651 = vld [vmem:[%s9 + $0x550] sm:$0xff]
  %v3652 = vld [vmem:[%s9 + $0x558] sm:$0xf]
  %v3653 = vld [vmem:[%s9 + $0x55c] sm:$0xff]
  %v3654 = vld [vmem:[%s9 + $0x564] sm:$0xff]
  %v3655 = vld [vmem:[%s9 + $0x56c] sm:$0xff]
  %v3656 = vld [vmem:[%s9 + $0x574] sm:$0xf]
  %v3657 = vld [vmem:[%s9 + $0x578] sm:$0xff]
  %v3658 = vld [vmem:[%s9 + $0x580] sm:$0xff]
  %v3659 = vld [vmem:[%s9 + $0x588] sm:$0xff]
  %v3660 = vld [vmem:[%s9 + $0x590] sm:$0xf]
  %v3661 = vld [vmem:[%s9 + $0x594] sm:$0xff]
  %v3662 = vld [vmem:[%s9 + $0x59c] sm:$0xff]
  %v3663 = vld [vmem:[%s9 + $0x5a4] sm:$0xff]
  %v3664 = vld [vmem:[%s9 + $0x5ac] sm:$0xf]
  %v3665 = vld [vmem:[%s9 + $0x5b0] sm:$0xff]
  %v3666 = vld [vmem:[%s9 + $0x5b8] sm:$0xff]
  %v3667 = vld [vmem:[%s9 + $0x5c0] sm:$0xff]
  %v3668 = vld [vmem:[%s9 + $0x5c8] sm:$0xf]
  %v3669 = vld [vmem:[%s9 + $0x5cc] sm:$0xff]
  %v3670 = vld [vmem:[%s9 + $0x5d4] sm:$0xff]
  %v3671 = vld [vmem:[%s9 + $0x5dc] sm:$0xff]
  %v3672 = vld [vmem:[%s9 + $0x5e4] sm:$0xf]
  %v3673 = vld [vmem:[%s9 + $0x5e8] sm:$0xff]
  %v3674 = vld [vmem:[%s9 + $0x5f0] sm:$0xff]
  %v3675 = vld [vmem:[%s9 + $0x5f8] sm:$0xff]
  %v3676 = vld [vmem:[%s9 + $0x600] sm:$0xf]
  %v3677 = vld [vmem:[%s9 + $0x604] sm:$0xff]
  %v3678 = vld [vmem:[%s9 + $0x60c] sm:$0xff]
  %v3679 = vld [vmem:[%s9 + $0x614] sm:$0xff]
  %v3680 = vld [vmem:[%s9 + $0x61c] sm:$0xf]
  %v3681 = vld [vmem:[%s9 + $0x620] sm:$0xff]
  %v3682 = vld [vmem:[%s9 + $0x628] sm:$0xff]
  %v3683 = vld [vmem:[%s9 + $0x630] sm:$0xff]
  %v3684 = vld [vmem:[%s9 + $0x638] sm:$0xf]
  %v3685 = vld [vmem:[%s9 + $0x63c] sm:$0xff]
  %v3686 = vld [vmem:[%s9 + $0x644] sm:$0xff]
  %v3687 = vld [vmem:[%s9 + $0x64c] sm:$0xff]
  %v3688 = vld [vmem:[%s9 + $0x654] sm:$0xf]
  %v3689 = vld [vmem:[%s9 + $0x658] sm:$0xff]
  %v3690 = vld [vmem:[%s9 + $0x660] sm:$0xff]
  %v3691 = vld [vmem:[%s9 + $0x668] sm:$0xff]
  %v3692 = vld [vmem:[%s9 + $0x670] sm:$0xf]
  %v3693 = vld [vmem:[%s9 + $0x674] sm:$0xff]
  %v3694 = vld [vmem:[%s9 + $0x67c] sm:$0xff]
  %v3695 = vld [vmem:[%s9 + $0x684] sm:$0xff]
  %v3696 = vld [vmem:[%s9 + $0x68c] sm:$0xf]
  %v3697 = vld [vmem:[%s9 + $0x690] sm:$0xff]
  %v3698 = vld [vmem:[%s9 + $0x698] sm:$0xff]
  %v3699 = vld [vmem:[%s9 + $0x6a0] sm:$0xff]
  %v3700 = vld [vmem:[%s9 + $0x6a8] sm:$0xf]
  %v3701 = vld [vmem:[%s9 + $0x6ac] sm:$0xff]
  %v3702 = vld [vmem:[%s9 + $0x6b4] sm:$0xff]
  %v3703 = vld [vmem:[%s9 + $0x6bc] sm:$0xff]
  %v3704 = vld [vmem:[%s9 + $0x6c4] sm:$0xf]
  %v3705 = vld [vmem:[%s9 + $0x6c8] sm:$0xff]
  %v3706 = vld [vmem:[%s9 + $0x6d0] sm:$0xff]
  %v3707 = vld [vmem:[%s9 + $0x6d8] sm:$0xff]
  %v3708 = vld [vmem:[%s9 + $0x6e0] sm:$0xf]
  %v3709 = vld [vmem:[%s9 + $0x6e4] sm:$0xff]
  %v3710 = vld [vmem:[%s9 + $0x6ec] sm:$0xff]
  %v3711 = vld [vmem:[%s9 + $0x6f4] sm:$0xff]
  %v3712 = vld [vmem:[%s9 + $0x6fc] sm:$0xf]
  %v3713 = vld [vmem:[%s9 + $0x700] sm:$0xff]
  %v3714 = vld [vmem:[%s9 + $0x708] sm:$0xff]
  %v3715 = vld [vmem:[%s9 + $0x710] sm:$0xff]
  %v3716 = vld [vmem:[%s9 + $0x718] sm:$0xf]
  %v3717 = vld [vmem:[%s9 + $0x71c] sm:$0xff]
  %v3718 = vld [vmem:[%s9 + $0x724] sm:$0xff]
  %v3719 = vld [vmem:[%s9 + $0x72c] sm:$0xff]
  %v3720 = vld [vmem:[%s9 + $0x734] sm:$0xf]
  %v3721 = vld [vmem:[%s9 + $0x738] sm:$0xff]
  %v3722 = vld [vmem:[%s9 + $0x740] sm:$0xff]
  %v3723 = vld [vmem:[%s9 + $0x748] sm:$0xff]
  %v3724 = vld [vmem:[%s9 + $0x750] sm:$0xf]
  %v3725 = vld [vmem:[%s9 + $0x754] sm:$0xff]
  %v3726 = vld [vmem:[%s9 + $0x75c] sm:$0xff]
  %v3727 = vld [vmem:[%s9 + $0x764] sm:$0xff]
  %v3728 = vld [vmem:[%s9 + $0x76c] sm:$0xf]
  %v3729 = vld [vmem:[%s9 + $0x770] sm:$0xff]
  %v3730 = vld [vmem:[%s9 + $0x778] sm:$0xff]
  %v3731 = vld [vmem:[%s9 + $0x780] sm:$0xff]
  %v3732 = vld [vmem:[%s9 + $0x788] sm:$0xf]
  %v3733 = vld [vmem:[%s9 + $0x78c] sm:$0xff]
  %v3734 = vld [vmem:[%s9 + $0x794] sm:$0xff]
  %v3735 = vld [vmem:[%s9 + $0x79c] sm:$0xff]
  %v3736 = vld [vmem:[%s9 + $0x7a4] sm:$0xf]
  %v3737 = vld [vmem:[%s9 + $0x7a8] sm:$0xff]
  %v3738 = vld [vmem:[%s9 + $0x7b0] sm:$0xff]
  %v3739 = vld [vmem:[%s9 + $0x7b8] sm:$0xff]
  %v3740 = vld [vmem:[%s9 + $0x7c0] sm:$0xf]
  %v3741 = vld [vmem:[%s9 + $0x7c4] sm:$0xff]
  %v3742 = vld [vmem:[%s9 + $0x7cc] sm:$0xff]
  %v3743 = vld [vmem:[%s9 + $0x7d4] sm:$0xff]
  %v3744 = vld [vmem:[%s9 + $0x7dc] sm:$0xf]
  %v3745 = vld [vmem:[%s9 + $0x7e0] sm:$0xff]
  %v3746 = vld [vmem:[%s9 + $0x7e8] sm:$0xff]
  %v3747 = vld [vmem:[%s9 + $0x7f0] sm:$0xff]
  %v3748 = vld [vmem:[%s9 + $0x7f8] sm:$0xf]
  %v3749 = vld [vmem:[%s9 + $0x7fc] sm:$0xff]
  %v3750 = vld [vmem:[%s9 + $0x804] sm:$0xff]
  %v3751 = vld [vmem:[%s9 + $0x80c] sm:$0xff]
  %v3752 = vld [vmem:[%s9 + $0x814] sm:$0xf]
  %v3753 = vld [vmem:[%s9 + $0x818] sm:$0xff]
  %v3754 = vld [vmem:[%s9 + $0x820] sm:$0xff]
  %v3755 = vld [vmem:[%s9 + $0x828] sm:$0xff]
  %v3756 = vld [vmem:[%s9 + $0x830] sm:$0xf]
  %v3757 = vld [vmem:[%s9 + $0x834] sm:$0xff]
  %v3758 = vld [vmem:[%s9 + $0x83c] sm:$0xff]
  %v3759 = vld [vmem:[%s9 + $0x844] sm:$0xff]
  %v3760 = vld [vmem:[%s9 + $0x84c] sm:$0xf]
  %v3761 = vld [vmem:[%s9 + $0x850] sm:$0xff]
  %v3762 = vld [vmem:[%s9 + $0x858] sm:$0xff]
  %v3763 = vld [vmem:[%s9 + $0x860] sm:$0xff]
  %v3764 = vld [vmem:[%s9 + $0x868] sm:$0xf]
  %v3765 = vld [vmem:[%s9 + $0x86c] sm:$0xff]
  %v3766 = vld [vmem:[%s9 + $0x874] sm:$0xff]
  %v3767 = vld [vmem:[%s9 + $0x87c] sm:$0xff]
  %v3768 = vld [vmem:[%s9 + $0x884] sm:$0xf]
  %v3769 = vld [vmem:[%s9 + $0x888] sm:$0xff]
  %v3770 = vld [vmem:[%s9 + $0x890] sm:$0xff]
  %v3771 = vld [vmem:[%s9 + $0x898] sm:$0xff]
  %v3772 = vld [vmem:[%s9 + $0x8a0] sm:$0xf]
  %v3773 = vld [vmem:[%s9 + $0x8a4] sm:$0xff]
  %v3774 = vld [vmem:[%s9 + $0x8ac] sm:$0xff]
  %v3775 = vld [vmem:[%s9 + $0x8b4] sm:$0xff]
  %v3776 = vld [vmem:[%s9 + $0x8bc] sm:$0xf]
  %v3777 = vld [vmem:[%s9 + $0x8c0] sm:$0xff]
  %v3778 = vld [vmem:[%s9 + $0x8c8] sm:$0xff]
  %v3779 = vld [vmem:[%s9 + $0x8d0] sm:$0xff]
  %v3780 = vld [vmem:[%s9 + $0x8d8] sm:$0xf]
  %v3781 = vld [vmem:[%s9 + $0x8dc] sm:$0xff]
  %v3782 = vld [vmem:[%s9 + $0x8e4] sm:$0xff]
  %v3783 = vld [vmem:[%s9 + $0x8ec] sm:$0xff]
  %v3784 = vld [vmem:[%s9 + $0x8f4] sm:$0xf]
  %v3785 = vld [vmem:[%s9 + $0x8f8] sm:$0xff]
  %v3786 = vld [vmem:[%s9 + $0x900] sm:$0xff]
  %v3787 = vld [vmem:[%s9 + $0x908] sm:$0xff]
  %v3788 = vld [vmem:[%s9 + $0x910] sm:$0xf]
  %v3789 = vld [vmem:[%s9 + $0x914] sm:$0xff]
  %v3790 = vld [vmem:[%s9 + $0x91c] sm:$0xff]
  %v3791 = vld [vmem:[%s9 + $0x924] sm:$0xff]
  %v3792 = vld [vmem:[%s9 + $0x92c] sm:$0xf]
  %v3793 = vld [vmem:[%s9 + $0x930] sm:$0xff]
  %v3794 = vld [vmem:[%s9 + $0x938] sm:$0xff]
  %v3795 = vld [vmem:[%s9 + $0x940] sm:$0xff]
  %v3796 = vld [vmem:[%s9 + $0x948] sm:$0xf]
  %v3797 = vld [vmem:[%s9 + $0x94c] sm:$0xff]
  %v3798 = vld [vmem:[%s9 + $0x954] sm:$0xff]
  %v3799 = vld [vmem:[%s9 + $0x95c] sm:$0xff]
  %v3800 = vld [vmem:[%s9 + $0x964] sm:$0xf]
  %v3801 = vld [vmem:[%s9 + $0x968] sm:$0xff]
  %v3802 = vld [vmem:[%s9 + $0x970] sm:$0xff]
  %v3803 = vld [vmem:[%s9 + $0x978] sm:$0xff]
  %v3804 = vld [vmem:[%s9 + $0x980] sm:$0xf]
  %v3805 = vld [vmem:[%s9 + $0x984] sm:$0xff]
  %v3806 = vld [vmem:[%s9 + $0x98c] sm:$0xff]
  %v3807 = vld [vmem:[%s9 + $0x994] sm:$0xff]
  %v3808 = vld [vmem:[%s9 + $0x99c] sm:$0xf]
  %v3809 = vld [vmem:[%s9 + $0x9a0] sm:$0xff]
  %v3810 = vld [vmem:[%s9 + $0x9a8] sm:$0xff]
  %v3811 = vld [vmem:[%s9 + $0x9b0] sm:$0xff]
  %v3812 = vld [vmem:[%s9 + $0x9b8] sm:$0xf]
  %v3813 = vld [vmem:[%s9 + $0x9bc] sm:$0xff]
  %v3814 = vld [vmem:[%s9 + $0x9c4] sm:$0xff]
  %v3815 = vld [vmem:[%s9 + $0x9cc] sm:$0xff]
  %v3816 = vld [vmem:[%s9 + $0x9d4] sm:$0xf]
  %v3817 = vld [vmem:[%s9 + $0x9d8] sm:$0xff]
  %v3818 = vld [vmem:[%s9 + $0x9e0] sm:$0xff]
  %v3819 = vld [vmem:[%s9 + $0x9e8] sm:$0xff]
  %v3820 = vld [vmem:[%s9 + $0x9f0] sm:$0xf]
  %v3821 = vld [vmem:[%s9 + $0x9f4] sm:$0xff]
  %v3822 = vld [vmem:[%s9 + $0x9fc] sm:$0xff]
  %v3823 = vld [vmem:[%s9 + $0xa04] sm:$0xff]
  %v3824 = vld [vmem:[%s9 + $0xa0c] sm:$0xf]
  %v3825 = vld [vmem:[%s9 + $0xa10] sm:$0xff]
  %v3826 = vld [vmem:[%s9 + $0xa18] sm:$0xff]
  %v3827 = vld [vmem:[%s9 + $0xa20] sm:$0xff]
  %v3828 = vld [vmem:[%s9 + $0xa28] sm:$0xf]
  %v3829 = vld [vmem:[%s9 + $0xa2c] sm:$0xff]
  %v3830 = vld [vmem:[%s9 + $0xa34] sm:$0xff]
  %v3831 = vld [vmem:[%s9 + $0xa3c] sm:$0xff]
  %v3832 = vld [vmem:[%s9 + $0xa44] sm:$0xf]
  %v3833 = vld [vmem:[%s9 + $0xa48] sm:$0xff]
  %v3834 = vld [vmem:[%s9 + $0xa50] sm:$0xff]
  %v3835 = vld [vmem:[%s9 + $0xa58] sm:$0xff]
  %v3836 = vld [vmem:[%s9 + $0xa60] sm:$0xf]
  %v3837 = vld [vmem:[%s9 + $0xa64] sm:$0xff]
  %v3838 = vld [vmem:[%s9 + $0xa6c] sm:$0xff]
  %v3839 = vld [vmem:[%s9 + $0xa74] sm:$0xff]
  %v3840 = vld [vmem:[%s9 + $0xa7c] sm:$0xf]
  %v3841 = vld [vmem:[%s9 + $0xa80] sm:$0xff]
  %v3842 = vld [vmem:[%s9 + $0xa88] sm:$0xff]
  %v3843 = vld [vmem:[%s9 + $0xa90] sm:$0xff]
  %v3844 = vld [vmem:[%s9 + $0xa98] sm:$0xf]
  %v3845 = vld [vmem:[%s9 + $0xa9c] sm:$0xff]
  %v3846 = vld [vmem:[%s9 + $0xaa4] sm:$0xff]
  %v3847 = vld [vmem:[%s9 + $0xaac] sm:$0xff]
  %v3848 = vld [vmem:[%s9 + $0xab4] sm:$0xf]
  %v3849 = vld [vmem:[%s9 + $0xab8] sm:$0xff]
  %v3850 = vld [vmem:[%s9 + $0xac0] sm:$0xff]
  %v3851 = vld [vmem:[%s9 + $0xac8] sm:$0xff]
  %v3852 = vld [vmem:[%s9 + $0xad0] sm:$0xf]
  %v3853 = vld [vmem:[%s9 + $0xad4] sm:$0xff]
  %v3854 = vld [vmem:[%s9 + $0xadc] sm:$0xff]
  %v3855 = vld [vmem:[%s9 + $0xae4] sm:$0xff]
  %v3856 = vld [vmem:[%s9 + $0xaec] sm:$0xf]
  %v3857 = vld [vmem:[%s9 + $0xaf0] sm:$0xff]
  %v3858 = vld [vmem:[%s9 + $0xaf8] sm:$0xff]
  %v3859 = vld [vmem:[%s9 + $0xb00] sm:$0xff]
  %v3860 = vld [vmem:[%s9 + $0xb08] sm:$0xf]
  %v3861 = vld [vmem:[%s9 + $0xb0c] sm:$0xff]
  %v3862 = vld [vmem:[%s9 + $0xb14] sm:$0xff]
  %v3863 = vld [vmem:[%s9 + $0xb1c] sm:$0xff]
  %v3864 = vld [vmem:[%s9 + $0xb24] sm:$0xf]
  %v3865 = vld [vmem:[%s9 + $0xb28] sm:$0xff]
  %v3866 = vld [vmem:[%s9 + $0xb30] sm:$0xff]
  %v3867 = vld [vmem:[%s9 + $0xb38] sm:$0xff]
  %v3868 = vld [vmem:[%s9 + $0xb40] sm:$0xf]
  %v3869 = vld [vmem:[%s9 + $0xb44] sm:$0xff]
  %v3870 = vld [vmem:[%s9 + $0xb4c] sm:$0xff]
  %v3871 = vld [vmem:[%s9 + $0xb54] sm:$0xff]
  %v3872 = vld [vmem:[%s9 + $0xb5c] sm:$0xf]
  %v3873 = vld [vmem:[%s9 + $0xb60] sm:$0xff]
  %v3874 = vld [vmem:[%s9 + $0xb68] sm:$0xff]
  %v3875 = vld [vmem:[%s9 + $0xb70] sm:$0xff]
  %v3876 = vld [vmem:[%s9 + $0xb78] sm:$0xf]
  %v3877 = vld [vmem:[%s9 + $0xb7c] sm:$0xff]
  %v3878 = vld [vmem:[%s9 + $0xb84] sm:$0xff]
  %v3879 = vld [vmem:[%s9 + $0xb8c] sm:$0xff]
  %v3880 = vld [vmem:[%s9 + $0xb94] sm:$0xf]
  %v3881 = vld [vmem:[%s9 + $0xb98] sm:$0xff]
  %v3882 = vld [vmem:[%s9 + $0xba0] sm:$0xff]
  %v3883 = vld [vmem:[%s9 + $0xba8] sm:$0xff]
  %v3884 = vld [vmem:[%s9 + $0xbb0] sm:$0xf]
  %v3885 = vld [vmem:[%s9 + $0xbb4] sm:$0xff]
  %v3886 = vld [vmem:[%s9 + $0xbbc] sm:$0xff]
  %v3887 = vld [vmem:[%s9 + $0xbc4] sm:$0xff]
  %v3888 = vld [vmem:[%s9 + $0xbcc] sm:$0xf]
  %v3889 = vld [vmem:[%s9 + $0xbd0] sm:$0xff]
  %v3890 = vld [vmem:[%s9 + $0xbd8] sm:$0xff]
  %v3891 = vld [vmem:[%s9 + $0xbe0] sm:$0xff]
  %v3892 = vld [vmem:[%s9 + $0xbe8] sm:$0xf]
  %v3893 = vld [vmem:[%s9 + $0xbec] sm:$0xff]
  %v3894 = vld [vmem:[%s9 + $0xbf4] sm:$0xff]
  %v3895 = vld [vmem:[%s9 + $0xbfc] sm:$0xff]
  %v3896 = vld [vmem:[%s9 + $0xc04] sm:$0xf]
  %v3897 = vld [vmem:[%s9 + $0xc08] sm:$0xff]
  %v3898 = vld [vmem:[%s9 + $0xc10] sm:$0xff]
  %v3899 = vld [vmem:[%s9 + $0xc18] sm:$0xff]
  %v3900 = vld [vmem:[%s9 + $0xc20] sm:$0xf]
  %v3901 = vld [vmem:[%s9 + $0xc24] sm:$0xff]
  %v3902 = vld [vmem:[%s9 + $0xc2c] sm:$0xff]
  %v3903 = vld [vmem:[%s9 + $0xc34] sm:$0xff]
  %v3904 = vld [vmem:[%s9 + $0xc3c] sm:$0xf]
  %v3905 = vld [vmem:[%s9 + $0xc40] sm:$0xff]
  %v3906 = vld [vmem:[%s9 + $0xc48] sm:$0xff]
  %v3907 = vld [vmem:[%s9 + $0xc50] sm:$0xff]
  %v3908 = vld [vmem:[%s9 + $0xc58] sm:$0xf]
  %v3909 = vld [vmem:[%s9 + $0xc5c] sm:$0xff]
  %v3910 = vld [vmem:[%s9 + $0xc64] sm:$0xff]
  %v3911 = vld [vmem:[%s9 + $0xc6c] sm:$0xff]
  %v3912 = vld [vmem:[%s9 + $0xc74] sm:$0xf]
  %v3913 = vld [vmem:[%s9 + $0xc78] sm:$0xff]
  %v3914 = vld [vmem:[%s9 + $0xc80] sm:$0xff]
  %v3915 = vld [vmem:[%s9 + $0xc88] sm:$0xff]
  %v3916 = vld [vmem:[%s9 + $0xc90] sm:$0xf]
  %v3917 = vld [vmem:[%s9 + $0xc94] sm:$0xff]
  %v3918 = vld [vmem:[%s9 + $0xc9c] sm:$0xff]
  %v3919 = vld [vmem:[%s9 + $0xca4] sm:$0xff]
  %v3920 = vld [vmem:[%s9 + $0xcac] sm:$0xf]
  %v3921 = vld [vmem:[%s9 + $0xcb0] sm:$0xff]
  %v3922 = vld [vmem:[%s9 + $0xcb8] sm:$0xff]
  %v3923 = vld [vmem:[%s9 + $0xcc0] sm:$0xff]
  %v3924 = vld [vmem:[%s9 + $0xcc8] sm:$0xf]
  %v3925 = vld [vmem:[%s9 + $0xccc] sm:$0xff]
  %v3926 = vld [vmem:[%s9 + $0xcd4] sm:$0xff]
  %v3927 = vld [vmem:[%s9 + $0xcdc] sm:$0xff]
  %v3928 = vld [vmem:[%s9 + $0xce4] sm:$0xf]
  %v3929 = vld [vmem:[%s9 + $0xce8] sm:$0xff]
  %v3930 = vld [vmem:[%s9 + $0xcf0] sm:$0xff]
  %v3931 = vld [vmem:[%s9 + $0xcf8] sm:$0xff]
  %v3932 = vld [vmem:[%s9 + $0xd00] sm:$0xf]
  %v3933 = vld [vmem:[%s9 + $0xd04] sm:$0xff]
  %v3934 = vld [vmem:[%s9 + $0xd0c] sm:$0xff]
  %v3935 = vld [vmem:[%s9 + $0xd14] sm:$0xff]
  %v3936 = vld [vmem:[%s9 + $0xd1c] sm:$0xf]
  %v3937 = vld [vmem:[%s9 + $0xd20] sm:$0xff]
  %v3938 = vld [vmem:[%s9 + $0xd28] sm:$0xff]
  %v3939 = vld [vmem:[%s9 + $0xd30] sm:$0xff]
  %v3940 = vld [vmem:[%s9 + $0xd38] sm:$0xf]
  %v3941 = vld [vmem:[%s9 + $0xd3c] sm:$0xff]
  %v3942 = vld [vmem:[%s9 + $0xd44] sm:$0xff]
  %v3943 = vld [vmem:[%s9 + $0xd4c] sm:$0xff]
  %v3944 = vld [vmem:[%s9 + $0xd54] sm:$0xf]
  %v3945 = vld [vmem:[%s9 + $0xd58] sm:$0xff]
  %v3946 = vld [vmem:[%s9 + $0xd60] sm:$0xff]
  %v3947 = vld [vmem:[%s9 + $0xd68] sm:$0xff]
  %v3948 = vld [vmem:[%s9 + $0xd70] sm:$0xf]
  %v3949 = vld [vmem:[%s9 + $0xd74] sm:$0xff]
  %v3950 = vld [vmem:[%s9 + $0xd7c] sm:$0xff]
  %v3951 = vld [vmem:[%s9 + $0xd84] sm:$0xff]
  %v3952 = vld [vmem:[%s9 + $0xd8c] sm:$0xf]
  %v3953 = vld [vmem:[%s9 + $0xd90] sm:$0xff]
  %v3954 = vld [vmem:[%s9 + $0xd98] sm:$0xff]
  %v3955 = vld [vmem:[%s9 + $0xda0] sm:$0xff]
  %v3956 = vld [vmem:[%s9 + $0xda8] sm:$0xf]
  %v3957 = vld [vmem:[%s9 + $0xdac] sm:$0xff]
  %v3958 = vld [vmem:[%s9 + $0xdb4] sm:$0xff]
  %v3959 = vld [vmem:[%s9 + $0xdbc] sm:$0xff]
  %v3960 = vld [vmem:[%s9 + $0xdc4] sm:$0xf]
  %v3961 = vld [vmem:[%s9 + $0xdc8] sm:$0xff]
  %v3962 = vld [vmem:[%s9 + $0xdd0] sm:$0xff]
  %v3963 = vld [vmem:[%s9 + $0xdd8] sm:$0xff]
  %v3964 = vld [vmem:[%s9 + $0xde0] sm:$0xf]
  %v3965 = vld [vmem:[%s9 + $0xde4] sm:$0xff]
  %v3966 = vld [vmem:[%s9 + $0xdec] sm:$0xff]
  %v3967 = vld [vmem:[%s9 + $0xdf4] sm:$0xff]
  %v3968 = vld [vmem:[%s9 + $0xdfc] sm:$0xf]
  %v3969 = vld [vmem:[%s10] sm:$0x7f]
  %v3971 = vlaneseq
  %v3972 = vshrl.u32 %v3971, 7
  %v3973 = vsub.s32 0, %v3972
  %v3974 = vrot.slane %v3969, %v3973
  %v3975 = vlaneseq
  %v3976 = vshrl.u32 %v3975, 7
  %v3977 = vsub.s32 1, %v3976
  %v3978 = vrot.slane %v3969, %v3977
  %v3979 = vlaneseq
  %v3980 = vshrl.u32 %v3979, 7
  %v3981 = vsub.s32 2, %v3980
  %v3982 = vrot.slane %v3969, %v3981
  %v3983 = vlaneseq
  %v3984 = vshrl.u32 %v3983, 7
  %v3985 = vsub.s32 3, %v3984
  %v3986 = vrot.slane %v3969, %v3985
  %v3987 = vlaneseq
  %v3988 = vshrl.u32 %v3987, 7
  %v3989 = vsub.s32 4, %v3988
  %v3990 = vrot.slane %v3969, %v3989
  %v3991 = vlaneseq
  %v3992 = vshrl.u32 %v3991, 7
  %v3993 = vsub.s32 5, %v3992
  %v3994 = vrot.slane %v3969, %v3993
  %v3995 = vlaneseq
  %v3996 = vshrl.u32 %v3995, 7
  %v3997 = vsub.s32 6, %v3996
  %v3998 = vrot.slane %v3969, %v3997
  %v4518 = vunpack.c.l.b16 %v3457
  %v4519 = vunpack.c.h.b16 %v3457
  %v4520 = vunpack.c.l.b16 %v3458
  %v4521 = vunpack.c.h.b16 %v3458
  %v4522 = vunpack.c.l.b16 %v3459
  %v4523 = vunpack.c.h.b16 %v3459
  %v4524 = vunpack.c.l.b16 %v3460
  %v4525 = vunpack.c.l.b16 %v3461
  %v4526 = vunpack.c.h.b16 %v3461
  %v4527 = vunpack.c.l.b16 %v3462
  %v4528 = vunpack.c.h.b16 %v3462
  %v4529 = vunpack.c.l.b16 %v3463
  %v4530 = vunpack.c.h.b16 %v3463
  %v4531 = vunpack.c.l.b16 %v3464
  %v4532 = vunpack.c.l.b16 %v3465
  %v4533 = vunpack.c.h.b16 %v3465
  %v4534 = vunpack.c.l.b16 %v3466
  %v4535 = vunpack.c.h.b16 %v3466
  %v4536 = vunpack.c.l.b16 %v3467
  %v4537 = vunpack.c.h.b16 %v3467
  %v4538 = vunpack.c.l.b16 %v3468
  %v4539 = vunpack.c.l.b16 %v3469
  %v4540 = vunpack.c.h.b16 %v3469
  %v4541 = vunpack.c.l.b16 %v3470
  %v4542 = vunpack.c.h.b16 %v3470
  %v4543 = vunpack.c.l.b16 %v3471
  %v4544 = vunpack.c.h.b16 %v3471
  %v4545 = vunpack.c.l.b16 %v3472
  %v4546 = vunpack.c.l.b16 %v3473
  %v4547 = vunpack.c.h.b16 %v3473
  %v4548 = vunpack.c.l.b16 %v3474
  %v4549 = vunpack.c.h.b16 %v3474
  %v4550 = vunpack.c.l.b16 %v3475
  %v4551 = vunpack.c.h.b16 %v3475
  %v4552 = vunpack.c.l.b16 %v3476
  %v4553 = vunpack.c.l.b16 %v3477
  %v4554 = vunpack.c.h.b16 %v3477
  %v4555 = vunpack.c.l.b16 %v3478
  %v4556 = vunpack.c.h.b16 %v3478
  %v4557 = vunpack.c.l.b16 %v3479
  %v4558 = vunpack.c.h.b16 %v3479
  %v4559 = vunpack.c.l.b16 %v3480
  %v4560 = vunpack.c.l.b16 %v3481
  %v4561 = vunpack.c.h.b16 %v3481
  %v4562 = vunpack.c.l.b16 %v3482
  %v4563 = vunpack.c.h.b16 %v3482
  %v4564 = vunpack.c.l.b16 %v3483
  %v4565 = vunpack.c.h.b16 %v3483
  %v4566 = vunpack.c.l.b16 %v3484
  %v4567 = vunpack.c.l.b16 %v3485
  %v4568 = vunpack.c.h.b16 %v3485
  %v4569 = vunpack.c.l.b16 %v3486
  %v4570 = vunpack.c.h.b16 %v3486
  %v4571 = vunpack.c.l.b16 %v3487
  %v4572 = vunpack.c.h.b16 %v3487
  %v4573 = vunpack.c.l.b16 %v3488
  %v4574 = vunpack.c.l.b16 %v3489
  %v4575 = vunpack.c.h.b16 %v3489
  %v4576 = vunpack.c.l.b16 %v3490
  %v4577 = vunpack.c.h.b16 %v3490
  %v4578 = vunpack.c.l.b16 %v3491
  %v4579 = vunpack.c.h.b16 %v3491
  %v4580 = vunpack.c.l.b16 %v3492
  %v4581 = vunpack.c.l.b16 %v3493
  %v4582 = vunpack.c.h.b16 %v3493
  %v4583 = vunpack.c.l.b16 %v3494
  %v4584 = vunpack.c.h.b16 %v3494
  %v4585 = vunpack.c.l.b16 %v3495
  %v4586 = vunpack.c.h.b16 %v3495
  %v4587 = vunpack.c.l.b16 %v3496
  %v4588 = vunpack.c.l.b16 %v3497
  %v4589 = vunpack.c.h.b16 %v3497
  %v4590 = vunpack.c.l.b16 %v3498
  %v4591 = vunpack.c.h.b16 %v3498
  %v4592 = vunpack.c.l.b16 %v3499
  %v4593 = vunpack.c.h.b16 %v3499
  %v4594 = vunpack.c.l.b16 %v3500
  %v4595 = vunpack.c.l.b16 %v3501
  %v4596 = vunpack.c.h.b16 %v3501
  %v4597 = vunpack.c.l.b16 %v3502
  %v4598 = vunpack.c.h.b16 %v3502
  %v4599 = vunpack.c.l.b16 %v3503
  %v4600 = vunpack.c.h.b16 %v3503
  %v4601 = vunpack.c.l.b16 %v3504
  %v4602 = vunpack.c.l.b16 %v3505
  %v4603 = vunpack.c.h.b16 %v3505
  %v4604 = vunpack.c.l.b16 %v3506
  %v4605 = vunpack.c.h.b16 %v3506
  %v4606 = vunpack.c.l.b16 %v3507
  %v4607 = vunpack.c.h.b16 %v3507
  %v4608 = vunpack.c.l.b16 %v3508
  %v4609 = vunpack.c.l.b16 %v3509
  %v4610 = vunpack.c.h.b16 %v3509
  %v4611 = vunpack.c.l.b16 %v3510
  %v4612 = vunpack.c.h.b16 %v3510
  %v4613 = vunpack.c.l.b16 %v3511
  %v4614 = vunpack.c.h.b16 %v3511
  %v4615 = vunpack.c.l.b16 %v3512
  %v4616 = vunpack.c.l.b16 %v3513
  %v4617 = vunpack.c.h.b16 %v3513
  %v4618 = vunpack.c.l.b16 %v3514
  %v4619 = vunpack.c.h.b16 %v3514
  %v4620 = vunpack.c.l.b16 %v3515
  %v4621 = vunpack.c.h.b16 %v3515
  %v4622 = vunpack.c.l.b16 %v3516
  %v4623 = vunpack.c.l.b16 %v3517
  %v4624 = vunpack.c.h.b16 %v3517
  %v4625 = vunpack.c.l.b16 %v3518
  %v4626 = vunpack.c.h.b16 %v3518
  %v4627 = vunpack.c.l.b16 %v3519
  %v4628 = vunpack.c.h.b16 %v3519
  %v4629 = vunpack.c.l.b16 %v3520
  %v4630 = vunpack.c.l.b16 %v3521
  %v4631 = vunpack.c.h.b16 %v3521
  %v4632 = vunpack.c.l.b16 %v3522
  %v4633 = vunpack.c.h.b16 %v3522
  %v4634 = vunpack.c.l.b16 %v3523
  %v4635 = vunpack.c.h.b16 %v3523
  %v4636 = vunpack.c.l.b16 %v3524
  %v4637 = vunpack.c.l.b16 %v3525
  %v4638 = vunpack.c.h.b16 %v3525
  %v4639 = vunpack.c.l.b16 %v3526
  %v4640 = vunpack.c.h.b16 %v3526
  %v4641 = vunpack.c.l.b16 %v3527
  %v4642 = vunpack.c.h.b16 %v3527
  %v4643 = vunpack.c.l.b16 %v3528
  %v4644 = vunpack.c.l.b16 %v3529
  %v4645 = vunpack.c.h.b16 %v3529
  %v4646 = vunpack.c.l.b16 %v3530
  %v4647 = vunpack.c.h.b16 %v3530
  %v4648 = vunpack.c.l.b16 %v3531
  %v4649 = vunpack.c.h.b16 %v3531
  %v4650 = vunpack.c.l.b16 %v3532
  %v4651 = vunpack.c.l.b16 %v3533
  %v4652 = vunpack.c.h.b16 %v3533
  %v4653 = vunpack.c.l.b16 %v3534
  %v4654 = vunpack.c.h.b16 %v3534
  %v4655 = vunpack.c.l.b16 %v3535
  %v4656 = vunpack.c.h.b16 %v3535
  %v4657 = vunpack.c.l.b16 %v3536
  %v4658 = vunpack.c.l.b16 %v3537
  %v4659 = vunpack.c.h.b16 %v3537
  %v4660 = vunpack.c.l.b16 %v3538
  %v4661 = vunpack.c.h.b16 %v3538
  %v4662 = vunpack.c.l.b16 %v3539
  %v4663 = vunpack.c.h.b16 %v3539
  %v4664 = vunpack.c.l.b16 %v3540
  %v4665 = vunpack.c.l.b16 %v3541
  %v4666 = vunpack.c.h.b16 %v3541
  %v4667 = vunpack.c.l.b16 %v3542
  %v4668 = vunpack.c.h.b16 %v3542
  %v4669 = vunpack.c.l.b16 %v3543
  %v4670 = vunpack.c.h.b16 %v3543
  %v4671 = vunpack.c.l.b16 %v3544
  %v4672 = vunpack.c.l.b16 %v3545
  %v4673 = vunpack.c.h.b16 %v3545
  %v4674 = vunpack.c.l.b16 %v3546
  %v4675 = vunpack.c.h.b16 %v3546
  %v4676 = vunpack.c.l.b16 %v3547
  %v4677 = vunpack.c.h.b16 %v3547
  %v4678 = vunpack.c.l.b16 %v3548
  %v4679 = vunpack.c.l.b16 %v3549
  %v4680 = vunpack.c.h.b16 %v3549
  %v4681 = vunpack.c.l.b16 %v3550
  %v4682 = vunpack.c.h.b16 %v3550
  %v4683 = vunpack.c.l.b16 %v3551
  %v4684 = vunpack.c.h.b16 %v3551
  %v4685 = vunpack.c.l.b16 %v3552
  %v4686 = vunpack.c.l.b16 %v3553
  %v4687 = vunpack.c.h.b16 %v3553
  %v4688 = vunpack.c.l.b16 %v3554
  %v4689 = vunpack.c.h.b16 %v3554
  %v4690 = vunpack.c.l.b16 %v3555
  %v4691 = vunpack.c.h.b16 %v3555
  %v4692 = vunpack.c.l.b16 %v3556
  %v4693 = vunpack.c.l.b16 %v3557
  %v4694 = vunpack.c.h.b16 %v3557
  %v4695 = vunpack.c.l.b16 %v3558
  %v4696 = vunpack.c.h.b16 %v3558
  %v4697 = vunpack.c.l.b16 %v3559
  %v4698 = vunpack.c.h.b16 %v3559
  %v4699 = vunpack.c.l.b16 %v3560
  %v4700 = vunpack.c.l.b16 %v3561
  %v4701 = vunpack.c.h.b16 %v3561
  %v4702 = vunpack.c.l.b16 %v3562
  %v4703 = vunpack.c.h.b16 %v3562
  %v4704 = vunpack.c.l.b16 %v3563
  %v4705 = vunpack.c.h.b16 %v3563
  %v4706 = vunpack.c.l.b16 %v3564
  %v4707 = vunpack.c.l.b16 %v3565
  %v4708 = vunpack.c.h.b16 %v3565
  %v4709 = vunpack.c.l.b16 %v3566
  %v4710 = vunpack.c.h.b16 %v3566
  %v4711 = vunpack.c.l.b16 %v3567
  %v4712 = vunpack.c.h.b16 %v3567
  %v4713 = vunpack.c.l.b16 %v3568
  %v4714 = vunpack.c.l.b16 %v3569
  %v4715 = vunpack.c.h.b16 %v3569
  %v4716 = vunpack.c.l.b16 %v3570
  %v4717 = vunpack.c.h.b16 %v3570
  %v4718 = vunpack.c.l.b16 %v3571
  %v4719 = vunpack.c.h.b16 %v3571
  %v4720 = vunpack.c.l.b16 %v3572
  %v4721 = vunpack.c.l.b16 %v3573
  %v4722 = vunpack.c.h.b16 %v3573
  %v4723 = vunpack.c.l.b16 %v3574
  %v4724 = vunpack.c.h.b16 %v3574
  %v4725 = vunpack.c.l.b16 %v3575
  %v4726 = vunpack.c.h.b16 %v3575
  %v4727 = vunpack.c.l.b16 %v3576
  %v4728 = vunpack.c.l.b16 %v3577
  %v4729 = vunpack.c.h.b16 %v3577
  %v4730 = vunpack.c.l.b16 %v3578
  %v4731 = vunpack.c.h.b16 %v3578
  %v4732 = vunpack.c.l.b16 %v3579
  %v4733 = vunpack.c.h.b16 %v3579
  %v4734 = vunpack.c.l.b16 %v3580
  %v4735 = vunpack.c.l.b16 %v3581
  %v4736 = vunpack.c.h.b16 %v3581
  %v4737 = vunpack.c.l.b16 %v3582
  %v4738 = vunpack.c.h.b16 %v3582
  %v4739 = vunpack.c.l.b16 %v3583
  %v4740 = vunpack.c.h.b16 %v3583
  %v4741 = vunpack.c.l.b16 %v3584
  %v4742 = vunpack.c.l.b16 %v3585
  %v4743 = vunpack.c.h.b16 %v3585
  %v4744 = vunpack.c.l.b16 %v3586
  %v4745 = vunpack.c.h.b16 %v3586
  %v4746 = vunpack.c.l.b16 %v3587
  %v4747 = vunpack.c.h.b16 %v3587
  %v4748 = vunpack.c.l.b16 %v3588
  %v4749 = vunpack.c.l.b16 %v3589
  %v4750 = vunpack.c.h.b16 %v3589
  %v4751 = vunpack.c.l.b16 %v3590
  %v4752 = vunpack.c.h.b16 %v3590
  %v4753 = vunpack.c.l.b16 %v3591
  %v4754 = vunpack.c.h.b16 %v3591
  %v4755 = vunpack.c.l.b16 %v3592
  %v4756 = vunpack.c.l.b16 %v3593
  %v4757 = vunpack.c.h.b16 %v3593
  %v4758 = vunpack.c.l.b16 %v3594
  %v4759 = vunpack.c.h.b16 %v3594
  %v4760 = vunpack.c.l.b16 %v3595
  %v4761 = vunpack.c.h.b16 %v3595
  %v4762 = vunpack.c.l.b16 %v3596
  %v4763 = vunpack.c.l.b16 %v3597
  %v4764 = vunpack.c.h.b16 %v3597
  %v4765 = vunpack.c.l.b16 %v3598
  %v4766 = vunpack.c.h.b16 %v3598
  %v4767 = vunpack.c.l.b16 %v3599
  %v4768 = vunpack.c.h.b16 %v3599
  %v4769 = vunpack.c.l.b16 %v3600
  %v4770 = vunpack.c.l.b16 %v3601
  %v4771 = vunpack.c.h.b16 %v3601
  %v4772 = vunpack.c.l.b16 %v3602
  %v4773 = vunpack.c.h.b16 %v3602
  %v4774 = vunpack.c.l.b16 %v3603
  %v4775 = vunpack.c.h.b16 %v3603
  %v4776 = vunpack.c.l.b16 %v3604
  %v4777 = vunpack.c.l.b16 %v3605
  %v4778 = vunpack.c.h.b16 %v3605
  %v4779 = vunpack.c.l.b16 %v3606
  %v4780 = vunpack.c.h.b16 %v3606
  %v4781 = vunpack.c.l.b16 %v3607
  %v4782 = vunpack.c.h.b16 %v3607
  %v4783 = vunpack.c.l.b16 %v3608
  %v4784 = vunpack.c.l.b16 %v3609
  %v4785 = vunpack.c.h.b16 %v3609
  %v4786 = vunpack.c.l.b16 %v3610
  %v4787 = vunpack.c.h.b16 %v3610
  %v4788 = vunpack.c.l.b16 %v3611
  %v4789 = vunpack.c.h.b16 %v3611
  %v4790 = vunpack.c.l.b16 %v3612
  %v4791 = vunpack.c.l.b16 %v3613
  %v4792 = vunpack.c.h.b16 %v3613
  %v4793 = vunpack.c.l.b16 %v3614
  %v4794 = vunpack.c.h.b16 %v3614
  %v4795 = vunpack.c.l.b16 %v3615
  %v4796 = vunpack.c.h.b16 %v3615
  %v4797 = vunpack.c.l.b16 %v3616
  %v4798 = vunpack.c.l.b16 %v3617
  %v4799 = vunpack.c.h.b16 %v3617
  %v4800 = vunpack.c.l.b16 %v3618
  %v4801 = vunpack.c.h.b16 %v3618
  %v4802 = vunpack.c.l.b16 %v3619
  %v4803 = vunpack.c.h.b16 %v3619
  %v4804 = vunpack.c.l.b16 %v3620
  %v4805 = vunpack.c.l.b16 %v3621
  %v4806 = vunpack.c.h.b16 %v3621
  %v4807 = vunpack.c.l.b16 %v3622
  %v4808 = vunpack.c.h.b16 %v3622
  %v4809 = vunpack.c.l.b16 %v3623
  %v4810 = vunpack.c.h.b16 %v3623
  %v4811 = vunpack.c.l.b16 %v3624
  %v4812 = vunpack.c.l.b16 %v3625
  %v4813 = vunpack.c.h.b16 %v3625
  %v4814 = vunpack.c.l.b16 %v3626
  %v4815 = vunpack.c.h.b16 %v3626
  %v4816 = vunpack.c.l.b16 %v3627
  %v4817 = vunpack.c.h.b16 %v3627
  %v4818 = vunpack.c.l.b16 %v3628
  %v4819 = vunpack.c.l.b16 %v3629
  %v4820 = vunpack.c.h.b16 %v3629
  %v4821 = vunpack.c.l.b16 %v3630
  %v4822 = vunpack.c.h.b16 %v3630
  %v4823 = vunpack.c.l.b16 %v3631
  %v4824 = vunpack.c.h.b16 %v3631
  %v4825 = vunpack.c.l.b16 %v3632
  %v4826 = vunpack.c.l.b16 %v3633
  %v4827 = vunpack.c.h.b16 %v3633
  %v4828 = vunpack.c.l.b16 %v3634
  %v4829 = vunpack.c.h.b16 %v3634
  %v4830 = vunpack.c.l.b16 %v3635
  %v4831 = vunpack.c.h.b16 %v3635
  %v4832 = vunpack.c.l.b16 %v3636
  %v4833 = vunpack.c.l.b16 %v3637
  %v4834 = vunpack.c.h.b16 %v3637
  %v4835 = vunpack.c.l.b16 %v3638
  %v4836 = vunpack.c.h.b16 %v3638
  %v4837 = vunpack.c.l.b16 %v3639
  %v4838 = vunpack.c.h.b16 %v3639
  %v4839 = vunpack.c.l.b16 %v3640
  %v4840 = vunpack.c.l.b16 %v3641
  %v4841 = vunpack.c.h.b16 %v3641
  %v4842 = vunpack.c.l.b16 %v3642
  %v4843 = vunpack.c.h.b16 %v3642
  %v4844 = vunpack.c.l.b16 %v3643
  %v4845 = vunpack.c.h.b16 %v3643
  %v4846 = vunpack.c.l.b16 %v3644
  %v4847 = vunpack.c.l.b16 %v3645
  %v4848 = vunpack.c.h.b16 %v3645
  %v4849 = vunpack.c.l.b16 %v3646
  %v4850 = vunpack.c.h.b16 %v3646
  %v4851 = vunpack.c.l.b16 %v3647
  %v4852 = vunpack.c.h.b16 %v3647
  %v4853 = vunpack.c.l.b16 %v3648
  %v4854 = vunpack.c.l.b16 %v3649
  %v4855 = vunpack.c.h.b16 %v3649
  %v4856 = vunpack.c.l.b16 %v3650
  %v4857 = vunpack.c.h.b16 %v3650
  %v4858 = vunpack.c.l.b16 %v3651
  %v4859 = vunpack.c.h.b16 %v3651
  %v4860 = vunpack.c.l.b16 %v3652
  %v4861 = vunpack.c.l.b16 %v3653
  %v4862 = vunpack.c.h.b16 %v3653
  %v4863 = vunpack.c.l.b16 %v3654
  %v4864 = vunpack.c.h.b16 %v3654
  %v4865 = vunpack.c.l.b16 %v3655
  %v4866 = vunpack.c.h.b16 %v3655
  %v4867 = vunpack.c.l.b16 %v3656
  %v4868 = vunpack.c.l.b16 %v3657
  %v4869 = vunpack.c.h.b16 %v3657
  %v4870 = vunpack.c.l.b16 %v3658
  %v4871 = vunpack.c.h.b16 %v3658
  %v4872 = vunpack.c.l.b16 %v3659
  %v4873 = vunpack.c.h.b16 %v3659
  %v4874 = vunpack.c.l.b16 %v3660
  %v4875 = vunpack.c.l.b16 %v3661
  %v4876 = vunpack.c.h.b16 %v3661
  %v4877 = vunpack.c.l.b16 %v3662
  %v4878 = vunpack.c.h.b16 %v3662
  %v4879 = vunpack.c.l.b16 %v3663
  %v4880 = vunpack.c.h.b16 %v3663
  %v4881 = vunpack.c.l.b16 %v3664
  %v4882 = vunpack.c.l.b16 %v3665
  %v4883 = vunpack.c.h.b16 %v3665
  %v4884 = vunpack.c.l.b16 %v3666
  %v4885 = vunpack.c.h.b16 %v3666
  %v4886 = vunpack.c.l.b16 %v3667
  %v4887 = vunpack.c.h.b16 %v3667
  %v4888 = vunpack.c.l.b16 %v3668
  %v4889 = vunpack.c.l.b16 %v3669
  %v4890 = vunpack.c.h.b16 %v3669
  %v4891 = vunpack.c.l.b16 %v3670
  %v4892 = vunpack.c.h.b16 %v3670
  %v4893 = vunpack.c.l.b16 %v3671
  %v4894 = vunpack.c.h.b16 %v3671
  %v4895 = vunpack.c.l.b16 %v3672
  %v4896 = vunpack.c.l.b16 %v3673
  %v4897 = vunpack.c.h.b16 %v3673
  %v4898 = vunpack.c.l.b16 %v3674
  %v4899 = vunpack.c.h.b16 %v3674
  %v4900 = vunpack.c.l.b16 %v3675
  %v4901 = vunpack.c.h.b16 %v3675
  %v4902 = vunpack.c.l.b16 %v3676
  %v4903 = vunpack.c.l.b16 %v3677
  %v4904 = vunpack.c.h.b16 %v3677
  %v4905 = vunpack.c.l.b16 %v3678
  %v4906 = vunpack.c.h.b16 %v3678
  %v4907 = vunpack.c.l.b16 %v3679
  %v4908 = vunpack.c.h.b16 %v3679
  %v4909 = vunpack.c.l.b16 %v3680
  %v4910 = vunpack.c.l.b16 %v3681
  %v4911 = vunpack.c.h.b16 %v3681
  %v4912 = vunpack.c.l.b16 %v3682
  %v4913 = vunpack.c.h.b16 %v3682
  %v4914 = vunpack.c.l.b16 %v3683
  %v4915 = vunpack.c.h.b16 %v3683
  %v4916 = vunpack.c.l.b16 %v3684
  %v4917 = vunpack.c.l.b16 %v3685
  %v4918 = vunpack.c.h.b16 %v3685
  %v4919 = vunpack.c.l.b16 %v3686
  %v4920 = vunpack.c.h.b16 %v3686
  %v4921 = vunpack.c.l.b16 %v3687
  %v4922 = vunpack.c.h.b16 %v3687
  %v4923 = vunpack.c.l.b16 %v3688
  %v4924 = vunpack.c.l.b16 %v3689
  %v4925 = vunpack.c.h.b16 %v3689
  %v4926 = vunpack.c.l.b16 %v3690
  %v4927 = vunpack.c.h.b16 %v3690
  %v4928 = vunpack.c.l.b16 %v3691
  %v4929 = vunpack.c.h.b16 %v3691
  %v4930 = vunpack.c.l.b16 %v3692
  %v4931 = vunpack.c.l.b16 %v3693
  %v4932 = vunpack.c.h.b16 %v3693
  %v4933 = vunpack.c.l.b16 %v3694
  %v4934 = vunpack.c.h.b16 %v3694
  %v4935 = vunpack.c.l.b16 %v3695
  %v4936 = vunpack.c.h.b16 %v3695
  %v4937 = vunpack.c.l.b16 %v3696
  %v4938 = vunpack.c.l.b16 %v3697
  %v4939 = vunpack.c.h.b16 %v3697
  %v4940 = vunpack.c.l.b16 %v3698
  %v4941 = vunpack.c.h.b16 %v3698
  %v4942 = vunpack.c.l.b16 %v3699
  %v4943 = vunpack.c.h.b16 %v3699
  %v4944 = vunpack.c.l.b16 %v3700
  %v4945 = vunpack.c.l.b16 %v3701
  %v4946 = vunpack.c.h.b16 %v3701
  %v4947 = vunpack.c.l.b16 %v3702
  %v4948 = vunpack.c.h.b16 %v3702
  %v4949 = vunpack.c.l.b16 %v3703
  %v4950 = vunpack.c.h.b16 %v3703
  %v4951 = vunpack.c.l.b16 %v3704
  %v4952 = vunpack.c.l.b16 %v3705
  %v4953 = vunpack.c.h.b16 %v3705
  %v4954 = vunpack.c.l.b16 %v3706
  %v4955 = vunpack.c.h.b16 %v3706
  %v4956 = vunpack.c.l.b16 %v3707
  %v4957 = vunpack.c.h.b16 %v3707
  %v4958 = vunpack.c.l.b16 %v3708
  %v4959 = vunpack.c.l.b16 %v3709
  %v4960 = vunpack.c.h.b16 %v3709
  %v4961 = vunpack.c.l.b16 %v3710
  %v4962 = vunpack.c.h.b16 %v3710
  %v4963 = vunpack.c.l.b16 %v3711
  %v4964 = vunpack.c.h.b16 %v3711
  %v4965 = vunpack.c.l.b16 %v3712
  %v4966 = vunpack.c.l.b16 %v3713
  %v4967 = vunpack.c.h.b16 %v3713
  %v4968 = vunpack.c.l.b16 %v3714
  %v4969 = vunpack.c.h.b16 %v3714
  %v4970 = vunpack.c.l.b16 %v3715
  %v4971 = vunpack.c.h.b16 %v3715
  %v4972 = vunpack.c.l.b16 %v3716
  %v4973 = vunpack.c.l.b16 %v3717
  %v4974 = vunpack.c.h.b16 %v3717
  %v4975 = vunpack.c.l.b16 %v3718
  %v4976 = vunpack.c.h.b16 %v3718
  %v4977 = vunpack.c.l.b16 %v3719
  %v4978 = vunpack.c.h.b16 %v3719
  %v4979 = vunpack.c.l.b16 %v3720
  %v4980 = vunpack.c.l.b16 %v3721
  %v4981 = vunpack.c.h.b16 %v3721
  %v4982 = vunpack.c.l.b16 %v3722
  %v4983 = vunpack.c.h.b16 %v3722
  %v4984 = vunpack.c.l.b16 %v3723
  %v4985 = vunpack.c.h.b16 %v3723
  %v4986 = vunpack.c.l.b16 %v3724
  %v4987 = vunpack.c.l.b16 %v3725
  %v4988 = vunpack.c.h.b16 %v3725
  %v4989 = vunpack.c.l.b16 %v3726
  %v4990 = vunpack.c.h.b16 %v3726
  %v4991 = vunpack.c.l.b16 %v3727
  %v4992 = vunpack.c.h.b16 %v3727
  %v4993 = vunpack.c.l.b16 %v3728
  %v4994 = vunpack.c.l.b16 %v3729
  %v4995 = vunpack.c.h.b16 %v3729
  %v4996 = vunpack.c.l.b16 %v3730
  %v4997 = vunpack.c.h.b16 %v3730
  %v4998 = vunpack.c.l.b16 %v3731
  %v4999 = vunpack.c.h.b16 %v3731
  %v5000 = vunpack.c.l.b16 %v3732
  %v5001 = vunpack.c.l.b16 %v3733
  %v5002 = vunpack.c.h.b16 %v3733
  %v5003 = vunpack.c.l.b16 %v3734
  %v5004 = vunpack.c.h.b16 %v3734
  %v5005 = vunpack.c.l.b16 %v3735
  %v5006 = vunpack.c.h.b16 %v3735
  %v5007 = vunpack.c.l.b16 %v3736
  %v5008 = vunpack.c.l.b16 %v3737
  %v5009 = vunpack.c.h.b16 %v3737
  %v5010 = vunpack.c.l.b16 %v3738
  %v5011 = vunpack.c.h.b16 %v3738
  %v5012 = vunpack.c.l.b16 %v3739
  %v5013 = vunpack.c.h.b16 %v3739
  %v5014 = vunpack.c.l.b16 %v3740
  %v5015 = vunpack.c.l.b16 %v3741
  %v5016 = vunpack.c.h.b16 %v3741
  %v5017 = vunpack.c.l.b16 %v3742
  %v5018 = vunpack.c.h.b16 %v3742
  %v5019 = vunpack.c.l.b16 %v3743
  %v5020 = vunpack.c.h.b16 %v3743
  %v5021 = vunpack.c.l.b16 %v3744
  %v5022 = vunpack.c.l.b16 %v3745
  %v5023 = vunpack.c.h.b16 %v3745
  %v5024 = vunpack.c.l.b16 %v3746
  %v5025 = vunpack.c.h.b16 %v3746
  %v5026 = vunpack.c.l.b16 %v3747
  %v5027 = vunpack.c.h.b16 %v3747
  %v5028 = vunpack.c.l.b16 %v3748
  %v5029 = vunpack.c.l.b16 %v3749
  %v5030 = vunpack.c.h.b16 %v3749
  %v5031 = vunpack.c.l.b16 %v3750
  %v5032 = vunpack.c.h.b16 %v3750
  %v5033 = vunpack.c.l.b16 %v3751
  %v5034 = vunpack.c.h.b16 %v3751
  %v5035 = vunpack.c.l.b16 %v3752
  %v5036 = vunpack.c.l.b16 %v3753
  %v5037 = vunpack.c.h.b16 %v3753
  %v5038 = vunpack.c.l.b16 %v3754
  %v5039 = vunpack.c.h.b16 %v3754
  %v5040 = vunpack.c.l.b16 %v3755
  %v5041 = vunpack.c.h.b16 %v3755
  %v5042 = vunpack.c.l.b16 %v3756
  %v5043 = vunpack.c.l.b16 %v3757
  %v5044 = vunpack.c.h.b16 %v3757
  %v5045 = vunpack.c.l.b16 %v3758
  %v5046 = vunpack.c.h.b16 %v3758
  %v5047 = vunpack.c.l.b16 %v3759
  %v5048 = vunpack.c.h.b16 %v3759
  %v5049 = vunpack.c.l.b16 %v3760
  %v5050 = vunpack.c.l.b16 %v3761
  %v5051 = vunpack.c.h.b16 %v3761
  %v5052 = vunpack.c.l.b16 %v3762
  %v5053 = vunpack.c.h.b16 %v3762
  %v5054 = vunpack.c.l.b16 %v3763
  %v5055 = vunpack.c.h.b16 %v3763
  %v5056 = vunpack.c.l.b16 %v3764
  %v5057 = vunpack.c.l.b16 %v3765
  %v5058 = vunpack.c.h.b16 %v3765
  %v5059 = vunpack.c.l.b16 %v3766
  %v5060 = vunpack.c.h.b16 %v3766
  %v5061 = vunpack.c.l.b16 %v3767
  %v5062 = vunpack.c.h.b16 %v3767
  %v5063 = vunpack.c.l.b16 %v3768
  %v5064 = vunpack.c.l.b16 %v3769
  %v5065 = vunpack.c.h.b16 %v3769
  %v5066 = vunpack.c.l.b16 %v3770
  %v5067 = vunpack.c.h.b16 %v3770
  %v5068 = vunpack.c.l.b16 %v3771
  %v5069 = vunpack.c.h.b16 %v3771
  %v5070 = vunpack.c.l.b16 %v3772
  %v5071 = vunpack.c.l.b16 %v3773
  %v5072 = vunpack.c.h.b16 %v3773
  %v5073 = vunpack.c.l.b16 %v3774
  %v5074 = vunpack.c.h.b16 %v3774
  %v5075 = vunpack.c.l.b16 %v3775
  %v5076 = vunpack.c.h.b16 %v3775
  %v5077 = vunpack.c.l.b16 %v3776
  %v5078 = vunpack.c.l.b16 %v3777
  %v5079 = vunpack.c.h.b16 %v3777
  %v5080 = vunpack.c.l.b16 %v3778
  %v5081 = vunpack.c.h.b16 %v3778
  %v5082 = vunpack.c.l.b16 %v3779
  %v5083 = vunpack.c.h.b16 %v3779
  %v5084 = vunpack.c.l.b16 %v3780
  %v5085 = vunpack.c.l.b16 %v3781
  %v5086 = vunpack.c.h.b16 %v3781
  %v5087 = vunpack.c.l.b16 %v3782
  %v5088 = vunpack.c.h.b16 %v3782
  %v5089 = vunpack.c.l.b16 %v3783
  %v5090 = vunpack.c.h.b16 %v3783
  %v5091 = vunpack.c.l.b16 %v3784
  %v5092 = vunpack.c.l.b16 %v3785
  %v5093 = vunpack.c.h.b16 %v3785
  %v5094 = vunpack.c.l.b16 %v3786
  %v5095 = vunpack.c.h.b16 %v3786
  %v5096 = vunpack.c.l.b16 %v3787
  %v5097 = vunpack.c.h.b16 %v3787
  %v5098 = vunpack.c.l.b16 %v3788
  %v5099 = vunpack.c.l.b16 %v3789
  %v5100 = vunpack.c.h.b16 %v3789
  %v5101 = vunpack.c.l.b16 %v3790
  %v5102 = vunpack.c.h.b16 %v3790
  %v5103 = vunpack.c.l.b16 %v3791
  %v5104 = vunpack.c.h.b16 %v3791
  %v5105 = vunpack.c.l.b16 %v3792
  %v5106 = vunpack.c.l.b16 %v3793
  %v5107 = vunpack.c.h.b16 %v3793
  %v5108 = vunpack.c.l.b16 %v3794
  %v5109 = vunpack.c.h.b16 %v3794
  %v5110 = vunpack.c.l.b16 %v3795
  %v5111 = vunpack.c.h.b16 %v3795
  %v5112 = vunpack.c.l.b16 %v3796
  %v5113 = vunpack.c.l.b16 %v3797
  %v5114 = vunpack.c.h.b16 %v3797
  %v5115 = vunpack.c.l.b16 %v3798
  %v5116 = vunpack.c.h.b16 %v3798
  %v5117 = vunpack.c.l.b16 %v3799
  %v5118 = vunpack.c.h.b16 %v3799
  %v5119 = vunpack.c.l.b16 %v3800
  %v5120 = vunpack.c.l.b16 %v3801
  %v5121 = vunpack.c.h.b16 %v3801
  %v5122 = vunpack.c.l.b16 %v3802
  %v5123 = vunpack.c.h.b16 %v3802
  %v5124 = vunpack.c.l.b16 %v3803
  %v5125 = vunpack.c.h.b16 %v3803
  %v5126 = vunpack.c.l.b16 %v3804
  %v5127 = vunpack.c.l.b16 %v3805
  %v5128 = vunpack.c.h.b16 %v3805
  %v5129 = vunpack.c.l.b16 %v3806
  %v5130 = vunpack.c.h.b16 %v3806
  %v5131 = vunpack.c.l.b16 %v3807
  %v5132 = vunpack.c.h.b16 %v3807
  %v5133 = vunpack.c.l.b16 %v3808
  %v5134 = vunpack.c.l.b16 %v3809
  %v5135 = vunpack.c.h.b16 %v3809
  %v5136 = vunpack.c.l.b16 %v3810
  %v5137 = vunpack.c.h.b16 %v3810
  %v5138 = vunpack.c.l.b16 %v3811
  %v5139 = vunpack.c.h.b16 %v3811
  %v5140 = vunpack.c.l.b16 %v3812
  %v5141 = vunpack.c.l.b16 %v3813
  %v5142 = vunpack.c.h.b16 %v3813
  %v5143 = vunpack.c.l.b16 %v3814
  %v5144 = vunpack.c.h.b16 %v3814
  %v5145 = vunpack.c.l.b16 %v3815
  %v5146 = vunpack.c.h.b16 %v3815
  %v5147 = vunpack.c.l.b16 %v3816
  %v5148 = vunpack.c.l.b16 %v3817
  %v5149 = vunpack.c.h.b16 %v3817
  %v5150 = vunpack.c.l.b16 %v3818
  %v5151 = vunpack.c.h.b16 %v3818
  %v5152 = vunpack.c.l.b16 %v3819
  %v5153 = vunpack.c.h.b16 %v3819
  %v5154 = vunpack.c.l.b16 %v3820
  %v5155 = vunpack.c.l.b16 %v3821
  %v5156 = vunpack.c.h.b16 %v3821
  %v5157 = vunpack.c.l.b16 %v3822
  %v5158 = vunpack.c.h.b16 %v3822
  %v5159 = vunpack.c.l.b16 %v3823
  %v5160 = vunpack.c.h.b16 %v3823
  %v5161 = vunpack.c.l.b16 %v3824
  %v5162 = vunpack.c.l.b16 %v3825
  %v5163 = vunpack.c.h.b16 %v3825
  %v5164 = vunpack.c.l.b16 %v3826
  %v5165 = vunpack.c.h.b16 %v3826
  %v5166 = vunpack.c.l.b16 %v3827
  %v5167 = vunpack.c.h.b16 %v3827
  %v5168 = vunpack.c.l.b16 %v3828
  %v5169 = vunpack.c.l.b16 %v3829
  %v5170 = vunpack.c.h.b16 %v3829
  %v5171 = vunpack.c.l.b16 %v3830
  %v5172 = vunpack.c.h.b16 %v3830
  %v5173 = vunpack.c.l.b16 %v3831
  %v5174 = vunpack.c.h.b16 %v3831
  %v5175 = vunpack.c.l.b16 %v3832
  %v5176 = vunpack.c.l.b16 %v3833
  %v5177 = vunpack.c.h.b16 %v3833
  %v5178 = vunpack.c.l.b16 %v3834
  %v5179 = vunpack.c.h.b16 %v3834
  %v5180 = vunpack.c.l.b16 %v3835
  %v5181 = vunpack.c.h.b16 %v3835
  %v5182 = vunpack.c.l.b16 %v3836
  %v5183 = vunpack.c.l.b16 %v3837
  %v5184 = vunpack.c.h.b16 %v3837
  %v5185 = vunpack.c.l.b16 %v3838
  %v5186 = vunpack.c.h.b16 %v3838
  %v5187 = vunpack.c.l.b16 %v3839
  %v5188 = vunpack.c.h.b16 %v3839
  %v5189 = vunpack.c.l.b16 %v3840
  %v5190 = vunpack.c.l.b16 %v3841
  %v5191 = vunpack.c.h.b16 %v3841
  %v5192 = vunpack.c.l.b16 %v3842
  %v5193 = vunpack.c.h.b16 %v3842
  %v5194 = vunpack.c.l.b16 %v3843
  %v5195 = vunpack.c.h.b16 %v3843
  %v5196 = vunpack.c.l.b16 %v3844
  %v5197 = vunpack.c.l.b16 %v3845
  %v5198 = vunpack.c.h.b16 %v3845
  %v5199 = vunpack.c.l.b16 %v3846
  %v5200 = vunpack.c.h.b16 %v3846
  %v5201 = vunpack.c.l.b16 %v3847
  %v5202 = vunpack.c.h.b16 %v3847
  %v5203 = vunpack.c.l.b16 %v3848
  %v5204 = vunpack.c.l.b16 %v3849
  %v5205 = vunpack.c.h.b16 %v3849
  %v5206 = vunpack.c.l.b16 %v3850
  %v5207 = vunpack.c.h.b16 %v3850
  %v5208 = vunpack.c.l.b16 %v3851
  %v5209 = vunpack.c.h.b16 %v3851
  %v5210 = vunpack.c.l.b16 %v3852
  %v5211 = vunpack.c.l.b16 %v3853
  %v5212 = vunpack.c.h.b16 %v3853
  %v5213 = vunpack.c.l.b16 %v3854
  %v5214 = vunpack.c.h.b16 %v3854
  %v5215 = vunpack.c.l.b16 %v3855
  %v5216 = vunpack.c.h.b16 %v3855
  %v5217 = vunpack.c.l.b16 %v3856
  %v5218 = vunpack.c.l.b16 %v3857
  %v5219 = vunpack.c.h.b16 %v3857
  %v5220 = vunpack.c.l.b16 %v3858
  %v5221 = vunpack.c.h.b16 %v3858
  %v5222 = vunpack.c.l.b16 %v3859
  %v5223 = vunpack.c.h.b16 %v3859
  %v5224 = vunpack.c.l.b16 %v3860
  %v5225 = vunpack.c.l.b16 %v3861
  %v5226 = vunpack.c.h.b16 %v3861
  %v5227 = vunpack.c.l.b16 %v3862
  %v5228 = vunpack.c.h.b16 %v3862
  %v5229 = vunpack.c.l.b16 %v3863
  %v5230 = vunpack.c.h.b16 %v3863
  %v5231 = vunpack.c.l.b16 %v3864
  %v5232 = vunpack.c.l.b16 %v3865
  %v5233 = vunpack.c.h.b16 %v3865
  %v5234 = vunpack.c.l.b16 %v3866
  %v5235 = vunpack.c.h.b16 %v3866
  %v5236 = vunpack.c.l.b16 %v3867
  %v5237 = vunpack.c.h.b16 %v3867
  %v5238 = vunpack.c.l.b16 %v3868
  %v5239 = vunpack.c.l.b16 %v3869
  %v5240 = vunpack.c.h.b16 %v3869
  %v5241 = vunpack.c.l.b16 %v3870
  %v5242 = vunpack.c.h.b16 %v3870
  %v5243 = vunpack.c.l.b16 %v3871
  %v5244 = vunpack.c.h.b16 %v3871
  %v5245 = vunpack.c.l.b16 %v3872
  %v5246 = vunpack.c.l.b16 %v3873
  %v5247 = vunpack.c.h.b16 %v3873
  %v5248 = vunpack.c.l.b16 %v3874
  %v5249 = vunpack.c.h.b16 %v3874
  %v5250 = vunpack.c.l.b16 %v3875
  %v5251 = vunpack.c.h.b16 %v3875
  %v5252 = vunpack.c.l.b16 %v3876
  %v5253 = vunpack.c.l.b16 %v3877
  %v5254 = vunpack.c.h.b16 %v3877
  %v5255 = vunpack.c.l.b16 %v3878
  %v5256 = vunpack.c.h.b16 %v3878
  %v5257 = vunpack.c.l.b16 %v3879
  %v5258 = vunpack.c.h.b16 %v3879
  %v5259 = vunpack.c.l.b16 %v3880
  %v5260 = vunpack.c.l.b16 %v3881
  %v5261 = vunpack.c.h.b16 %v3881
  %v5262 = vunpack.c.l.b16 %v3882
  %v5263 = vunpack.c.h.b16 %v3882
  %v5264 = vunpack.c.l.b16 %v3883
  %v5265 = vunpack.c.h.b16 %v3883
  %v5266 = vunpack.c.l.b16 %v3884
  %v5267 = vunpack.c.l.b16 %v3885
  %v5268 = vunpack.c.h.b16 %v3885
  %v5269 = vunpack.c.l.b16 %v3886
  %v5270 = vunpack.c.h.b16 %v3886
  %v5271 = vunpack.c.l.b16 %v3887
  %v5272 = vunpack.c.h.b16 %v3887
  %v5273 = vunpack.c.l.b16 %v3888
  %v5274 = vunpack.c.l.b16 %v3889
  %v5275 = vunpack.c.h.b16 %v3889
  %v5276 = vunpack.c.l.b16 %v3890
  %v5277 = vunpack.c.h.b16 %v3890
  %v5278 = vunpack.c.l.b16 %v3891
  %v5279 = vunpack.c.h.b16 %v3891
  %v5280 = vunpack.c.l.b16 %v3892
  %v5281 = vunpack.c.l.b16 %v3893
  %v5282 = vunpack.c.h.b16 %v3893
  %v5283 = vunpack.c.l.b16 %v3894
  %v5284 = vunpack.c.h.b16 %v3894
  %v5285 = vunpack.c.l.b16 %v3895
  %v5286 = vunpack.c.h.b16 %v3895
  %v5287 = vunpack.c.l.b16 %v3896
  %v5288 = vunpack.c.l.b16 %v3897
  %v5289 = vunpack.c.h.b16 %v3897
  %v5290 = vunpack.c.l.b16 %v3898
  %v5291 = vunpack.c.h.b16 %v3898
  %v5292 = vunpack.c.l.b16 %v3899
  %v5293 = vunpack.c.h.b16 %v3899
  %v5294 = vunpack.c.l.b16 %v3900
  %v5295 = vunpack.c.l.b16 %v3901
  %v5296 = vunpack.c.h.b16 %v3901
  %v5297 = vunpack.c.l.b16 %v3902
  %v5298 = vunpack.c.h.b16 %v3902
  %v5299 = vunpack.c.l.b16 %v3903
  %v5300 = vunpack.c.h.b16 %v3903
  %v5301 = vunpack.c.l.b16 %v3904
  %v5302 = vunpack.c.l.b16 %v3905
  %v5303 = vunpack.c.h.b16 %v3905
  %v5304 = vunpack.c.l.b16 %v3906
  %v5305 = vunpack.c.h.b16 %v3906
  %v5306 = vunpack.c.l.b16 %v3907
  %v5307 = vunpack.c.h.b16 %v3907
  %v5308 = vunpack.c.l.b16 %v3908
  %v5309 = vunpack.c.l.b16 %v3909
  %v5310 = vunpack.c.h.b16 %v3909
  %v5311 = vunpack.c.l.b16 %v3910
  %v5312 = vunpack.c.h.b16 %v3910
  %v5313 = vunpack.c.l.b16 %v3911
  %v5314 = vunpack.c.h.b16 %v3911
  %v5315 = vunpack.c.l.b16 %v3912
  %v5316 = vunpack.c.l.b16 %v3913
  %v5317 = vunpack.c.h.b16 %v3913
  %v5318 = vunpack.c.l.b16 %v3914
  %v5319 = vunpack.c.h.b16 %v3914
  %v5320 = vunpack.c.l.b16 %v3915
  %v5321 = vunpack.c.h.b16 %v3915
  %v5322 = vunpack.c.l.b16 %v3916
  %v5323 = vunpack.c.l.b16 %v3917
  %v5324 = vunpack.c.h.b16 %v3917
  %v5325 = vunpack.c.l.b16 %v3918
  %v5326 = vunpack.c.h.b16 %v3918
  %v5327 = vunpack.c.l.b16 %v3919
  %v5328 = vunpack.c.h.b16 %v3919
  %v5329 = vunpack.c.l.b16 %v3920
  %v5330 = vunpack.c.l.b16 %v3921
  %v5331 = vunpack.c.h.b16 %v3921
  %v5332 = vunpack.c.l.b16 %v3922
  %v5333 = vunpack.c.h.b16 %v3922
  %v5334 = vunpack.c.l.b16 %v3923
  %v5335 = vunpack.c.h.b16 %v3923
  %v5336 = vunpack.c.l.b16 %v3924
  %v5337 = vunpack.c.l.b16 %v3925
  %v5338 = vunpack.c.h.b16 %v3925
  %v5339 = vunpack.c.l.b16 %v3926
  %v5340 = vunpack.c.h.b16 %v3926
  %v5341 = vunpack.c.l.b16 %v3927
  %v5342 = vunpack.c.h.b16 %v3927
  %v5343 = vunpack.c.l.b16 %v3928
  %v5344 = vunpack.c.l.b16 %v3929
  %v5345 = vunpack.c.h.b16 %v3929
  %v5346 = vunpack.c.l.b16 %v3930
  %v5347 = vunpack.c.h.b16 %v3930
  %v5348 = vunpack.c.l.b16 %v3931
  %v5349 = vunpack.c.h.b16 %v3931
  %v5350 = vunpack.c.l.b16 %v3932
  %v5351 = vunpack.c.l.b16 %v3933
  %v5352 = vunpack.c.h.b16 %v3933
  %v5353 = vunpack.c.l.b16 %v3934
  %v5354 = vunpack.c.h.b16 %v3934
  %v5355 = vunpack.c.l.b16 %v3935
  %v5356 = vunpack.c.h.b16 %v3935
  %v5357 = vunpack.c.l.b16 %v3936
  %v5358 = vunpack.c.l.b16 %v3937
  %v5359 = vunpack.c.h.b16 %v3937
  %v5360 = vunpack.c.l.b16 %v3938
  %v5361 = vunpack.c.h.b16 %v3938
  %v5362 = vunpack.c.l.b16 %v3939
  %v5363 = vunpack.c.h.b16 %v3939
  %v5364 = vunpack.c.l.b16 %v3940
  %v5365 = vunpack.c.l.b16 %v3941
  %v5366 = vunpack.c.h.b16 %v3941
  %v5367 = vunpack.c.l.b16 %v3942
  %v5368 = vunpack.c.h.b16 %v3942
  %v5369 = vunpack.c.l.b16 %v3943
  %v5370 = vunpack.c.h.b16 %v3943
  %v5371 = vunpack.c.l.b16 %v3944
  %v5372 = vunpack.c.l.b16 %v3945
  %v5373 = vunpack.c.h.b16 %v3945
  %v5374 = vunpack.c.l.b16 %v3946
  %v5375 = vunpack.c.h.b16 %v3946
  %v5376 = vunpack.c.l.b16 %v3947
  %v5377 = vunpack.c.h.b16 %v3947
  %v5378 = vunpack.c.l.b16 %v3948
  %v5379 = vunpack.c.l.b16 %v3949
  %v5380 = vunpack.c.h.b16 %v3949
  %v5381 = vunpack.c.l.b16 %v3950
  %v5382 = vunpack.c.h.b16 %v3950
  %v5383 = vunpack.c.l.b16 %v3951
  %v5384 = vunpack.c.h.b16 %v3951
  %v5385 = vunpack.c.l.b16 %v3952
  %v5386 = vunpack.c.l.b16 %v3953
  %v5387 = vunpack.c.h.b16 %v3953
  %v5388 = vunpack.c.l.b16 %v3954
  %v5389 = vunpack.c.h.b16 %v3954
  %v5390 = vunpack.c.l.b16 %v3955
  %v5391 = vunpack.c.h.b16 %v3955
  %v5392 = vunpack.c.l.b16 %v3956
  %v5393 = vunpack.c.l.b16 %v3957
  %v5394 = vunpack.c.h.b16 %v3957
  %v5395 = vunpack.c.l.b16 %v3958
  %v5396 = vunpack.c.h.b16 %v3958
  %v5397 = vunpack.c.l.b16 %v3959
  %v5398 = vunpack.c.h.b16 %v3959
  %v5399 = vunpack.c.l.b16 %v3960
  %v5400 = vunpack.c.l.b16 %v3961
  %v5401 = vunpack.c.h.b16 %v3961
  %v5402 = vunpack.c.l.b16 %v3962
  %v5403 = vunpack.c.h.b16 %v3962
  %v5404 = vunpack.c.l.b16 %v3963
  %v5405 = vunpack.c.h.b16 %v3963
  %v5406 = vunpack.c.l.b16 %v3964
  %v5407 = vunpack.c.l.b16 %v3965
  %v5408 = vunpack.c.h.b16 %v3965
  %v5409 = vunpack.c.l.b16 %v3966
  %v5410 = vunpack.c.h.b16 %v3966
  %v5411 = vunpack.c.l.b16 %v3967
  %v5412 = vunpack.c.h.b16 %v3967
  %v5413 = vunpack.c.l.b16 %v3968
  %v5414 = vpack.c.b16 %v4525, %v4518
  %v5415 = vpack.c.b16 %v4526, %v4519
  %v5416 = vpack.c.b16 %v4527, %v4520
  %v5417 = vpack.c.b16 %v4528, %v4521
  %v5418 = vpack.c.b16 %v4529, %v4522
  %v5419 = vpack.c.b16 %v4530, %v4523
  %v5420 = vpack.c.b16 %v4531, %v4524
  %v5421 = vpack.c.b16 %v4539, %v4532
  %v5422 = vpack.c.b16 %v4540, %v4533
  %v5423 = vpack.c.b16 %v4541, %v4534
  %v5424 = vpack.c.b16 %v4542, %v4535
  %v5425 = vpack.c.b16 %v4543, %v4536
  %v5426 = vpack.c.b16 %v4544, %v4537
  %v5427 = vpack.c.b16 %v4545, %v4538
  %v5428 = vpack.c.b16 %v4553, %v4546
  %v5429 = vpack.c.b16 %v4554, %v4547
  %v5430 = vpack.c.b16 %v4555, %v4548
  %v5431 = vpack.c.b16 %v4556, %v4549
  %v5432 = vpack.c.b16 %v4557, %v4550
  %v5433 = vpack.c.b16 %v4558, %v4551
  %v5434 = vpack.c.b16 %v4559, %v4552
  %v5435 = vpack.c.b16 %v4567, %v4560
  %v5436 = vpack.c.b16 %v4568, %v4561
  %v5437 = vpack.c.b16 %v4569, %v4562
  %v5438 = vpack.c.b16 %v4570, %v4563
  %v5439 = vpack.c.b16 %v4571, %v4564
  %v5440 = vpack.c.b16 %v4572, %v4565
  %v5441 = vpack.c.b16 %v4573, %v4566
  %v5442 = vpack.c.b16 %v4581, %v4574
  %v5443 = vpack.c.b16 %v4582, %v4575
  %v5444 = vpack.c.b16 %v4583, %v4576
  %v5445 = vpack.c.b16 %v4584, %v4577
  %v5446 = vpack.c.b16 %v4585, %v4578
  %v5447 = vpack.c.b16 %v4586, %v4579
  %v5448 = vpack.c.b16 %v4587, %v4580
  %v5449 = vpack.c.b16 %v4595, %v4588
  %v5450 = vpack.c.b16 %v4596, %v4589
  %v5451 = vpack.c.b16 %v4597, %v4590
  %v5452 = vpack.c.b16 %v4598, %v4591
  %v5453 = vpack.c.b16 %v4599, %v4592
  %v5454 = vpack.c.b16 %v4600, %v4593
  %v5455 = vpack.c.b16 %v4601, %v4594
  %v5456 = vpack.c.b16 %v4609, %v4602
  %v5457 = vpack.c.b16 %v4610, %v4603
  %v5458 = vpack.c.b16 %v4611, %v4604
  %v5459 = vpack.c.b16 %v4612, %v4605
  %v5460 = vpack.c.b16 %v4613, %v4606
  %v5461 = vpack.c.b16 %v4614, %v4607
  %v5462 = vpack.c.b16 %v4615, %v4608
  %v5463 = vpack.c.b16 %v4623, %v4616
  %v5464 = vpack.c.b16 %v4624, %v4617
  %v5465 = vpack.c.b16 %v4625, %v4618
  %v5466 = vpack.c.b16 %v4626, %v4619
  %v5467 = vpack.c.b16 %v4627, %v4620
  %v5468 = vpack.c.b16 %v4628, %v4621
  %v5469 = vpack.c.b16 %v4629, %v4622
  %v5470 = vpack.c.b16 %v4637, %v4630
  %v5471 = vpack.c.b16 %v4638, %v4631
  %v5472 = vpack.c.b16 %v4639, %v4632
  %v5473 = vpack.c.b16 %v4640, %v4633
  %v5474 = vpack.c.b16 %v4641, %v4634
  %v5475 = vpack.c.b16 %v4642, %v4635
  %v5476 = vpack.c.b16 %v4643, %v4636
  %v5477 = vpack.c.b16 %v4651, %v4644
  %v5478 = vpack.c.b16 %v4652, %v4645
  %v5479 = vpack.c.b16 %v4653, %v4646
  %v5480 = vpack.c.b16 %v4654, %v4647
  %v5481 = vpack.c.b16 %v4655, %v4648
  %v5482 = vpack.c.b16 %v4656, %v4649
  %v5483 = vpack.c.b16 %v4657, %v4650
  %v5484 = vpack.c.b16 %v4665, %v4658
  %v5485 = vpack.c.b16 %v4666, %v4659
  %v5486 = vpack.c.b16 %v4667, %v4660
  %v5487 = vpack.c.b16 %v4668, %v4661
  %v5488 = vpack.c.b16 %v4669, %v4662
  %v5489 = vpack.c.b16 %v4670, %v4663
  %v5490 = vpack.c.b16 %v4671, %v4664
  %v5491 = vpack.c.b16 %v4679, %v4672
  %v5492 = vpack.c.b16 %v4680, %v4673
  %v5493 = vpack.c.b16 %v4681, %v4674
  %v5494 = vpack.c.b16 %v4682, %v4675
  %v5495 = vpack.c.b16 %v4683, %v4676
  %v5496 = vpack.c.b16 %v4684, %v4677
  %v5497 = vpack.c.b16 %v4685, %v4678
  %v5498 = vpack.c.b16 %v4693, %v4686
  %v5499 = vpack.c.b16 %v4694, %v4687
  %v5500 = vpack.c.b16 %v4695, %v4688
  %v5501 = vpack.c.b16 %v4696, %v4689
  %v5502 = vpack.c.b16 %v4697, %v4690
  %v5503 = vpack.c.b16 %v4698, %v4691
  %v5504 = vpack.c.b16 %v4699, %v4692
  %v5505 = vpack.c.b16 %v4707, %v4700
  %v5506 = vpack.c.b16 %v4708, %v4701
  %v5507 = vpack.c.b16 %v4709, %v4702
  %v5508 = vpack.c.b16 %v4710, %v4703
  %v5509 = vpack.c.b16 %v4711, %v4704
  %v5510 = vpack.c.b16 %v4712, %v4705
  %v5511 = vpack.c.b16 %v4713, %v4706
  %v5512 = vpack.c.b16 %v4721, %v4714
  %v5513 = vpack.c.b16 %v4722, %v4715
  %v5514 = vpack.c.b16 %v4723, %v4716
  %v5515 = vpack.c.b16 %v4724, %v4717
  %v5516 = vpack.c.b16 %v4725, %v4718
  %v5517 = vpack.c.b16 %v4726, %v4719
  %v5518 = vpack.c.b16 %v4727, %v4720
  %v5519 = vpack.c.b16 %v4735, %v4728
  %v5520 = vpack.c.b16 %v4736, %v4729
  %v5521 = vpack.c.b16 %v4737, %v4730
  %v5522 = vpack.c.b16 %v4738, %v4731
  %v5523 = vpack.c.b16 %v4739, %v4732
  %v5524 = vpack.c.b16 %v4740, %v4733
  %v5525 = vpack.c.b16 %v4741, %v4734
  %v5526 = vpack.c.b16 %v4749, %v4742
  %v5527 = vpack.c.b16 %v4750, %v4743
  %v5528 = vpack.c.b16 %v4751, %v4744
  %v5529 = vpack.c.b16 %v4752, %v4745
  %v5530 = vpack.c.b16 %v4753, %v4746
  %v5531 = vpack.c.b16 %v4754, %v4747
  %v5532 = vpack.c.b16 %v4755, %v4748
  %v5533 = vpack.c.b16 %v4763, %v4756
  %v5534 = vpack.c.b16 %v4764, %v4757
  %v5535 = vpack.c.b16 %v4765, %v4758
  %v5536 = vpack.c.b16 %v4766, %v4759
  %v5537 = vpack.c.b16 %v4767, %v4760
  %v5538 = vpack.c.b16 %v4768, %v4761
  %v5539 = vpack.c.b16 %v4769, %v4762
  %v5540 = vpack.c.b16 %v4777, %v4770
  %v5541 = vpack.c.b16 %v4778, %v4771
  %v5542 = vpack.c.b16 %v4779, %v4772
  %v5543 = vpack.c.b16 %v4780, %v4773
  %v5544 = vpack.c.b16 %v4781, %v4774
  %v5545 = vpack.c.b16 %v4782, %v4775
  %v5546 = vpack.c.b16 %v4783, %v4776
  %v5547 = vpack.c.b16 %v4791, %v4784
  %v5548 = vpack.c.b16 %v4792, %v4785
  %v5549 = vpack.c.b16 %v4793, %v4786
  %v5550 = vpack.c.b16 %v4794, %v4787
  %v5551 = vpack.c.b16 %v4795, %v4788
  %v5552 = vpack.c.b16 %v4796, %v4789
  %v5553 = vpack.c.b16 %v4797, %v4790
  %v5554 = vpack.c.b16 %v4805, %v4798
  %v5555 = vpack.c.b16 %v4806, %v4799
  %v5556 = vpack.c.b16 %v4807, %v4800
  %v5557 = vpack.c.b16 %v4808, %v4801
  %v5558 = vpack.c.b16 %v4809, %v4802
  %v5559 = vpack.c.b16 %v4810, %v4803
  %v5560 = vpack.c.b16 %v4811, %v4804
  %v5561 = vpack.c.b16 %v4819, %v4812
  %v5562 = vpack.c.b16 %v4820, %v4813
  %v5563 = vpack.c.b16 %v4821, %v4814
  %v5564 = vpack.c.b16 %v4822, %v4815
  %v5565 = vpack.c.b16 %v4823, %v4816
  %v5566 = vpack.c.b16 %v4824, %v4817
  %v5567 = vpack.c.b16 %v4825, %v4818
  %v5568 = vpack.c.b16 %v4833, %v4826
  %v5569 = vpack.c.b16 %v4834, %v4827
  %v5570 = vpack.c.b16 %v4835, %v4828
  %v5571 = vpack.c.b16 %v4836, %v4829
  %v5572 = vpack.c.b16 %v4837, %v4830
  %v5573 = vpack.c.b16 %v4838, %v4831
  %v5574 = vpack.c.b16 %v4839, %v4832
  %v5575 = vpack.c.b16 %v4847, %v4840
  %v5576 = vpack.c.b16 %v4848, %v4841
  %v5577 = vpack.c.b16 %v4849, %v4842
  %v5578 = vpack.c.b16 %v4850, %v4843
  %v5579 = vpack.c.b16 %v4851, %v4844
  %v5580 = vpack.c.b16 %v4852, %v4845
  %v5581 = vpack.c.b16 %v4853, %v4846
  %v5582 = vpack.c.b16 %v4861, %v4854
  %v5583 = vpack.c.b16 %v4862, %v4855
  %v5584 = vpack.c.b16 %v4863, %v4856
  %v5585 = vpack.c.b16 %v4864, %v4857
  %v5586 = vpack.c.b16 %v4865, %v4858
  %v5587 = vpack.c.b16 %v4866, %v4859
  %v5588 = vpack.c.b16 %v4867, %v4860
  %v5589 = vpack.c.b16 %v4875, %v4868
  %v5590 = vpack.c.b16 %v4876, %v4869
  %v5591 = vpack.c.b16 %v4877, %v4870
  %v5592 = vpack.c.b16 %v4878, %v4871
  %v5593 = vpack.c.b16 %v4879, %v4872
  %v5594 = vpack.c.b16 %v4880, %v4873
  %v5595 = vpack.c.b16 %v4881, %v4874
  %v5596 = vpack.c.b16 %v4889, %v4882
  %v5597 = vpack.c.b16 %v4890, %v4883
  %v5598 = vpack.c.b16 %v4891, %v4884
  %v5599 = vpack.c.b16 %v4892, %v4885
  %v5600 = vpack.c.b16 %v4893, %v4886
  %v5601 = vpack.c.b16 %v4894, %v4887
  %v5602 = vpack.c.b16 %v4895, %v4888
  %v5603 = vpack.c.b16 %v4903, %v4896
  %v5604 = vpack.c.b16 %v4904, %v4897
  %v5605 = vpack.c.b16 %v4905, %v4898
  %v5606 = vpack.c.b16 %v4906, %v4899
  %v5607 = vpack.c.b16 %v4907, %v4900
  %v5608 = vpack.c.b16 %v4908, %v4901
  %v5609 = vpack.c.b16 %v4909, %v4902
  %v5610 = vpack.c.b16 %v4917, %v4910
  %v5611 = vpack.c.b16 %v4918, %v4911
  %v5612 = vpack.c.b16 %v4919, %v4912
  %v5613 = vpack.c.b16 %v4920, %v4913
  %v5614 = vpack.c.b16 %v4921, %v4914
  %v5615 = vpack.c.b16 %v4922, %v4915
  %v5616 = vpack.c.b16 %v4923, %v4916
  %v5617 = vpack.c.b16 %v4931, %v4924
  %v5618 = vpack.c.b16 %v4932, %v4925
  %v5619 = vpack.c.b16 %v4933, %v4926
  %v5620 = vpack.c.b16 %v4934, %v4927
  %v5621 = vpack.c.b16 %v4935, %v4928
  %v5622 = vpack.c.b16 %v4936, %v4929
  %v5623 = vpack.c.b16 %v4937, %v4930
  %v5624 = vpack.c.b16 %v4945, %v4938
  %v5625 = vpack.c.b16 %v4946, %v4939
  %v5626 = vpack.c.b16 %v4947, %v4940
  %v5627 = vpack.c.b16 %v4948, %v4941
  %v5628 = vpack.c.b16 %v4949, %v4942
  %v5629 = vpack.c.b16 %v4950, %v4943
  %v5630 = vpack.c.b16 %v4951, %v4944
  %v5631 = vpack.c.b16 %v4959, %v4952
  %v5632 = vpack.c.b16 %v4960, %v4953
  %v5633 = vpack.c.b16 %v4961, %v4954
  %v5634 = vpack.c.b16 %v4962, %v4955
  %v5635 = vpack.c.b16 %v4963, %v4956
  %v5636 = vpack.c.b16 %v4964, %v4957
  %v5637 = vpack.c.b16 %v4965, %v4958
  %v5638 = vpack.c.b16 %v4973, %v4966
  %v5639 = vpack.c.b16 %v4974, %v4967
  %v5640 = vpack.c.b16 %v4975, %v4968
  %v5641 = vpack.c.b16 %v4976, %v4969
  %v5642 = vpack.c.b16 %v4977, %v4970
  %v5643 = vpack.c.b16 %v4978, %v4971
  %v5644 = vpack.c.b16 %v4979, %v4972
  %v5645 = vpack.c.b16 %v4987, %v4980
  %v5646 = vpack.c.b16 %v4988, %v4981
  %v5647 = vpack.c.b16 %v4989, %v4982
  %v5648 = vpack.c.b16 %v4990, %v4983
  %v5649 = vpack.c.b16 %v4991, %v4984
  %v5650 = vpack.c.b16 %v4992, %v4985
  %v5651 = vpack.c.b16 %v4993, %v4986
  %v5652 = vpack.c.b16 %v5001, %v4994
  %v5653 = vpack.c.b16 %v5002, %v4995
  %v5654 = vpack.c.b16 %v5003, %v4996
  %v5655 = vpack.c.b16 %v5004, %v4997
  %v5656 = vpack.c.b16 %v5005, %v4998
  %v5657 = vpack.c.b16 %v5006, %v4999
  %v5658 = vpack.c.b16 %v5007, %v5000
  %v5659 = vpack.c.b16 %v5015, %v5008
  %v5660 = vpack.c.b16 %v5016, %v5009
  %v5661 = vpack.c.b16 %v5017, %v5010
  %v5662 = vpack.c.b16 %v5018, %v5011
  %v5663 = vpack.c.b16 %v5019, %v5012
  %v5664 = vpack.c.b16 %v5020, %v5013
  %v5665 = vpack.c.b16 %v5021, %v5014
  %v5666 = vpack.c.b16 %v5029, %v5022
  %v5667 = vpack.c.b16 %v5030, %v5023
  %v5668 = vpack.c.b16 %v5031, %v5024
  %v5669 = vpack.c.b16 %v5032, %v5025
  %v5670 = vpack.c.b16 %v5033, %v5026
  %v5671 = vpack.c.b16 %v5034, %v5027
  %v5672 = vpack.c.b16 %v5035, %v5028
  %v5673 = vpack.c.b16 %v5043, %v5036
  %v5674 = vpack.c.b16 %v5044, %v5037
  %v5675 = vpack.c.b16 %v5045, %v5038
  %v5676 = vpack.c.b16 %v5046, %v5039
  %v5677 = vpack.c.b16 %v5047, %v5040
  %v5678 = vpack.c.b16 %v5048, %v5041
  %v5679 = vpack.c.b16 %v5049, %v5042
  %v5680 = vpack.c.b16 %v5057, %v5050
  %v5681 = vpack.c.b16 %v5058, %v5051
  %v5682 = vpack.c.b16 %v5059, %v5052
  %v5683 = vpack.c.b16 %v5060, %v5053
  %v5684 = vpack.c.b16 %v5061, %v5054
  %v5685 = vpack.c.b16 %v5062, %v5055
  %v5686 = vpack.c.b16 %v5063, %v5056
  %v5687 = vpack.c.b16 %v5071, %v5064
  %v5688 = vpack.c.b16 %v5072, %v5065
  %v5689 = vpack.c.b16 %v5073, %v5066
  %v5690 = vpack.c.b16 %v5074, %v5067
  %v5691 = vpack.c.b16 %v5075, %v5068
  %v5692 = vpack.c.b16 %v5076, %v5069
  %v5693 = vpack.c.b16 %v5077, %v5070
  %v5694 = vpack.c.b16 %v5085, %v5078
  %v5695 = vpack.c.b16 %v5086, %v5079
  %v5696 = vpack.c.b16 %v5087, %v5080
  %v5697 = vpack.c.b16 %v5088, %v5081
  %v5698 = vpack.c.b16 %v5089, %v5082
  %v5699 = vpack.c.b16 %v5090, %v5083
  %v5700 = vpack.c.b16 %v5091, %v5084
  %v5701 = vpack.c.b16 %v5099, %v5092
  %v5702 = vpack.c.b16 %v5100, %v5093
  %v5703 = vpack.c.b16 %v5101, %v5094
  %v5704 = vpack.c.b16 %v5102, %v5095
  %v5705 = vpack.c.b16 %v5103, %v5096
  %v5706 = vpack.c.b16 %v5104, %v5097
  %v5707 = vpack.c.b16 %v5105, %v5098
  %v5708 = vpack.c.b16 %v5113, %v5106
  %v5709 = vpack.c.b16 %v5114, %v5107
  %v5710 = vpack.c.b16 %v5115, %v5108
  %v5711 = vpack.c.b16 %v5116, %v5109
  %v5712 = vpack.c.b16 %v5117, %v5110
  %v5713 = vpack.c.b16 %v5118, %v5111
  %v5714 = vpack.c.b16 %v5119, %v5112
  %v5715 = vpack.c.b16 %v5127, %v5120
  %v5716 = vpack.c.b16 %v5128, %v5121
  %v5717 = vpack.c.b16 %v5129, %v5122
  %v5718 = vpack.c.b16 %v5130, %v5123
  %v5719 = vpack.c.b16 %v5131, %v5124
  %v5720 = vpack.c.b16 %v5132, %v5125
  %v5721 = vpack.c.b16 %v5133, %v5126
  %v5722 = vpack.c.b16 %v5141, %v5134
  %v5723 = vpack.c.b16 %v5142, %v5135
  %v5724 = vpack.c.b16 %v5143, %v5136
  %v5725 = vpack.c.b16 %v5144, %v5137
  %v5726 = vpack.c.b16 %v5145, %v5138
  %v5727 = vpack.c.b16 %v5146, %v5139
  %v5728 = vpack.c.b16 %v5147, %v5140
  %v5729 = vpack.c.b16 %v5155, %v5148
  %v5730 = vpack.c.b16 %v5156, %v5149
  %v5731 = vpack.c.b16 %v5157, %v5150
  %v5732 = vpack.c.b16 %v5158, %v5151
  %v5733 = vpack.c.b16 %v5159, %v5152
  %v5734 = vpack.c.b16 %v5160, %v5153
  %v5735 = vpack.c.b16 %v5161, %v5154
  %v5736 = vpack.c.b16 %v5169, %v5162
  %v5737 = vpack.c.b16 %v5170, %v5163
  %v5738 = vpack.c.b16 %v5171, %v5164
  %v5739 = vpack.c.b16 %v5172, %v5165
  %v5740 = vpack.c.b16 %v5173, %v5166
  %v5741 = vpack.c.b16 %v5174, %v5167
  %v5742 = vpack.c.b16 %v5175, %v5168
  %v5743 = vpack.c.b16 %v5183, %v5176
  %v5744 = vpack.c.b16 %v5184, %v5177
  %v5745 = vpack.c.b16 %v5185, %v5178
  %v5746 = vpack.c.b16 %v5186, %v5179
  %v5747 = vpack.c.b16 %v5187, %v5180
  %v5748 = vpack.c.b16 %v5188, %v5181
  %v5749 = vpack.c.b16 %v5189, %v5182
  %v5750 = vpack.c.b16 %v5197, %v5190
  %v5751 = vpack.c.b16 %v5198, %v5191
  %v5752 = vpack.c.b16 %v5199, %v5192
  %v5753 = vpack.c.b16 %v5200, %v5193
  %v5754 = vpack.c.b16 %v5201, %v5194
  %v5755 = vpack.c.b16 %v5202, %v5195
  %v5756 = vpack.c.b16 %v5203, %v5196
  %v5757 = vpack.c.b16 %v5211, %v5204
  %v5758 = vpack.c.b16 %v5212, %v5205
  %v5759 = vpack.c.b16 %v5213, %v5206
  %v5760 = vpack.c.b16 %v5214, %v5207
  %v5761 = vpack.c.b16 %v5215, %v5208
  %v5762 = vpack.c.b16 %v5216, %v5209
  %v5763 = vpack.c.b16 %v5217, %v5210
  %v5764 = vpack.c.b16 %v5225, %v5218
  %v5765 = vpack.c.b16 %v5226, %v5219
  %v5766 = vpack.c.b16 %v5227, %v5220
  %v5767 = vpack.c.b16 %v5228, %v5221
  %v5768 = vpack.c.b16 %v5229, %v5222
  %v5769 = vpack.c.b16 %v5230, %v5223
  %v5770 = vpack.c.b16 %v5231, %v5224
  %v5771 = vpack.c.b16 %v5239, %v5232
  %v5772 = vpack.c.b16 %v5240, %v5233
  %v5773 = vpack.c.b16 %v5241, %v5234
  %v5774 = vpack.c.b16 %v5242, %v5235
  %v5775 = vpack.c.b16 %v5243, %v5236
  %v5776 = vpack.c.b16 %v5244, %v5237
  %v5777 = vpack.c.b16 %v5245, %v5238
  %v5778 = vpack.c.b16 %v5253, %v5246
  %v5779 = vpack.c.b16 %v5254, %v5247
  %v5780 = vpack.c.b16 %v5255, %v5248
  %v5781 = vpack.c.b16 %v5256, %v5249
  %v5782 = vpack.c.b16 %v5257, %v5250
  %v5783 = vpack.c.b16 %v5258, %v5251
  %v5784 = vpack.c.b16 %v5259, %v5252
  %v5785 = vpack.c.b16 %v5267, %v5260
  %v5786 = vpack.c.b16 %v5268, %v5261
  %v5787 = vpack.c.b16 %v5269, %v5262
  %v5788 = vpack.c.b16 %v5270, %v5263
  %v5789 = vpack.c.b16 %v5271, %v5264
  %v5790 = vpack.c.b16 %v5272, %v5265
  %v5791 = vpack.c.b16 %v5273, %v5266
  %v5792 = vpack.c.b16 %v5281, %v5274
  %v5793 = vpack.c.b16 %v5282, %v5275
  %v5794 = vpack.c.b16 %v5283, %v5276
  %v5795 = vpack.c.b16 %v5284, %v5277
  %v5796 = vpack.c.b16 %v5285, %v5278
  %v5797 = vpack.c.b16 %v5286, %v5279
  %v5798 = vpack.c.b16 %v5287, %v5280
  %v5799 = vpack.c.b16 %v5295, %v5288
  %v5800 = vpack.c.b16 %v5296, %v5289
  %v5801 = vpack.c.b16 %v5297, %v5290
  %v5802 = vpack.c.b16 %v5298, %v5291
  %v5803 = vpack.c.b16 %v5299, %v5292
  %v5804 = vpack.c.b16 %v5300, %v5293
  %v5805 = vpack.c.b16 %v5301, %v5294
  %v5806 = vpack.c.b16 %v5309, %v5302
  %v5807 = vpack.c.b16 %v5310, %v5303
  %v5808 = vpack.c.b16 %v5311, %v5304
  %v5809 = vpack.c.b16 %v5312, %v5305
  %v5810 = vpack.c.b16 %v5313, %v5306
  %v5811 = vpack.c.b16 %v5314, %v5307
  %v5812 = vpack.c.b16 %v5315, %v5308
  %v5813 = vpack.c.b16 %v5323, %v5316
  %v5814 = vpack.c.b16 %v5324, %v5317
  %v5815 = vpack.c.b16 %v5325, %v5318
  %v5816 = vpack.c.b16 %v5326, %v5319
  %v5817 = vpack.c.b16 %v5327, %v5320
  %v5818 = vpack.c.b16 %v5328, %v5321
  %v5819 = vpack.c.b16 %v5329, %v5322
  %v5820 = vpack.c.b16 %v5337, %v5330
  %v5821 = vpack.c.b16 %v5338, %v5331
  %v5822 = vpack.c.b16 %v5339, %v5332
  %v5823 = vpack.c.b16 %v5340, %v5333
  %v5824 = vpack.c.b16 %v5341, %v5334
  %v5825 = vpack.c.b16 %v5342, %v5335
  %v5826 = vpack.c.b16 %v5343, %v5336
  %v5827 = vpack.c.b16 %v5351, %v5344
  %v5828 = vpack.c.b16 %v5352, %v5345
  %v5829 = vpack.c.b16 %v5353, %v5346
  %v5830 = vpack.c.b16 %v5354, %v5347
  %v5831 = vpack.c.b16 %v5355, %v5348
  %v5832 = vpack.c.b16 %v5356, %v5349
  %v5833 = vpack.c.b16 %v5357, %v5350
  %v5834 = vpack.c.b16 %v5365, %v5358
  %v5835 = vpack.c.b16 %v5366, %v5359
  %v5836 = vpack.c.b16 %v5367, %v5360
  %v5837 = vpack.c.b16 %v5368, %v5361
  %v5838 = vpack.c.b16 %v5369, %v5362
  %v5839 = vpack.c.b16 %v5370, %v5363
  %v5840 = vpack.c.b16 %v5371, %v5364
  %v5841 = vpack.c.b16 %v5379, %v5372
  %v5842 = vpack.c.b16 %v5380, %v5373
  %v5843 = vpack.c.b16 %v5381, %v5374
  %v5844 = vpack.c.b16 %v5382, %v5375
  %v5845 = vpack.c.b16 %v5383, %v5376
  %v5846 = vpack.c.b16 %v5384, %v5377
  %v5847 = vpack.c.b16 %v5385, %v5378
  %v5848 = vpack.c.b16 %v5393, %v5386
  %v5849 = vpack.c.b16 %v5394, %v5387
  %v5850 = vpack.c.b16 %v5395, %v5388
  %v5851 = vpack.c.b16 %v5396, %v5389
  %v5852 = vpack.c.b16 %v5397, %v5390
  %v5853 = vpack.c.b16 %v5398, %v5391
  %v5854 = vpack.c.b16 %v5399, %v5392
  %v5855 = vpack.c.b16 %v5407, %v5400
  %v5856 = vpack.c.b16 %v5408, %v5401
  %v5857 = vpack.c.b16 %v5409, %v5402
  %v5858 = vpack.c.b16 %v5410, %v5403
  %v5859 = vpack.c.b16 %v5411, %v5404
  %v5860 = vpack.c.b16 %v5412, %v5405
  %v5861 = vpack.c.b16 %v5413, %v5406
  %6310 = vmatprep.subr.bf16.mxu0 %v5464
  %6311 = vmatpush1.bf16.msra.mxu0 %v5463
  %6312 = vmatprep.subr.bf16.mxu0 %v5457
  %6313 = vmatpush1.bf16.msra.mxu0 %v5456
  %6314 = vmatprep.subr.bf16.mxu0 %v5450
  %6315 = vmatpush1.bf16.msra.mxu0 %v5449
  %6316 = vmatprep.subr.bf16.mxu0 %v5443
  %6317 = vmatpush1.bf16.msra.mxu0 %v5442
  %6318 = vmatprep.subr.bf16.mxu0 %v5436
  %6319 = vmatpush1.bf16.msra.mxu0 %v5435
  %6320 = vmatprep.subr.bf16.mxu0 %v5429
  %6321 = vmatpush1.bf16.msra.mxu0 %v5428
  %6322 = vmatprep.subr.bf16.mxu0 %v5422
  %6323 = vmatpush1.bf16.msra.mxu0 %v5421
  %6324 = vmatprep.subr.bf16.mxu0 %v5415
  %6325 = vmatpush1.bf16.msra.mxu0 %v5414
  %6326 = vmatprep.subr.bf16.mxu0 %v5520
  %6327 = vmatpush2.bf16.msra.mxu0 %v5519
  %6328 = vmatprep.subr.bf16.mxu0 %v5513
  %6329 = vmatpush2.bf16.msra.mxu0 %v5512
  %6330 = vmatprep.subr.bf16.mxu0 %v5506
  %6331 = vmatpush2.bf16.msra.mxu0 %v5505
  %6332 = vmatprep.subr.bf16.mxu0 %v5499
  %6333 = vmatpush2.bf16.msra.mxu0 %v5498
  %6334 = vmatprep.subr.bf16.mxu0 %v5492
  %6335 = vmatpush2.bf16.msra.mxu0 %v5491
  %6336 = vmatprep.subr.bf16.mxu0 %v5485
  %6337 = vmatpush2.bf16.msra.mxu0 %v5484
  %6338 = vmatprep.subr.bf16.mxu0 %v5478
  %6339 = vmatpush2.bf16.msra.mxu0 %v5477
  %6340 = vmatprep.subr.bf16.mxu0 %v5471
  %6341 = vmatpush2.bf16.msra.mxu0 %v5470
  %6342 = vmatprep.mubr.bf16.mxu0 %v3450
  %6343 = vmatmul.mubr.bf16.gmra.mxu0 %v3449
  %v6344 = vpop.f32.mrf.mxu0
  %v6345 = vadd.f32 %v3974, %v6344
  %v6346 = vpop.f32.mrf.mxu0
  %v6347 = vadd.f32 %v3978, %v6346
  %v6348 = vpop.f32.mrf.mxu0
  %v6349 = vpop.f32.mrf.mxu0
  %6350 = vdwg.mxu0
  %6351 = vmatprep.subr.bf16.mxu0 %v5576
  %6352 = vmatpush1.bf16.msra.mxu0 %v5575
  %6353 = vmatprep.subr.bf16.mxu0 %v5569
  %6354 = vmatpush1.bf16.msra.mxu0 %v5568
  %6355 = vmatprep.subr.bf16.mxu0 %v5562
  %6356 = vmatpush1.bf16.msra.mxu0 %v5561
  %6357 = vmatprep.subr.bf16.mxu0 %v5555
  %6358 = vmatpush1.bf16.msra.mxu0 %v5554
  %6359 = vmatprep.subr.bf16.mxu0 %v5548
  %6360 = vmatpush1.bf16.msra.mxu0 %v5547
  %6361 = vmatprep.subr.bf16.mxu0 %v5541
  %6362 = vmatpush1.bf16.msra.mxu0 %v5540
  %6363 = vmatprep.subr.bf16.mxu0 %v5534
  %6364 = vmatpush1.bf16.msra.mxu0 %v5533
  %6365 = vmatprep.subr.bf16.mxu0 %v5527
  %6366 = vmatpush1.bf16.msra.mxu0 %v5526
  %6367 = vmatprep.subr.bf16.mxu0 %v5632
  %6368 = vmatpush2.bf16.msra.mxu0 %v5631
  %6369 = vmatprep.subr.bf16.mxu0 %v5625
  %6370 = vmatpush2.bf16.msra.mxu0 %v5624
  %6371 = vmatprep.subr.bf16.mxu0 %v5618
  %6372 = vmatpush2.bf16.msra.mxu0 %v5617
  %6373 = vmatprep.subr.bf16.mxu0 %v5611
  %6374 = vmatpush2.bf16.msra.mxu0 %v5610
  %6375 = vmatprep.subr.bf16.mxu0 %v5604
  %6376 = vmatpush2.bf16.msra.mxu0 %v5603
  %6377 = vmatprep.subr.bf16.mxu0 %v5597
  %6378 = vmatpush2.bf16.msra.mxu0 %v5596
  %6379 = vmatprep.subr.bf16.mxu0 %v5590
  %6380 = vmatpush2.bf16.msra.mxu0 %v5589
  %6381 = vmatprep.subr.bf16.mxu0 %v5583
  %6382 = vmatpush2.bf16.msra.mxu0 %v5582
  %6383 = vmatprep.mubr.bf16.mxu0 %v3452
  %6384 = vmatmul.mubr.bf16.gmra.mxu0 %v3451
  %v6385 = vpop.f32.mrf.mxu0
  %v6386 = vadd.f32 %v6345, %v6385
  %v6387 = vpop.f32.mrf.mxu0
  %v6388 = vadd.f32 %v6347, %v6387
  %v6389 = vpop.f32.mrf.mxu0
  %v6390 = vpop.f32.mrf.mxu0
  %6391 = vdwg.mxu0
  %6392 = vmatprep.subr.bf16.mxu0 %v5688
  %6393 = vmatpush1.bf16.msra.mxu0 %v5687
  %6394 = vmatprep.subr.bf16.mxu0 %v5681
  %6395 = vmatpush1.bf16.msra.mxu0 %v5680
  %6396 = vmatprep.subr.bf16.mxu0 %v5674
  %6397 = vmatpush1.bf16.msra.mxu0 %v5673
  %6398 = vmatprep.subr.bf16.mxu0 %v5667
  %6399 = vmatpush1.bf16.msra.mxu0 %v5666
  %6400 = vmatprep.subr.bf16.mxu0 %v5660
  %6401 = vmatpush1.bf16.msra.mxu0 %v5659
  %6402 = vmatprep.subr.bf16.mxu0 %v5653
  %6403 = vmatpush1.bf16.msra.mxu0 %v5652
  %6404 = vmatprep.subr.bf16.mxu0 %v5646
  %6405 = vmatpush1.bf16.msra.mxu0 %v5645
  %6406 = vmatprep.subr.bf16.mxu0 %v5639
  %6407 = vmatpush1.bf16.msra.mxu0 %v5638
  %6408 = vmatprep.subr.bf16.mxu0 %v5744
  %6409 = vmatpush2.bf16.msra.mxu0 %v5743
  %6410 = vmatprep.subr.bf16.mxu0 %v5737
  %6411 = vmatpush2.bf16.msra.mxu0 %v5736
  %6412 = vmatprep.subr.bf16.mxu0 %v5730
  %6413 = vmatpush2.bf16.msra.mxu0 %v5729
  %6414 = vmatprep.subr.bf16.mxu0 %v5723
  %6415 = vmatpush2.bf16.msra.mxu0 %v5722
  %6416 = vmatprep.subr.bf16.mxu0 %v5716
  %6417 = vmatpush2.bf16.msra.mxu0 %v5715
  %6418 = vmatprep.subr.bf16.mxu0 %v5709
  %6419 = vmatpush2.bf16.msra.mxu0 %v5708
  %6420 = vmatprep.subr.bf16.mxu0 %v5702
  %6421 = vmatpush2.bf16.msra.mxu0 %v5701
  %6422 = vmatprep.subr.bf16.mxu0 %v5695
  %6423 = vmatpush2.bf16.msra.mxu0 %v5694
  %6424 = vmatprep.mubr.bf16.mxu0 %v3454
  %6425 = vmatmul.mubr.bf16.gmra.mxu0 %v3453
  %v6426 = vpop.f32.mrf.mxu0
  %v6427 = vadd.f32 %v6386, %v6426
  %v6428 = vpop.f32.mrf.mxu0
  %v6429 = vadd.f32 %v6388, %v6428
  %v6430 = vpop.f32.mrf.mxu0
  %v6431 = vpop.f32.mrf.mxu0
  %6432 = vdwg.mxu0
  %6433 = vmatprep.subr.bf16.mxu0 %v5800
  %6434 = vmatpush1.bf16.msra.mxu0 %v5799
  %6435 = vmatprep.subr.bf16.mxu0 %v5793
  %6436 = vmatpush1.bf16.msra.mxu0 %v5792
  %6437 = vmatprep.subr.bf16.mxu0 %v5786
  %6438 = vmatpush1.bf16.msra.mxu0 %v5785
  %6439 = vmatprep.subr.bf16.mxu0 %v5779
  %6440 = vmatpush1.bf16.msra.mxu0 %v5778
  %6441 = vmatprep.subr.bf16.mxu0 %v5772
  %6442 = vmatpush1.bf16.msra.mxu0 %v5771
  %6443 = vmatprep.subr.bf16.mxu0 %v5765
  %6444 = vmatpush1.bf16.msra.mxu0 %v5764
  %6445 = vmatprep.subr.bf16.mxu0 %v5758
  %6446 = vmatpush1.bf16.msra.mxu0 %v5757
  %6447 = vmatprep.subr.bf16.mxu0 %v5751
  %6448 = vmatpush1.bf16.msra.mxu0 %v5750
  %6449 = vmatprep.subr.bf16.mxu0 %v5856
  %6450 = vmatpush2.bf16.msra.mxu0 %v5855
  %6451 = vmatprep.subr.bf16.mxu0 %v5849
  %6452 = vmatpush2.bf16.msra.mxu0 %v5848
  %6453 = vmatprep.subr.bf16.mxu0 %v5842
  %6454 = vmatpush2.bf16.msra.mxu0 %v5841
  %6455 = vmatprep.subr.bf16.mxu0 %v5835
  %6456 = vmatpush2.bf16.msra.mxu0 %v5834
  %6457 = vmatprep.subr.bf16.mxu0 %v5828
  %6458 = vmatpush2.bf16.msra.mxu0 %v5827
  %6459 = vmatprep.subr.bf16.mxu0 %v5821
  %6460 = vmatpush2.bf16.msra.mxu0 %v5820
  %6461 = vmatprep.subr.bf16.mxu0 %v5814
  %6462 = vmatpush2.bf16.msra.mxu0 %v5813
  %6463 = vmatprep.subr.bf16.mxu0 %v5807
  %6464 = vmatpush2.bf16.msra.mxu0 %v5806
  %6465 = vmatprep.mubr.bf16.mxu0 %v3456
  %6466 = vmatmul.mubr.bf16.gmra.mxu0 %v3455
  %v6467 = vpop.f32.mrf.mxu0
  %v6468 = vadd.f32 %v6427, %v6467
  %v6469 = vpop.f32.mrf.mxu0
  %v6470 = vadd.f32 %v6429, %v6469
  %v6471 = vpop.f32.mrf.mxu0
  %v6472 = vpop.f32.mrf.mxu0
  %6473 = vdwg.mxu0
  %6474 = vmatprep.subr.bf16.mxu0 %v5466
  %6475 = vmatpush1.bf16.msra.mxu0 %v5465
  %6476 = vmatprep.subr.bf16.mxu0 %v5459
  %6477 = vmatpush1.bf16.msra.mxu0 %v5458
  %6478 = vmatprep.subr.bf16.mxu0 %v5452
  %6479 = vmatpush1.bf16.msra.mxu0 %v5451
  %6480 = vmatprep.subr.bf16.mxu0 %v5445
  %6481 = vmatpush1.bf16.msra.mxu0 %v5444
  %6482 = vmatprep.subr.bf16.mxu0 %v5438
  %6483 = vmatpush1.bf16.msra.mxu0 %v5437
  %6484 = vmatprep.subr.bf16.mxu0 %v5431
  %6485 = vmatpush1.bf16.msra.mxu0 %v5430
  %6486 = vmatprep.subr.bf16.mxu0 %v5424
  %6487 = vmatpush1.bf16.msra.mxu0 %v5423
  %6488 = vmatprep.subr.bf16.mxu0 %v5417
  %6489 = vmatpush1.bf16.msra.mxu0 %v5416
  %6490 = vmatprep.subr.bf16.mxu0 %v5522
  %6491 = vmatpush2.bf16.msra.mxu0 %v5521
  %6492 = vmatprep.subr.bf16.mxu0 %v5515
  %6493 = vmatpush2.bf16.msra.mxu0 %v5514
  %6494 = vmatprep.subr.bf16.mxu0 %v5508
  %6495 = vmatpush2.bf16.msra.mxu0 %v5507
  %6496 = vmatprep.subr.bf16.mxu0 %v5501
  %6497 = vmatpush2.bf16.msra.mxu0 %v5500
  %6498 = vmatprep.subr.bf16.mxu0 %v5494
  %6499 = vmatpush2.bf16.msra.mxu0 %v5493
  %6500 = vmatprep.subr.bf16.mxu0 %v5487
  %6501 = vmatpush2.bf16.msra.mxu0 %v5486
  %6502 = vmatprep.subr.bf16.mxu0 %v5480
  %6503 = vmatpush2.bf16.msra.mxu0 %v5479
  %6504 = vmatprep.subr.bf16.mxu0 %v5473
  %6505 = vmatpush2.bf16.msra.mxu0 %v5472
  %6506 = vmatprep.mubr.bf16.mxu0 %v3450
  %6507 = vmatmul.mubr.bf16.gmra.mxu0 %v3449
  %v6508 = vpop.f32.mrf.mxu0
  %v6509 = vadd.f32 %v3982, %v6508
  %v6510 = vpop.f32.mrf.mxu0
  %v6511 = vadd.f32 %v3986, %v6510
  %v6512 = vpop.f32.mrf.mxu0
  %v6513 = vpop.f32.mrf.mxu0
  %6514 = vdwg.mxu0
  %6515 = vmatprep.subr.bf16.mxu0 %v5578
  %6516 = vmatpush1.bf16.msra.mxu0 %v5577
  %6517 = vmatprep.subr.bf16.mxu0 %v5571
  %6518 = vmatpush1.bf16.msra.mxu0 %v5570
  %6519 = vmatprep.subr.bf16.mxu0 %v5564
  %6520 = vmatpush1.bf16.msra.mxu0 %v5563
  %6521 = vmatprep.subr.bf16.mxu0 %v5557
  %6522 = vmatpush1.bf16.msra.mxu0 %v5556
  %6523 = vmatprep.subr.bf16.mxu0 %v5550
  %6524 = vmatpush1.bf16.msra.mxu0 %v5549
  %6525 = vmatprep.subr.bf16.mxu0 %v5543
  %6526 = vmatpush1.bf16.msra.mxu0 %v5542
  %6527 = vmatprep.subr.bf16.mxu0 %v5536
  %6528 = vmatpush1.bf16.msra.mxu0 %v5535
  %6529 = vmatprep.subr.bf16.mxu0 %v5529
  %6530 = vmatpush1.bf16.msra.mxu0 %v5528
  %6531 = vmatprep.subr.bf16.mxu0 %v5634
  %6532 = vmatpush2.bf16.msra.mxu0 %v5633
  %6533 = vmatprep.subr.bf16.mxu0 %v5627
  %6534 = vmatpush2.bf16.msra.mxu0 %v5626
  %6535 = vmatprep.subr.bf16.mxu0 %v5620
  %6536 = vmatpush2.bf16.msra.mxu0 %v5619
  %6537 = vmatprep.subr.bf16.mxu0 %v5613
  %6538 = vmatpush2.bf16.msra.mxu0 %v5612
  %6539 = vmatprep.subr.bf16.mxu0 %v5606
  %6540 = vmatpush2.bf16.msra.mxu0 %v5605
  %6541 = vmatprep.subr.bf16.mxu0 %v5599
  %6542 = vmatpush2.bf16.msra.mxu0 %v5598
  %6543 = vmatprep.subr.bf16.mxu0 %v5592
  %6544 = vmatpush2.bf16.msra.mxu0 %v5591
  %6545 = vmatprep.subr.bf16.mxu0 %v5585
  %6546 = vmatpush2.bf16.msra.mxu0 %v5584
  %6547 = vmatprep.mubr.bf16.mxu0 %v3452
  %6548 = vmatmul.mubr.bf16.gmra.mxu0 %v3451
  %v6549 = vpop.f32.mrf.mxu0
  %v6550 = vadd.f32 %v6509, %v6549
  %v6551 = vpop.f32.mrf.mxu0
  %v6552 = vadd.f32 %v6511, %v6551
  %v6553 = vpop.f32.mrf.mxu0
  %v6554 = vpop.f32.mrf.mxu0
  %6555 = vdwg.mxu0
  %6556 = vmatprep.subr.bf16.mxu0 %v5690
  %6557 = vmatpush1.bf16.msra.mxu0 %v5689
  %6558 = vmatprep.subr.bf16.mxu0 %v5683
  %6559 = vmatpush1.bf16.msra.mxu0 %v5682
  %6560 = vmatprep.subr.bf16.mxu0 %v5676
  %6561 = vmatpush1.bf16.msra.mxu0 %v5675
  %6562 = vmatprep.subr.bf16.mxu0 %v5669
  %6563 = vmatpush1.bf16.msra.mxu0 %v5668
  %6564 = vmatprep.subr.bf16.mxu0 %v5662
  %6565 = vmatpush1.bf16.msra.mxu0 %v5661
  %6566 = vmatprep.subr.bf16.mxu0 %v5655
  %6567 = vmatpush1.bf16.msra.mxu0 %v5654
  %6568 = vmatprep.subr.bf16.mxu0 %v5648
  %6569 = vmatpush1.bf16.msra.mxu0 %v5647
  %6570 = vmatprep.subr.bf16.mxu0 %v5641
  %6571 = vmatpush1.bf16.msra.mxu0 %v5640
  %6572 = vmatprep.subr.bf16.mxu0 %v5746
  %6573 = vmatpush2.bf16.msra.mxu0 %v5745
  %6574 = vmatprep.subr.bf16.mxu0 %v5739
  %6575 = vmatpush2.bf16.msra.mxu0 %v5738
  %6576 = vmatprep.subr.bf16.mxu0 %v5732
  %6577 = vmatpush2.bf16.msra.mxu0 %v5731
  %6578 = vmatprep.subr.bf16.mxu0 %v5725
  %6579 = vmatpush2.bf16.msra.mxu0 %v5724
  %6580 = vmatprep.subr.bf16.mxu0 %v5718
  %6581 = vmatpush2.bf16.msra.mxu0 %v5717
  %6582 = vmatprep.subr.bf16.mxu0 %v5711
  %6583 = vmatpush2.bf16.msra.mxu0 %v5710
  %6584 = vmatprep.subr.bf16.mxu0 %v5704
  %6585 = vmatpush2.bf16.msra.mxu0 %v5703
  %6586 = vmatprep.subr.bf16.mxu0 %v5697
  %6587 = vmatpush2.bf16.msra.mxu0 %v5696
  %6588 = vmatprep.mubr.bf16.mxu0 %v3454
  %6589 = vmatmul.mubr.bf16.gmra.mxu0 %v3453
  %v6590 = vpop.f32.mrf.mxu0
  %v6591 = vadd.f32 %v6550, %v6590
  %v6592 = vpop.f32.mrf.mxu0
  %v6593 = vadd.f32 %v6552, %v6592
  %v6594 = vpop.f32.mrf.mxu0
  %v6595 = vpop.f32.mrf.mxu0
  %6596 = vdwg.mxu0
  %6597 = vmatprep.subr.bf16.mxu0 %v5802
  %6598 = vmatpush1.bf16.msra.mxu0 %v5801
  %6599 = vmatprep.subr.bf16.mxu0 %v5795
  %6600 = vmatpush1.bf16.msra.mxu0 %v5794
  %6601 = vmatprep.subr.bf16.mxu0 %v5788
  %6602 = vmatpush1.bf16.msra.mxu0 %v5787
  %6603 = vmatprep.subr.bf16.mxu0 %v5781
  %6604 = vmatpush1.bf16.msra.mxu0 %v5780
  %6605 = vmatprep.subr.bf16.mxu0 %v5774
  %6606 = vmatpush1.bf16.msra.mxu0 %v5773
  %6607 = vmatprep.subr.bf16.mxu0 %v5767
  %6608 = vmatpush1.bf16.msra.mxu0 %v5766
  %6609 = vmatprep.subr.bf16.mxu0 %v5760
  %6610 = vmatpush1.bf16.msra.mxu0 %v5759
  %6611 = vmatprep.subr.bf16.mxu0 %v5753
  %6612 = vmatpush1.bf16.msra.mxu0 %v5752
  %6613 = vmatprep.subr.bf16.mxu0 %v5858
  %6614 = vmatpush2.bf16.msra.mxu0 %v5857
  %6615 = vmatprep.subr.bf16.mxu0 %v5851
  %6616 = vmatpush2.bf16.msra.mxu0 %v5850
  %6617 = vmatprep.subr.bf16.mxu0 %v5844
  %6618 = vmatpush2.bf16.msra.mxu0 %v5843
  %6619 = vmatprep.subr.bf16.mxu0 %v5837
  %6620 = vmatpush2.bf16.msra.mxu0 %v5836
  %6621 = vmatprep.subr.bf16.mxu0 %v5830
  %6622 = vmatpush2.bf16.msra.mxu0 %v5829
  %6623 = vmatprep.subr.bf16.mxu0 %v5823
  %6624 = vmatpush2.bf16.msra.mxu0 %v5822
  %6625 = vmatprep.subr.bf16.mxu0 %v5816
  %6626 = vmatpush2.bf16.msra.mxu0 %v5815
  %6627 = vmatprep.subr.bf16.mxu0 %v5809
  %6628 = vmatpush2.bf16.msra.mxu0 %v5808
  %6629 = vmatprep.mubr.bf16.mxu0 %v3456
  %6630 = vmatmul.mubr.bf16.gmra.mxu0 %v3455
  %v6631 = vpop.f32.mrf.mxu0
  %v6632 = vadd.f32 %v6591, %v6631
  %v6633 = vpop.f32.mrf.mxu0
  %v6634 = vadd.f32 %v6593, %v6633
  %v6635 = vpop.f32.mrf.mxu0
  %v6636 = vpop.f32.mrf.mxu0
  %6637 = vdwg.mxu0
  %6638 = vmatprep.subr.bf16.mxu0 %v5468
  %6639 = vmatpush1.bf16.msra.mxu0 %v5467
  %6640 = vmatprep.subr.bf16.mxu0 %v5461
  %6641 = vmatpush1.bf16.msra.mxu0 %v5460
  %6642 = vmatprep.subr.bf16.mxu0 %v5454
  %6643 = vmatpush1.bf16.msra.mxu0 %v5453
  %6644 = vmatprep.subr.bf16.mxu0 %v5447
  %6645 = vmatpush1.bf16.msra.mxu0 %v5446
  %6646 = vmatprep.subr.bf16.mxu0 %v5440
  %6647 = vmatpush1.bf16.msra.mxu0 %v5439
  %6648 = vmatprep.subr.bf16.mxu0 %v5433
  %6649 = vmatpush1.bf16.msra.mxu0 %v5432
  %6650 = vmatprep.subr.bf16.mxu0 %v5426
  %6651 = vmatpush1.bf16.msra.mxu0 %v5425
  %6652 = vmatprep.subr.bf16.mxu0 %v5419
  %6653 = vmatpush1.bf16.msra.mxu0 %v5418
  %6654 = vmatprep.subr.bf16.mxu0 %v5524
  %6655 = vmatpush2.bf16.msra.mxu0 %v5523
  %6656 = vmatprep.subr.bf16.mxu0 %v5517
  %6657 = vmatpush2.bf16.msra.mxu0 %v5516
  %6658 = vmatprep.subr.bf16.mxu0 %v5510
  %6659 = vmatpush2.bf16.msra.mxu0 %v5509
  %6660 = vmatprep.subr.bf16.mxu0 %v5503
  %6661 = vmatpush2.bf16.msra.mxu0 %v5502
  %6662 = vmatprep.subr.bf16.mxu0 %v5496
  %6663 = vmatpush2.bf16.msra.mxu0 %v5495
  %6664 = vmatprep.subr.bf16.mxu0 %v5489
  %6665 = vmatpush2.bf16.msra.mxu0 %v5488
  %6666 = vmatprep.subr.bf16.mxu0 %v5482
  %6667 = vmatpush2.bf16.msra.mxu0 %v5481
  %6668 = vmatprep.subr.bf16.mxu0 %v5475
  %6669 = vmatpush2.bf16.msra.mxu0 %v5474
  %6670 = vmatprep.mubr.bf16.mxu0 %v3450
  %6671 = vmatmul.mubr.bf16.gmra.mxu0 %v3449
  %v6672 = vpop.f32.mrf.mxu0
  %v6673 = vadd.f32 %v3990, %v6672
  %v6674 = vpop.f32.mrf.mxu0
  %v6675 = vadd.f32 %v3994, %v6674
  %v6676 = vpop.f32.mrf.mxu0
  %v6677 = vpop.f32.mrf.mxu0
  %6678 = vdwg.mxu0
  %6679 = vmatprep.subr.bf16.mxu0 %v5580
  %6680 = vmatpush1.bf16.msra.mxu0 %v5579
  %6681 = vmatprep.subr.bf16.mxu0 %v5573
  %6682 = vmatpush1.bf16.msra.mxu0 %v5572
  %6683 = vmatprep.subr.bf16.mxu0 %v5566
  %6684 = vmatpush1.bf16.msra.mxu0 %v5565
  %6685 = vmatprep.subr.bf16.mxu0 %v5559
  %6686 = vmatpush1.bf16.msra.mxu0 %v5558
  %6687 = vmatprep.subr.bf16.mxu0 %v5552
  %6688 = vmatpush1.bf16.msra.mxu0 %v5551
  %6689 = vmatprep.subr.bf16.mxu0 %v5545
  %6690 = vmatpush1.bf16.msra.mxu0 %v5544
  %6691 = vmatprep.subr.bf16.mxu0 %v5538
  %6692 = vmatpush1.bf16.msra.mxu0 %v5537
  %6693 = vmatprep.subr.bf16.mxu0 %v5531
  %6694 = vmatpush1.bf16.msra.mxu0 %v5530
  %6695 = vmatprep.subr.bf16.mxu0 %v5636
  %6696 = vmatpush2.bf16.msra.mxu0 %v5635
  %6697 = vmatprep.subr.bf16.mxu0 %v5629
  %6698 = vmatpush2.bf16.msra.mxu0 %v5628
  %6699 = vmatprep.subr.bf16.mxu0 %v5622
  %6700 = vmatpush2.bf16.msra.mxu0 %v5621
  %6701 = vmatprep.subr.bf16.mxu0 %v5615
  %6702 = vmatpush2.bf16.msra.mxu0 %v5614
  %6703 = vmatprep.subr.bf16.mxu0 %v5608
  %6704 = vmatpush2.bf16.msra.mxu0 %v5607
  %6705 = vmatprep.subr.bf16.mxu0 %v5601
  %6706 = vmatpush2.bf16.msra.mxu0 %v5600
  %6707 = vmatprep.subr.bf16.mxu0 %v5594
  %6708 = vmatpush2.bf16.msra.mxu0 %v5593
  %6709 = vmatprep.subr.bf16.mxu0 %v5587
  %6710 = vmatpush2.bf16.msra.mxu0 %v5586
  %6711 = vmatprep.mubr.bf16.mxu0 %v3452
  %6712 = vmatmul.mubr.bf16.gmra.mxu0 %v3451
  %v6713 = vpop.f32.mrf.mxu0
  %v6714 = vadd.f32 %v6673, %v6713
  %v6715 = vpop.f32.mrf.mxu0
  %v6716 = vadd.f32 %v6675, %v6715
  %v6717 = vpop.f32.mrf.mxu0
  %v6718 = vpop.f32.mrf.mxu0
  %6719 = vdwg.mxu0
  %6720 = vmatprep.subr.bf16.mxu0 %v5692
  %6721 = vmatpush1.bf16.msra.mxu0 %v5691
  %6722 = vmatprep.subr.bf16.mxu0 %v5685
  %6723 = vmatpush1.bf16.msra.mxu0 %v5684
  %6724 = vmatprep.subr.bf16.mxu0 %v5678
  %6725 = vmatpush1.bf16.msra.mxu0 %v5677
  %6726 = vmatprep.subr.bf16.mxu0 %v5671
  %6727 = vmatpush1.bf16.msra.mxu0 %v5670
  %6728 = vmatprep.subr.bf16.mxu0 %v5664
  %6729 = vmatpush1.bf16.msra.mxu0 %v5663
  %6730 = vmatprep.subr.bf16.mxu0 %v5657
  %6731 = vmatpush1.bf16.msra.mxu0 %v5656
  %6732 = vmatprep.subr.bf16.mxu0 %v5650
  %6733 = vmatpush1.bf16.msra.mxu0 %v5649
  %6734 = vmatprep.subr.bf16.mxu0 %v5643
  %6735 = vmatpush1.bf16.msra.mxu0 %v5642
  %6736 = vmatprep.subr.bf16.mxu0 %v5748
  %6737 = vmatpush2.bf16.msra.mxu0 %v5747
  %6738 = vmatprep.subr.bf16.mxu0 %v5741
  %6739 = vmatpush2.bf16.msra.mxu0 %v5740
  %6740 = vmatprep.subr.bf16.mxu0 %v5734
  %6741 = vmatpush2.bf16.msra.mxu0 %v5733
  %6742 = vmatprep.subr.bf16.mxu0 %v5727
  %6743 = vmatpush2.bf16.msra.mxu0 %v5726
  %6744 = vmatprep.subr.bf16.mxu0 %v5720
  %6745 = vmatpush2.bf16.msra.mxu0 %v5719
  %6746 = vmatprep.subr.bf16.mxu0 %v5713
  %6747 = vmatpush2.bf16.msra.mxu0 %v5712
  %6748 = vmatprep.subr.bf16.mxu0 %v5706
  %6749 = vmatpush2.bf16.msra.mxu0 %v5705
  %6750 = vmatprep.subr.bf16.mxu0 %v5699
  %6751 = vmatpush2.bf16.msra.mxu0 %v5698
  %6752 = vmatprep.mubr.bf16.mxu0 %v3454
  %6753 = vmatmul.mubr.bf16.gmra.mxu0 %v3453
  %v6754 = vpop.f32.mrf.mxu0
  %v6755 = vadd.f32 %v6714, %v6754
  %v6756 = vpop.f32.mrf.mxu0
  %v6757 = vadd.f32 %v6716, %v6756
  %v6758 = vpop.f32.mrf.mxu0
  %v6759 = vpop.f32.mrf.mxu0
  %6760 = vdwg.mxu0
  %6761 = vmatprep.subr.bf16.mxu0 %v5804
  %6762 = vmatpush1.bf16.msra.mxu0 %v5803
  %6763 = vmatprep.subr.bf16.mxu0 %v5797
  %6764 = vmatpush1.bf16.msra.mxu0 %v5796
  %6765 = vmatprep.subr.bf16.mxu0 %v5790
  %6766 = vmatpush1.bf16.msra.mxu0 %v5789
  %6767 = vmatprep.subr.bf16.mxu0 %v5783
  %6768 = vmatpush1.bf16.msra.mxu0 %v5782
  %6769 = vmatprep.subr.bf16.mxu0 %v5776
  %6770 = vmatpush1.bf16.msra.mxu0 %v5775
  %6771 = vmatprep.subr.bf16.mxu0 %v5769
  %6772 = vmatpush1.bf16.msra.mxu0 %v5768
  %6773 = vmatprep.subr.bf16.mxu0 %v5762
  %6774 = vmatpush1.bf16.msra.mxu0 %v5761
  %6775 = vmatprep.subr.bf16.mxu0 %v5755
  %6776 = vmatpush1.bf16.msra.mxu0 %v5754
  %6777 = vmatprep.subr.bf16.mxu0 %v5860
  %6778 = vmatpush2.bf16.msra.mxu0 %v5859
  %6779 = vmatprep.subr.bf16.mxu0 %v5853
  %6780 = vmatpush2.bf16.msra.mxu0 %v5852
  %6781 = vmatprep.subr.bf16.mxu0 %v5846
  %6782 = vmatpush2.bf16.msra.mxu0 %v5845
  %6783 = vmatprep.subr.bf16.mxu0 %v5839
  %6784 = vmatpush2.bf16.msra.mxu0 %v5838
  %6785 = vmatprep.subr.bf16.mxu0 %v5832
  %6786 = vmatpush2.bf16.msra.mxu0 %v5831
  %6787 = vmatprep.subr.bf16.mxu0 %v5825
  %6788 = vmatpush2.bf16.msra.mxu0 %v5824
  %6789 = vmatprep.subr.bf16.mxu0 %v5818
  %6790 = vmatpush2.bf16.msra.mxu0 %v5817
  %6791 = vmatprep.subr.bf16.mxu0 %v5811
  %6792 = vmatpush2.bf16.msra.mxu0 %v5810
  %6793 = vmatprep.mubr.bf16.mxu0 %v3456
  %6794 = vmatmul.mubr.bf16.gmra.mxu0 %v3455
  %v6795 = vpop.f32.mrf.mxu0
  %v6796 = vadd.f32 %v6755, %v6795
  %v6797 = vpop.f32.mrf.mxu0
  %v6798 = vadd.f32 %v6757, %v6797
  %v6799 = vpop.f32.mrf.mxu0
  %v6800 = vpop.f32.mrf.mxu0
  %6801 = vdwg.mxu0
  %6802 = vmatprep.subr.bf16.mxu0 0
  %6803 = vmatpush1.bf16.msra.mxu0 %v5469
  %6804 = vmatprep.subr.bf16.mxu0 0
  %6805 = vmatpush1.bf16.msra.mxu0 %v5462
  %6806 = vmatprep.subr.bf16.mxu0 0
  %6807 = vmatpush1.bf16.msra.mxu0 %v5455
  %6808 = vmatprep.subr.bf16.mxu0 0
  %6809 = vmatpush1.bf16.msra.mxu0 %v5448
  %6810 = vmatprep.subr.bf16.mxu0 0
  %6811 = vmatpush1.bf16.msra.mxu0 %v5441
  %6812 = vmatprep.subr.bf16.mxu0 0
  %6813 = vmatpush1.bf16.msra.mxu0 %v5434
  %6814 = vmatprep.subr.bf16.mxu0 0
  %6815 = vmatpush1.bf16.msra.mxu0 %v5427
  %6816 = vmatprep.subr.bf16.mxu0 0
  %6817 = vmatpush1.bf16.msra.mxu0 %v5420
  %6818 = vmatprep.subr.bf16.mxu0 0
  %6819 = vmatpush2.bf16.msra.mxu0 %v5525
  %6820 = vmatprep.subr.bf16.mxu0 0
  %6821 = vmatpush2.bf16.msra.mxu0 %v5518
  %6822 = vmatprep.subr.bf16.mxu0 0
  %6823 = vmatpush2.bf16.msra.mxu0 %v5511
  %6824 = vmatprep.subr.bf16.mxu0 0
  %6825 = vmatpush2.bf16.msra.mxu0 %v5504
  %6826 = vmatprep.subr.bf16.mxu0 0
  %6827 = vmatpush2.bf16.msra.mxu0 %v5497
  %6828 = vmatprep.subr.bf16.mxu0 0
  %6829 = vmatpush2.bf16.msra.mxu0 %v5490
  %6830 = vmatprep.subr.bf16.mxu0 0
  %6831 = vmatpush2.bf16.msra.mxu0 %v5483
  %6832 = vmatprep.subr.bf16.mxu0 0
  %6833 = vmatpush2.bf16.msra.mxu0 %v5476
  %6834 = vmatprep.mubr.bf16.mxu0 %v3450
  %6835 = vmatmul.mubr.bf16.gmra.mxu0 %v3449
  %v6836 = vpop.f32.mrf.mxu0
  %v6837 = vadd.f32 %v3998, %v6836
  %v6838 = vpop.f32.mrf.mxu0
  %v6839 = vpop.f32.mrf.mxu0
  %v6840 = vpop.f32.mrf.mxu0
  %6841 = vdwg.mxu0
  %6842 = vmatprep.subr.bf16.mxu0 0
  %6843 = vmatpush1.bf16.msra.mxu0 %v5581
  %6844 = vmatprep.subr.bf16.mxu0 0
  %6845 = vmatpush1.bf16.msra.mxu0 %v5574
  %6846 = vmatprep.subr.bf16.mxu0 0
  %6847 = vmatpush1.bf16.msra.mxu0 %v5567
  %6848 = vmatprep.subr.bf16.mxu0 0
  %6849 = vmatpush1.bf16.msra.mxu0 %v5560
  %6850 = vmatprep.subr.bf16.mxu0 0
  %6851 = vmatpush1.bf16.msra.mxu0 %v5553
  %6852 = vmatprep.subr.bf16.mxu0 0
  %6853 = vmatpush1.bf16.msra.mxu0 %v5546
  %6854 = vmatprep.subr.bf16.mxu0 0
  %6855 = vmatpush1.bf16.msra.mxu0 %v5539
  %6856 = vmatprep.subr.bf16.mxu0 0
  %6857 = vmatpush1.bf16.msra.mxu0 %v5532
  %6858 = vmatprep.subr.bf16.mxu0 0
  %6859 = vmatpush2.bf16.msra.mxu0 %v5637
  %6860 = vmatprep.subr.bf16.mxu0 0
  %6861 = vmatpush2.bf16.msra.mxu0 %v5630
  %6862 = vmatprep.subr.bf16.mxu0 0
  %6863 = vmatpush2.bf16.msra.mxu0 %v5623
  %6864 = vmatprep.subr.bf16.mxu0 0
  %6865 = vmatpush2.bf16.msra.mxu0 %v5616
  %6866 = vmatprep.subr.bf16.mxu0 0
  %6867 = vmatpush2.bf16.msra.mxu0 %v5609
  %6868 = vmatprep.subr.bf16.mxu0 0
  %6869 = vmatpush2.bf16.msra.mxu0 %v5602
  %6870 = vmatprep.subr.bf16.mxu0 0
  %6871 = vmatpush2.bf16.msra.mxu0 %v5595
  %6872 = vmatprep.subr.bf16.mxu0 0
  %6873 = vmatpush2.bf16.msra.mxu0 %v5588
  %6874 = vmatprep.mubr.bf16.mxu0 %v3452
  %6875 = vmatmul.mubr.bf16.gmra.mxu0 %v3451
  %v6876 = vpop.f32.mrf.mxu0
  %v6877 = vadd.f32 %v6837, %v6876
  %v6878 = vpop.f32.mrf.mxu0
  %v6879 = vpop.f32.mrf.mxu0
  %v6880 = vpop.f32.mrf.mxu0
  %6881 = vdwg.mxu0
  %6882 = vmatprep.subr.bf16.mxu0 0
  %6883 = vmatpush1.bf16.msra.mxu0 %v5693
  %6884 = vmatprep.subr.bf16.mxu0 0
  %6885 = vmatpush1.bf16.msra.mxu0 %v5686
  %6886 = vmatprep.subr.bf16.mxu0 0
  %6887 = vmatpush1.bf16.msra.mxu0 %v5679
  %6888 = vmatprep.subr.bf16.mxu0 0
  %6889 = vmatpush1.bf16.msra.mxu0 %v5672
  %6890 = vmatprep.subr.bf16.mxu0 0
  %6891 = vmatpush1.bf16.msra.mxu0 %v5665
  %6892 = vmatprep.subr.bf16.mxu0 0
  %6893 = vmatpush1.bf16.msra.mxu0 %v5658
  %6894 = vmatprep.subr.bf16.mxu0 0
  %6895 = vmatpush1.bf16.msra.mxu0 %v5651
  %6896 = vmatprep.subr.bf16.mxu0 0
  %6897 = vmatpush1.bf16.msra.mxu0 %v5644
  %6898 = vmatprep.subr.bf16.mxu0 0
  %6899 = vmatpush2.bf16.msra.mxu0 %v5749
  %6900 = vmatprep.subr.bf16.mxu0 0
  %6901 = vmatpush2.bf16.msra.mxu0 %v5742
  %6902 = vmatprep.subr.bf16.mxu0 0
  %6903 = vmatpush2.bf16.msra.mxu0 %v5735
  %6904 = vmatprep.subr.bf16.mxu0 0
  %6905 = vmatpush2.bf16.msra.mxu0 %v5728
  %6906 = vmatprep.subr.bf16.mxu0 0
  %6907 = vmatpush2.bf16.msra.mxu0 %v5721
  %6908 = vmatprep.subr.bf16.mxu0 0
  %6909 = vmatpush2.bf16.msra.mxu0 %v5714
  %6910 = vmatprep.subr.bf16.mxu0 0
  %6911 = vmatpush2.bf16.msra.mxu0 %v5707
  %6912 = vmatprep.subr.bf16.mxu0 0
  %6913 = vmatpush2.bf16.msra.mxu0 %v5700
  %6914 = vmatprep.mubr.bf16.mxu0 %v3454
  %6915 = vmatmul.mubr.bf16.gmra.mxu0 %v3453
  %v6916 = vpop.f32.mrf.mxu0
  %v6917 = vadd.f32 %v6877, %v6916
  %v6918 = vpop.f32.mrf.mxu0
  %v6919 = vpop.f32.mrf.mxu0
  %v6920 = vpop.f32.mrf.mxu0
  %6921 = vdwg.mxu0
  %6922 = vmatprep.subr.bf16.mxu0 0
  %6923 = vmatpush1.bf16.msra.mxu0 %v5805
  %6924 = vmatprep.subr.bf16.mxu0 0
  %6925 = vmatpush1.bf16.msra.mxu0 %v5798
  %6926 = vmatprep.subr.bf16.mxu0 0
  %6927 = vmatpush1.bf16.msra.mxu0 %v5791
  %6928 = vmatprep.subr.bf16.mxu0 0
  %6929 = vmatpush1.bf16.msra.mxu0 %v5784
  %6930 = vmatprep.subr.bf16.mxu0 0
  %6931 = vmatpush1.bf16.msra.mxu0 %v5777
  %6932 = vmatprep.subr.bf16.mxu0 0
  %6933 = vmatpush1.bf16.msra.mxu0 %v5770
  %6934 = vmatprep.subr.bf16.mxu0 0
  %6935 = vmatpush1.bf16.msra.mxu0 %v5763
  %6936 = vmatprep.subr.bf16.mxu0 0
  %6937 = vmatpush1.bf16.msra.mxu0 %v5756
  %6938 = vmatprep.subr.bf16.mxu0 0
  %6939 = vmatpush2.bf16.msra.mxu0 %v5861
  %6940 = vmatprep.subr.bf16.mxu0 0
  %6941 = vmatpush2.bf16.msra.mxu0 %v5854
  %6942 = vmatprep.subr.bf16.mxu0 0
  %6943 = vmatpush2.bf16.msra.mxu0 %v5847
  %6944 = vmatprep.subr.bf16.mxu0 0
  %6945 = vmatpush2.bf16.msra.mxu0 %v5840
  %6946 = vmatprep.subr.bf16.mxu0 0
  %6947 = vmatpush2.bf16.msra.mxu0 %v5833
  %6948 = vmatprep.subr.bf16.mxu0 0
  %6949 = vmatpush2.bf16.msra.mxu0 %v5826
  %6950 = vmatprep.subr.bf16.mxu0 0
  %6951 = vmatpush2.bf16.msra.mxu0 %v5819
  %6952 = vmatprep.subr.bf16.mxu0 0
  %6953 = vmatpush2.bf16.msra.mxu0 %v5812
  %6954 = vmatprep.mubr.bf16.mxu0 %v3456
  %6955 = vmatmul.mubr.bf16.gmra.mxu0 %v3455
  %v6956 = vpop.f32.mrf.mxu0
  %v6957 = vadd.f32 %v6917, %v6956
  %v6958 = vpop.f32.mrf.mxu0
  %v6959 = vpop.f32.mrf.mxu0
  %v6960 = vpop.f32.mrf.mxu0
  %6961 = vdwg.mxu0
  %v6962 = vtanh.pop %v6468
  %v6963 = vtanh.pop %v6470
  %v6964 = vtanh.pop %v6632
  %v6965 = vtanh.pop %v6634
  %v6966 = vtanh.pop %v6796
  %v6967 = vtanh.pop %v6798
  %v6968 = vtanh.pop %v6957
  %6969 = vst [vmem:[%s11] sm:$0xff] %v6962
  %6970 = vst [vmem:[%s11 + $0x8] sm:$0xff] %v6963
  %6971 = vst [vmem:[%s11 + $0x10] sm:$0xff] %v6964
  %6972 = vst [vmem:[%s11 + $0x18] sm:$0xff] %v6965
  %6973 = vst [vmem:[%s11 + $0x20] sm:$0xff] %v6966
  %6974 = vst [vmem:[%s11 + $0x28] sm:$0xff] %v6967
  %vm6975 = vcmask 130048
  %6976 = vst.msk [vmem:[%s11 + $0x30] sm:$0xff] %vm6975, %v6968
  // Predicated region
  $region46: #{generator_forward.1} parent=0 // pred_check
    _
  $region47: #{generator_forward.1} parent=0 // pred_check_branch
    %6978 = sbr.rel (0) target = $region49
  $region48: #{generator_forward.1} parent=0 // pred_region
    _
  $region49: #{generator_forward.1} parent=0 // pred_fallthru
    _
  // Predicated region
  $region50: #{generator_forward.1} parent=0 // pred_check
    _
  $region51: #{generator_forward.1} parent=0 // pred_check_branch
    %6980 = sbr.rel (0) target = $region53
  $region52: #{generator_forward.1} parent=0 // pred_region
    _
  $region53: #{generator_forward.1} parent=0 // pred_fallthru
    _

</llo_original>
